<compile_context>
chip_gen: v7x
topology: tpu7x:2x2x1
jax: 0.10.0
libtpu: 0.0.40
codegen_flags: <defaults>
</compile_context>

<pallas_src>
import math

import jax
import jax.numpy as jnp
import numpy as np
from jax.experimental import pallas as pl
from jax.experimental.pallas import tpu as pltpu

HIDDEN = 32          # config.HIDDEN
EMBED = 32           # config.EMBED (== HIDDEN: x has a single feature width)
N_ENT = 8            # entity rows in x[:-225]
MAP_ROWS = 225       # 15*15 spatial rows at the tail of x
N_CONV_ROWS = 177    # conv outputs at linear index r = 15*y + x, r in [0, 176]
N_FLAT = 36 * HIDDEN # flattened pooled activation fed to (folded) fc1


# ----------------------------------------------------------------------------
# Kernel.  All inputs are whole-array VMEM blocks (grid-less call).
#   x        : (233, h)  f32   rows 0..7 entities, rows 8.. the 15x15 map
#   wconv9   : (9, h, h) bf16  conv weight per kernel element, [ke, ci, co]
#   w1f      : (36h, h)  bf16  (fc2_conv_half @ fc1) reordered to rows p*h + c
#   wqkv     : (h, 3h)   f32   fused [Wq.T | Wk.T | Wv.T]
#   bqkv     : (1, 3h)   f32
#   w2a      : (h, h)    f32   fc2 weight acting on the attention half
#   bias_all : (1, h)    f32   b2 + W2b@b1 + conv bias folded through fc1/fc2
# scratch:
#   conv_scr : (177, h)  f32   conv outputs, linear row index r = 15*y + x
#   flat_scr : (1, 36h)  f32   lane-dense flattened pooled activation
# ----------------------------------------------------------------------------
def entities_kernel(x_ref, wconv_ref, w1f_ref, wqkv_ref, bqkv_ref, w2a_ref,
                    ball_ref, out_ref, conv_scr, flat_scr):
    h = out_ref.shape[-1]

    # ---- Conv2d(h, h, 3): 9 shift-and-matmul accumulations (in-kernel im2col)
    # conv[r, co] = sum_{ky,kx,ci} x_map[r + 15*ky + kx, ci] * W[co, ci, ky, kx]
    # Only r in [0, 176] (x-coordinate <= 11) is consumed by the 2x2 pool, so
    # the row wrap-around at x in {12,13,14} is harmless.
    acc = None
    for ky in range(3):
        for kx in range(3):
            ke = 3 * ky + kx
            off = 15 * ky + kx
            lhs = x_ref[pl.ds(N_ENT + off, N_CONV_ROWS), :].astype(jnp.bfloat16)
            term = jnp.dot(lhs, wconv_ref[ke],
                           preferred_element_type=jnp.float32)      # (177, h)
            acc = term if acc is None else acc + term
    conv_scr[...] = acc
    # (per-channel conv bias commutes with the max pool; it is folded into
    #  bias_all at prep time.)

    # ---- MaxPool2d(2) fused with the flatten: write a lane-dense (1, 36h) row
    # pooled(py, px, c) = max over conv rows {a, a+1, a+15, a+16}, a = 30py+2px;
    # stored at lanes [(6py+px)*h : +h] to match w1f's prep-time row ordering.
    for py in range(6):
        for px in range(6):
            a = 30 * py + 2 * px
            r00 = conv_scr[pl.ds(a, 1), :]
            r01 = conv_scr[pl.ds(a + 1, 1), :]
            r10 = conv_scr[pl.ds(a + 15, 1), :]
            r11 = conv_scr[pl.ds(a + 16, 1), :]
            flat_scr[:, pl.ds(h * (6 * py + px), h)] = jnp.maximum(
                jnp.maximum(r00, r01), jnp.maximum(r10, r11))

    # ---- fc1 folded with fc2's conv half: one (1, 36h) @ (36h, h) matmul ----
    conv_fc = jnp.dot(flat_scr[...].astype(jnp.bfloat16), w1f_ref[...],
                      preferred_element_type=jnp.float32)            # (1, h)

    # ---- Attention over entity rows (fused QKV projection, f32 math) -------
    xe = x_ref[pl.ds(0, N_ENT), :]                                   # (8, h)
    qkv = jnp.dot(xe, wqkv_ref[...],
                  preferred_element_type=jnp.float32) + bqkv_ref[...]
    q = qkv[:, 0:h]
    k = qkv[:, h:2 * h]
    v = qkv[:, 2 * h:3 * h]
    scores = jnp.einsum('md,nd->mn', q, k,
                        preferred_element_type=jnp.float32) * (1.0 / math.sqrt(h))
    scores = scores - jnp.max(scores, axis=-1, keepdims=True)
    pr = jnp.exp(scores)
    pr = pr * pl.reciprocal(jnp.sum(pr, axis=-1, keepdims=True), approx=True)
    attn_out = jnp.dot(pr, v, preferred_element_type=jnp.float32)    # (8, h)
    attn_vec = jnp.max(attn_out, axis=0, keepdims=True)              # (1, h)

    # ---- fc2: attention half + (already-folded) conv half + all biases -----
    out_ref[...] = (conv_fc
                    + jnp.dot(attn_vec, w2a_ref[...],
                              preferred_element_type=jnp.float32)
                    + ball_ref[...])


# ----------------------------------------------------------------------------
# Parameters (PyTorch layouts) + one-time prep into kernel layouts.
# ----------------------------------------------------------------------------
def init_params(key, h=HIDDEN, emb=EMBED):
    """Deterministic synthetic parameters in PyTorch layouts."""
    ks = jax.random.split(key, 12)
    s = 0.05
    n = lambda k, shp: jax.random.normal(k, shp, jnp.float32) * s
    return {
        'wconv_pt': n(ks[0], (h, h, 3, 3)),      # Conv2d weight (O, I, kH, kW)
        'bconv':    n(ks[1], (h,)),
        'w1_pt':    n(ks[2], (h, h * 36)),       # fc1 weight (out, in=c*36+y*6+x)
        'b1':       n(ks[3], (h,)),
        'wq_pt':    n(ks[4], (h, emb)),
        'bq':       n(ks[5], (h,)),
        'wk_pt':    n(ks[6], (h, emb)),
        'bk':       n(ks[7], (h,)),
        'wv_pt':    n(ks[8], (h, emb)),
        'bv':       n(ks[9], (h,)),
        'w2_pt':    n(ks[10], (h, 2 * h)),       # fc2 weight (out, [attn|conv])
        'b2':       n(ks[11], (h,)),
    }


def prep_params(p, h=HIDDEN):
    """One-time re-layout / algebraic folding (hoisted out of the hot path).

    fc1 -> fc2(conv half) folding is exact (no activation between them in the
    module).  The per-channel conv bias commutes with the max pool, so its
    contribution is folded into the final bias as well.
    """
    f32, bf16 = jnp.float32, jnp.bfloat16

    # Conv weight per kernel element, oriented for x_slice @ W: [ke, ci, co]
    wconv9 = jnp.transpose(p['wconv_pt'], (2, 3, 1, 0)).reshape(9, h, h)

    w2a = p['w2_pt'][:, :h].T                    # (h, h), attention half
    w2b = p['w2_pt'][:, h:]                      # (n, m), conv half

    # fc1 folded through fc2's conv half, rows reordered to p*h + c so the
    # kernel's lane-dense flat activation multiplies it directly.
    wcomb = w2b @ p['w1_pt']                     # (n, c*36 + p)
    wcomb3 = wcomb.reshape(h, h, 36)             # [n, c, p]
    w1f = jnp.transpose(wcomb3, (2, 1, 0)).reshape(36 * h, h)   # rows p*h + c

    bias_all = (p['b2'] + w2b @ p['b1']
                + jnp.einsum('ncp,c->n', wcomb3, p['bconv']))

    wqkv = jnp.concatenate([p['wq_pt'].T, p['wk_pt'].T, p['wv_pt'].T], axis=1)
    bqkv = jnp.concatenate([p['bq'], p['bk'], p['bv']])[None, :]

    return {
        'wconv9':   wconv9.astype(bf16),
        'w1f':      w1f.astype(bf16),
        'wqkv':     wqkv.astype(f32),
        'bqkv':     bqkv.astype(f32),
        'w2a':      w2a.astype(f32),
        'bias_all': bias_all[None, :].astype(f32),
    }


# ----------------------------------------------------------------------------
# Forward: the wrapper passes x untouched; all slicing/im2col is in-kernel.
# ----------------------------------------------------------------------------
def entities_forward(x, kp, h=HIDDEN):
    vmem = pltpu.MemorySpace.VMEM
    out = pl.pallas_call(
        entities_kernel,
        out_shape=jax.ShapeDtypeStruct((1, h), jnp.float32),
        in_specs=[pl.BlockSpec(memory_space=vmem)] * 7,
        out_specs=pl.BlockSpec(memory_space=vmem),
        scratch_shapes=[
            pltpu.VMEM((N_CONV_ROWS, h), jnp.float32),   # conv_scr
            pltpu.VMEM((1, N_FLAT), jnp.float32),        # flat_scr
        ],
    )(x, kp['wconv9'], kp['w1f'], kp['wqkv'], kp['bqkv'], kp['w2a'],
      kp['bias_all'])
    return out[0]


# ----------------------------------------------------------------------------
# Independent plain-JAX reference (lax.conv / reduce_window, PyTorch layouts).
# ----------------------------------------------------------------------------
def entities_reference(x, p, h=HIDDEN):
    x_map = x[-MAP_ROWS:].reshape(1, 15, 15, h).transpose(0, 3, 1, 2)   # NCHW
    conv = jax.lax.conv_general_dilated(
        x_map, p['wconv_pt'], window_strides=(1, 1), padding='VALID',
        dimension_numbers=('NCHW', 'OIHW', 'NCHW'))
    conv = conv + p['bconv'][None, :, None, None]
    pooled = jax.lax.reduce_window(conv, -jnp.inf, jax.lax.max,
                                   (1, 1, 2, 2), (1, 1, 2, 2), 'VALID')
    flat = pooled.reshape(-1)                     # torch .view(-1) order (c,y,x)
    conv_vec = p['w1_pt'] @ flat + p['b1']
    xe = x[:-MAP_ROWS]
    q = xe @ p['wq_pt'].T + p['bq']
    k = xe @ p['wk_pt'].T + p['bk']
    v = xe @ p['wv_pt'].T + p['bv']
    s = (q @ k.T) / jnp.sqrt(jnp.float32(h))
    a = jax.nn.softmax(s, axis=-1)
    attn_vec = jnp.max(a @ v, axis=0)
    full = jnp.concatenate([attn_vec, conv_vec])
    return p['w2_pt'] @ full + p['b2']


if __name__ == "__main__":
    key = jax.random.PRNGKey(0)
    kx, kparam = jax.random.split(key)
    x = jax.random.normal(kx, (MAP_ROWS + N_ENT, HIDDEN), jnp.float32)

    params = init_params(kparam)
    kparams = prep_params(params)                 # one-time weight prep

    fwd = jax.jit(entities_forward)
    out = jax.block_until_ready(fwd(x, kparams))

    ref = entities_reference(x, params)
    np.testing.assert_allclose(np.asarray(out), np.asarray(ref),
                               rtol=2e-2, atol=2e-2)
    print("KERNEL_OK")
</pallas_src>

<mosaic_0001>
module attributes {stable_mosaic.version = 11 : i64} {
  func.func @entities_kernel(%arg0: memref<233x32xf32, #tpu.memory_space<vmem>>, %arg1: memref<9x32x32xbf16, #tpu.memory_space<vmem>>, %arg2: memref<1152x32xbf16, #tpu.memory_space<vmem>>, %arg3: memref<32x96xf32, #tpu.memory_space<vmem>>, %arg4: memref<1x96xf32, #tpu.memory_space<vmem>>, %arg5: memref<32x32xf32, #tpu.memory_space<vmem>>, %arg6: memref<1x32xf32, #tpu.memory_space<vmem>>, %arg7: memref<1x32xf32, #tpu.memory_space<vmem>>, %arg8: memref<177x32xf32, #tpu.memory_space<vmem>>, %arg9: memref<1x1152xf32, #tpu.memory_space<vmem>>) attributes {dimension_semantics = [], scalar_prefetch = 0 : i64, scratch_operands = 2 : i64, tpu.core_type = #tpu.core_type<tc>} {
    %c8 = arith.constant 8 : index
    %c0 = arith.constant 0 : index
    %0 = vector.load %arg0[%c8, %c0] : memref<233x32xf32, #tpu.memory_space<vmem>>, vector<177x32xf32>
    %1 = arith.truncf %0 : vector<177x32xf32> to vector<177x32xbf16>
    %c0_0 = arith.constant 0 : index
    %c0_1 = arith.constant 0 : index
    %c0_2 = arith.constant 0 : index
    %2 = vector.load %arg1[%c0_0, %c0_1, %c0_2] : memref<9x32x32xbf16, #tpu.memory_space<vmem>>, vector<1x32x32xbf16>
    %3 = vector.shape_cast %2 : vector<1x32x32xbf16> to vector<32x32xbf16>
    %cst = arith.constant dense<0.000000e+00> : vector<177x32xf32>
    %4 = tpu.matmul %1, %3, %cst {dimension_numbers = #tpu.dot_dimension_numbers<[1], [0], [0], [1], [0, 0, 1, 1], [], []>} : vector<177x32xbf16>, vector<32x32xbf16>, vector<177x32xf32> -> vector<177x32xf32>
    %c9 = arith.constant 9 : index
    %c0_3 = arith.constant 0 : index
    %5 = vector.load %arg0[%c9, %c0_3] : memref<233x32xf32, #tpu.memory_space<vmem>>, vector<177x32xf32>
    %6 = arith.truncf %5 : vector<177x32xf32> to vector<177x32xbf16>
    %c1 = arith.constant 1 : index
    %c0_4 = arith.constant 0 : index
    %c0_5 = arith.constant 0 : index
    %7 = vector.load %arg1[%c1, %c0_4, %c0_5] : memref<9x32x32xbf16, #tpu.memory_space<vmem>>, vector<1x32x32xbf16>
    %8 = vector.shape_cast %7 : vector<1x32x32xbf16> to vector<32x32xbf16>
    %cst_6 = arith.constant dense<0.000000e+00> : vector<177x32xf32>
    %9 = tpu.matmul %6, %8, %cst_6 {dimension_numbers = #tpu.dot_dimension_numbers<[1], [0], [0], [1], [0, 0, 1, 1], [], []>} : vector<177x32xbf16>, vector<32x32xbf16>, vector<177x32xf32> -> vector<177x32xf32>
    %10 = arith.addf %4, %9 : vector<177x32xf32>
    %c10 = arith.constant 10 : index
    %c0_7 = arith.constant 0 : index
    %11 = vector.load %arg0[%c10, %c0_7] : memref<233x32xf32, #tpu.memory_space<vmem>>, vector<177x32xf32>
    %12 = arith.truncf %11 : vector<177x32xf32> to vector<177x32xbf16>
    %c2 = arith.constant 2 : index
    %c0_8 = arith.constant 0 : index
    %c0_9 = arith.constant 0 : index
    %13 = vector.load %arg1[%c2, %c0_8, %c0_9] : memref<9x32x32xbf16, #tpu.memory_space<vmem>>, vector<1x32x32xbf16>
    %14 = vector.shape_cast %13 : vector<1x32x32xbf16> to vector<32x32xbf16>
    %cst_10 = arith.constant dense<0.000000e+00> : vector<177x32xf32>
    %15 = tpu.matmul %12, %14, %cst_10 {dimension_numbers = #tpu.dot_dimension_numbers<[1], [0], [0], [1], [0, 0, 1, 1], [], []>} : vector<177x32xbf16>, vector<32x32xbf16>, vector<177x32xf32> -> vector<177x32xf32>
    %16 = arith.addf %10, %15 : vector<177x32xf32>
    %c23 = arith.constant 23 : index
    %c0_11 = arith.constant 0 : index
    %17 = vector.load %arg0[%c23, %c0_11] : memref<233x32xf32, #tpu.memory_space<vmem>>, vector<177x32xf32>
    %18 = arith.truncf %17 : vector<177x32xf32> to vector<177x32xbf16>
    %c3 = arith.constant 3 : index
    %c0_12 = arith.constant 0 : index
    %c0_13 = arith.constant 0 : index
    %19 = vector.load %arg1[%c3, %c0_12, %c0_13] : memref<9x32x32xbf16, #tpu.memory_space<vmem>>, vector<1x32x32xbf16>
    %20 = vector.shape_cast %19 : vector<1x32x32xbf16> to vector<32x32xbf16>
    %cst_14 = arith.constant dense<0.000000e+00> : vector<177x32xf32>
    %21 = tpu.matmul %18, %20, %cst_14 {dimension_numbers = #tpu.dot_dimension_numbers<[1], [0], [0], [1], [0, 0, 1, 1], [], []>} : vector<177x32xbf16>, vector<32x32xbf16>, vector<177x32xf32> -> vector<177x32xf32>
    %22 = arith.addf %16, %21 : vector<177x32xf32>
    %c24 = arith.constant 24 : index
    %c0_15 = arith.constant 0 : index
    %23 = vector.load %arg0[%c24, %c0_15] : memref<233x32xf32, #tpu.memory_space<vmem>>, vector<177x32xf32>
    %24 = arith.truncf %23 : vector<177x32xf32> to vector<177x32xbf16>
    %c4 = arith.constant 4 : index
    %c0_16 = arith.constant 0 : index
    %c0_17 = arith.constant 0 : index
    %25 = vector.load %arg1[%c4, %c0_16, %c0_17] : memref<9x32x32xbf16, #tpu.memory_space<vmem>>, vector<1x32x32xbf16>
    %26 = vector.shape_cast %25 : vector<1x32x32xbf16> to vector<32x32xbf16>
    %cst_18 = arith.constant dense<0.000000e+00> : vector<177x32xf32>
    %27 = tpu.matmul %24, %26, %cst_18 {dimension_numbers = #tpu.dot_dimension_numbers<[1], [0], [0], [1], [0, 0, 1, 1], [], []>} : vector<177x32xbf16>, vector<32x32xbf16>, vector<177x32xf32> -> vector<177x32xf32>
    %28 = arith.addf %22, %27 : vector<177x32xf32>
    %c25 = arith.constant 25 : index
    %c0_19 = arith.constant 0 : index
    %29 = vector.load %arg0[%c25, %c0_19] : memref<233x32xf32, #tpu.memory_space<vmem>>, vector<177x32xf32>
    %30 = arith.truncf %29 : vector<177x32xf32> to vector<177x32xbf16>
    %c5 = arith.constant 5 : index
    %c0_20 = arith.constant 0 : index
    %c0_21 = arith.constant 0 : index
    %31 = vector.load %arg1[%c5, %c0_20, %c0_21] : memref<9x32x32xbf16, #tpu.memory_space<vmem>>, vector<1x32x32xbf16>
    %32 = vector.shape_cast %31 : vector<1x32x32xbf16> to vector<32x32xbf16>
    %cst_22 = arith.constant dense<0.000000e+00> : vector<177x32xf32>
    %33 = tpu.matmul %30, %32, %cst_22 {dimension_numbers = #tpu.dot_dimension_numbers<[1], [0], [0], [1], [0, 0, 1, 1], [], []>} : vector<177x32xbf16>, vector<32x32xbf16>, vector<177x32xf32> -> vector<177x32xf32>
    %34 = arith.addf %28, %33 : vector<177x32xf32>
    %c38 = arith.constant 38 : index
    %c0_23 = arith.constant 0 : index
    %35 = vector.load %arg0[%c38, %c0_23] : memref<233x32xf32, #tpu.memory_space<vmem>>, vector<177x32xf32>
    %36 = arith.truncf %35 : vector<177x32xf32> to vector<177x32xbf16>
    %c6 = arith.constant 6 : index
    %c0_24 = arith.constant 0 : index
    %c0_25 = arith.constant 0 : index
    %37 = vector.load %arg1[%c6, %c0_24, %c0_25] : memref<9x32x32xbf16, #tpu.memory_space<vmem>>, vector<1x32x32xbf16>
    %38 = vector.shape_cast %37 : vector<1x32x32xbf16> to vector<32x32xbf16>
    %cst_26 = arith.constant dense<0.000000e+00> : vector<177x32xf32>
    %39 = tpu.matmul %36, %38, %cst_26 {dimension_numbers = #tpu.dot_dimension_numbers<[1], [0], [0], [1], [0, 0, 1, 1], [], []>} : vector<177x32xbf16>, vector<32x32xbf16>, vector<177x32xf32> -> vector<177x32xf32>
    %40 = arith.addf %34, %39 : vector<177x32xf32>
    %c39 = arith.constant 39 : index
    %c0_27 = arith.constant 0 : index
    %41 = vector.load %arg0[%c39, %c0_27] : memref<233x32xf32, #tpu.memory_space<vmem>>, vector<177x32xf32>
    %42 = arith.truncf %41 : vector<177x32xf32> to vector<177x32xbf16>
    %c7 = arith.constant 7 : index
    %c0_28 = arith.constant 0 : index
    %c0_29 = arith.constant 0 : index
    %43 = vector.load %arg1[%c7, %c0_28, %c0_29] : memref<9x32x32xbf16, #tpu.memory_space<vmem>>, vector<1x32x32xbf16>
    %44 = vector.shape_cast %43 : vector<1x32x32xbf16> to vector<32x32xbf16>
    %cst_30 = arith.constant dense<0.000000e+00> : vector<177x32xf32>
    %45 = tpu.matmul %42, %44, %cst_30 {dimension_numbers = #tpu.dot_dimension_numbers<[1], [0], [0], [1], [0, 0, 1, 1], [], []>} : vector<177x32xbf16>, vector<32x32xbf16>, vector<177x32xf32> -> vector<177x32xf32>
    %46 = arith.addf %40, %45 : vector<177x32xf32>
    %c40 = arith.constant 40 : index
    %c0_31 = arith.constant 0 : index
    %47 = vector.load %arg0[%c40, %c0_31] : memref<233x32xf32, #tpu.memory_space<vmem>>, vector<177x32xf32>
    %48 = arith.truncf %47 : vector<177x32xf32> to vector<177x32xbf16>
    %c8_32 = arith.constant 8 : index
    %c0_33 = arith.constant 0 : index
    %c0_34 = arith.constant 0 : index
    %49 = vector.load %arg1[%c8_32, %c0_33, %c0_34] : memref<9x32x32xbf16, #tpu.memory_space<vmem>>, vector<1x32x32xbf16>
    %50 = vector.shape_cast %49 : vector<1x32x32xbf16> to vector<32x32xbf16>
    %cst_35 = arith.constant dense<0.000000e+00> : vector<177x32xf32>
    %51 = tpu.matmul %48, %50, %cst_35 {dimension_numbers = #tpu.dot_dimension_numbers<[1], [0], [0], [1], [0, 0, 1, 1], [], []>} : vector<177x32xbf16>, vector<32x32xbf16>, vector<177x32xf32> -> vector<177x32xf32>
    %52 = arith.addf %46, %51 : vector<177x32xf32>
    %c0_36 = arith.constant 0 : index
    %c0_37 = arith.constant 0 : index
    %53 = vector.load %arg8[%c0_36, %c0_37] : memref<177x32xf32, #tpu.memory_space<vmem>>, vector<177x32xf32>
    tpu.vector_store %arg8[%c0_36, %c0_37], %52 {strides = array<i32>} : memref<177x32xf32, #tpu.memory_space<vmem>>, vector<177x32xf32>,
    %c0_38 = arith.constant 0 : index
    %c0_39 = arith.constant 0 : index
    %54 = vector.load %arg8[%c0_38, %c0_39] : memref<177x32xf32, #tpu.memory_space<vmem>>, vector<1x32xf32>
    %c1_40 = arith.constant 1 : index
    %c0_41 = arith.constant 0 : index
    %55 = vector.load %arg8[%c1_40, %c0_41] : memref<177x32xf32, #tpu.memory_space<vmem>>, vector<1x32xf32>
    %c15 = arith.constant 15 : index
    %c0_42 = arith.constant 0 : index
    %56 = vector.load %arg8[%c15, %c0_42] : memref<177x32xf32, #tpu.memory_space<vmem>>, vector<1x32xf32>
    %c16 = arith.constant 16 : index
    %c0_43 = arith.constant 0 : index
    %57 = vector.load %arg8[%c16, %c0_43] : memref<177x32xf32, #tpu.memory_space<vmem>>, vector<1x32xf32>
    %58 = arith.maximumf %54, %55 : vector<1x32xf32>
    %59 = arith.maximumf %56, %57 : vector<1x32xf32>
    %60 = arith.maximumf %58, %59 : vector<1x32xf32>
    %c0_44 = arith.constant 0 : index
    %c0_45 = arith.constant 0 : index
    %61 = vector.load %arg9[%c0_44, %c0_45] : memref<1x1152xf32, #tpu.memory_space<vmem>>, vector<1x32xf32>
    tpu.vector_store %arg9[%c0_44, %c0_45], %60 {strides = array<i32>} : memref<1x1152xf32, #tpu.memory_space<vmem>>, vector<1x32xf32>,
    %c2_46 = arith.constant 2 : index
    %c0_47 = arith.constant 0 : index
    %62 = vector.load %arg8[%c2_46, %c0_47] : memref<177x32xf32, #tpu.memory_space<vmem>>, vector<1x32xf32>
    %c3_48 = arith.constant 3 : index
    %c0_49 = arith.constant 0 : index
    %63 = vector.load %arg8[%c3_48, %c0_49] : memref<177x32xf32, #tpu.memory_space<vmem>>, vector<1x32xf32>
    %c17 = arith.constant 17 : index
    %c0_50 = arith.constant 0 : index
    %64 = vector.load %arg8[%c17, %c0_50] : memref<177x32xf32, #tpu.memory_space<vmem>>, vector<1x32xf32>
    %c18 = arith.constant 18 : index
    %c0_51 = arith.constant 0 : index
    %65 = vector.load %arg8[%c18, %c0_51] : memref<177x32xf32, #tpu.memory_space<vmem>>, vector<1x32xf32>
    %66 = arith.maximumf %62, %63 : vector<1x32xf32>
    %67 = arith.maximumf %64, %65 : vector<1x32xf32>
    %68 = arith.maximumf %66, %67 : vector<1x32xf32>
    %c0_52 = arith.constant 0 : index
    %c32 = arith.constant 32 : index
    %69 = vector.load %arg9[%c0_52, %c32] : memref<1x1152xf32, #tpu.memory_space<vmem>>, vector<1x32xf32>
    tpu.vector_store %arg9[%c0_52, %c32], %68 {strides = array<i32>} : memref<1x1152xf32, #tpu.memory_space<vmem>>, vector<1x32xf32>,
    %c4_53 = arith.constant 4 : index
    %c0_54 = arith.constant 0 : index
    %70 = vector.load %arg8[%c4_53, %c0_54] : memref<177x32xf32, #tpu.memory_space<vmem>>, vector<1x32xf32>
    %c5_55 = arith.constant 5 : index
    %c0_56 = arith.constant 0 : index
    %71 = vector.load %arg8[%c5_55, %c0_56] : memref<177x32xf32, #tpu.memory_space<vmem>>, vector<1x32xf32>
    %c19 = arith.constant 19 : index
    %c0_57 = arith.constant 0 : index
    %72 = vector.load %arg8[%c19, %c0_57] : memref<177x32xf32, #tpu.memory_space<vmem>>, vector<1x32xf32>
    %c20 = arith.constant 20 : index
    %c0_58 = arith.constant 0 : index
    %73 = vector.load %arg8[%c20, %c0_58] : memref<177x32xf32, #tpu.memory_space<vmem>>, vector<1x32xf32>
    %74 = arith.maximumf %70, %71 : vector<1x32xf32>
    %75 = arith.maximumf %72, %73 : vector<1x32xf32>
    %76 = arith.maximumf %74, %75 : vector<1x32xf32>
    %c0_59 = arith.constant 0 : index
    %c64 = arith.constant 64 : index
    %77 = vector.load %arg9[%c0_59, %c64] : memref<1x1152xf32, #tpu.memory_space<vmem>>, vector<1x32xf32>
    tpu.vector_store %arg9[%c0_59, %c64], %76 {strides = array<i32>} : memref<1x1152xf32, #tpu.memory_space<vmem>>, vector<1x32xf32>,
    %c6_60 = arith.constant 6 : index
    %c0_61 = arith.constant 0 : index
    %78 = vector.load %arg8[%c6_60, %c0_61] : memref<177x32xf32, #tpu.memory_space<vmem>>, vector<1x32xf32>
    %c7_62 = arith.constant 7 : index
    %c0_63 = arith.constant 0 : index
    %79 = vector.load %arg8[%c7_62, %c0_63] : memref<177x32xf32, #tpu.memory_space<vmem>>, vector<1x32xf32>
    %c21 = arith.constant 21 : index
    %c0_64 = arith.constant 0 : index
    %80 = vector.load %arg8[%c21, %c0_64] : memref<177x32xf32, #tpu.memory_space<vmem>>, vector<1x32xf32>
    %c22 = arith.constant 22 : index
    %c0_65 = arith.constant 0 : index
    %81 = vector.load %arg8[%c22, %c0_65] : memref<177x32xf32, #tpu.memory_space<vmem>>, vector<1x32xf32>
    %82 = arith.maximumf %78, %79 : vector<1x32xf32>
    %83 = arith.maximumf %80, %81 : vector<1x32xf32>
    %84 = arith.maximumf %82, %83 : vector<1x32xf32>
    %c0_66 = arith.constant 0 : index
    %c96 = arith.constant 96 : index
    %85 = vector.load %arg9[%c0_66, %c96] : memref<1x1152xf32, #tpu.memory_space<vmem>>, vector<1x32xf32>
    tpu.vector_store %arg9[%c0_66, %c96], %84 {strides = array<i32>} : memref<1x1152xf32, #tpu.memory_space<vmem>>, vector<1x32xf32>,
    %c8_67 = arith.constant 8 : index
    %c0_68 = arith.constant 0 : index
    %86 = vector.load %arg8[%c8_67, %c0_68] : memref<177x32xf32, #tpu.memory_space<vmem>>, vector<1x32xf32>
    %c9_69 = arith.constant 9 : index
    %c0_70 = arith.constant 0 : index
    %87 = vector.load %arg8[%c9_69, %c0_70] : memref<177x32xf32, #tpu.memory_space<vmem>>, vector<1x32xf32>
    %c23_71 = arith.constant 23 : index
    %c0_72 = arith.constant 0 : index
    %88 = vector.load %arg8[%c23_71, %c0_72] : memref<177x32xf32, #tpu.memory_space<vmem>>, vector<1x32xf32>
    %c24_73 = arith.constant 24 : index
    %c0_74 = arith.constant 0 : index
    %89 = vector.load %arg8[%c24_73, %c0_74] : memref<177x32xf32, #tpu.memory_space<vmem>>, vector<1x32xf32>
    %90 = arith.maximumf %86, %87 : vector<1x32xf32>
    %91 = arith.maximumf %88, %89 : vector<1x32xf32>
    %92 = arith.maximumf %90, %91 : vector<1x32xf32>
    %c0_75 = arith.constant 0 : index
    %c128 = arith.constant 128 : index
    %93 = vector.load %arg9[%c0_75, %c128] : memref<1x1152xf32, #tpu.memory_space<vmem>>, vector<1x32xf32>
    tpu.vector_store %arg9[%c0_75, %c128], %92 {strides = array<i32>} : memref<1x1152xf32, #tpu.memory_space<vmem>>, vector<1x32xf32>,
    %c10_76 = arith.constant 10 : index
    %c0_77 = arith.constant 0 : index
    %94 = vector.load %arg8[%c10_76, %c0_77] : memref<177x32xf32, #tpu.memory_space<vmem>>, vector<1x32xf32>
    %c11 = arith.constant 11 : index
    %c0_78 = arith.constant 0 : index
    %95 = vector.load %arg8[%c11, %c0_78] : memref<177x32xf32, #tpu.memory_space<vmem>>, vector<1x32xf32>
    %c25_79 = arith.constant 25 : index
    %c0_80 = arith.constant 0 : index
    %96 = vector.load %arg8[%c25_79, %c0_80] : memref<177x32xf32, #tpu.memory_space<vmem>>, vector<1x32xf32>
    %c26 = arith.constant 26 : index
    %c0_81 = arith.constant 0 : index
    %97 = vector.load %arg8[%c26, %c0_81] : memref<177x32xf32, #tpu.memory_space<vmem>>, vector<1x32xf32>
    %98 = arith.maximumf %94, %95 : vector<1x32xf32>
    %99 = arith.maximumf %96, %97 : vector<1x32xf32>
    %100 = arith.maximumf %98, %99 : vector<1x32xf32>
    %c0_82 = arith.constant 0 : index
    %c160 = arith.constant 160 : index
    %101 = vector.load %arg9[%c0_82, %c160] : memref<1x1152xf32, #tpu.memory_space<vmem>>, vector<1x32xf32>
    tpu.vector_store %arg9[%c0_82, %c160], %100 {strides = array<i32>} : memref<1x1152xf32, #tpu.memory_space<vmem>>, vector<1x32xf32>,
    %c30 = arith.constant 30 : index
    %c0_83 = arith.constant 0 : index
    %102 = vector.load %arg8[%c30, %c0_83] : memref<177x32xf32, #tpu.memory_space<vmem>>, vector<1x32xf32>
    %c31 = arith.constant 31 : index
    %c0_84 = arith.constant 0 : index
    %103 = vector.load %arg8[%c31, %c0_84] : memref<177x32xf32, #tpu.memory_space<vmem>>, vector<1x32xf32>
    %c45 = arith.constant 45 : index
    %c0_85 = arith.constant 0 : index
    %104 = vector.load %arg8[%c45, %c0_85] : memref<177x32xf32, #tpu.memory_space<vmem>>, vector<1x32xf32>
    %c46 = arith.constant 46 : index
    %c0_86 = arith.constant 0 : index
    %105 = vector.load %arg8[%c46, %c0_86] : memref<177x32xf32, #tpu.memory_space<vmem>>, vector<1x32xf32>
    %106 = arith.maximumf %102, %103 : vector<1x32xf32>
    %107 = arith.maximumf %104, %105 : vector<1x32xf32>
    %108 = arith.maximumf %106, %107 : vector<1x32xf32>
    %c0_87 = arith.constant 0 : index
    %c192 = arith.constant 192 : index
    %109 = vector.load %arg9[%c0_87, %c192] : memref<1x1152xf32, #tpu.memory_space<vmem>>, vector<1x32xf32>
    tpu.vector_store %arg9[%c0_87, %c192], %108 {strides = array<i32>} : memref<1x1152xf32, #tpu.memory_space<vmem>>, vector<1x32xf32>,
    %c32_88 = arith.constant 32 : index
    %c0_89 = arith.constant 0 : index
    %110 = vector.load %arg8[%c32_88, %c0_89] : memref<177x32xf32, #tpu.memory_space<vmem>>, vector<1x32xf32>
    %c33 = arith.constant 33 : index
    %c0_90 = arith.constant 0 : index
    %111 = vector.load %arg8[%c33, %c0_90] : memref<177x32xf32, #tpu.memory_space<vmem>>, vector<1x32xf32>
    %c47 = arith.constant 47 : index
    %c0_91 = arith.constant 0 : index
    %112 = vector.load %arg8[%c47, %c0_91] : memref<177x32xf32, #tpu.memory_space<vmem>>, vector<1x32xf32>
    %c48 = arith.constant 48 : index
    %c0_92 = arith.constant 0 : index
    %113 = vector.load %arg8[%c48, %c0_92] : memref<177x32xf32, #tpu.memory_space<vmem>>, vector<1x32xf32>
    %114 = arith.maximumf %110, %111 : vector<1x32xf32>
    %115 = arith.maximumf %112, %113 : vector<1x32xf32>
    %116 = arith.maximumf %114, %115 : vector<1x32xf32>
    %c0_93 = arith.constant 0 : index
    %c224 = arith.constant 224 : index
    %117 = vector.load %arg9[%c0_93, %c224] : memref<1x1152xf32, #tpu.memory_space<vmem>>, vector<1x32xf32>
    tpu.vector_store %arg9[%c0_93, %c224], %116 {strides = array<i32>} : memref<1x1152xf32, #tpu.memory_space<vmem>>, vector<1x32xf32>,
    %c34 = arith.constant 34 : index
    %c0_94 = arith.constant 0 : index
    %118 = vector.load %arg8[%c34, %c0_94] : memref<177x32xf32, #tpu.memory_space<vmem>>, vector<1x32xf32>
    %c35 = arith.constant 35 : index
    %c0_95 = arith.constant 0 : index
    %119 = vector.load %arg8[%c35, %c0_95] : memref<177x32xf32, #tpu.memory_space<vmem>>, vector<1x32xf32>
    %c49 = arith.constant 49 : index
    %c0_96 = arith.constant 0 : index
    %120 = vector.load %arg8[%c49, %c0_96] : memref<177x32xf32, #tpu.memory_space<vmem>>, vector<1x32xf32>
    %c50 = arith.constant 50 : index
    %c0_97 = arith.constant 0 : index
    %121 = vector.load %arg8[%c50, %c0_97] : memref<177x32xf32, #tpu.memory_space<vmem>>, vector<1x32xf32>
    %122 = arith.maximumf %118, %119 : vector<1x32xf32>
    %123 = arith.maximumf %120, %121 : vector<1x32xf32>
    %124 = arith.maximumf %122, %123 : vector<1x32xf32>
    %c0_98 = arith.constant 0 : index
    %c256 = arith.constant 256 : index
    %125 = vector.load %arg9[%c0_98, %c256] : memref<1x1152xf32, #tpu.memory_space<vmem>>, vector<1x32xf32>
    tpu.vector_store %arg9[%c0_98, %c256], %124 {strides = array<i32>} : memref<1x1152xf32, #tpu.memory_space<vmem>>, vector<1x32xf32>,
    %c36 = arith.constant 36 : index
    %c0_99 = arith.constant 0 : index
    %126 = vector.load %arg8[%c36, %c0_99] : memref<177x32xf32, #tpu.memory_space<vmem>>, vector<1x32xf32>
    %c37 = arith.constant 37 : index
    %c0_100 = arith.constant 0 : index
    %127 = vector.load %arg8[%c37, %c0_100] : memref<177x32xf32, #tpu.memory_space<vmem>>, vector<1x32xf32>
    %c51 = arith.constant 51 : index
    %c0_101 = arith.constant 0 : index
    %128 = vector.load %arg8[%c51, %c0_101] : memref<177x32xf32, #tpu.memory_space<vmem>>, vector<1x32xf32>
    %c52 = arith.constant 52 : index
    %c0_102 = arith.constant 0 : index
    %129 = vector.load %arg8[%c52, %c0_102] : memref<177x32xf32, #tpu.memory_space<vmem>>, vector<1x32xf32>
    %130 = arith.maximumf %126, %127 : vector<1x32xf32>
    %131 = arith.maximumf %128, %129 : vector<1x32xf32>
    %132 = arith.maximumf %130, %131 : vector<1x32xf32>
    %c0_103 = arith.constant 0 : index
    %c288 = arith.constant 288 : index
    %133 = vector.load %arg9[%c0_103, %c288] : memref<1x1152xf32, #tpu.memory_space<vmem>>, vector<1x32xf32>
    tpu.vector_store %arg9[%c0_103, %c288], %132 {strides = array<i32>} : memref<1x1152xf32, #tpu.memory_space<vmem>>, vector<1x32xf32>,
    %c38_104 = arith.constant 38 : index
    %c0_105 = arith.constant 0 : index
    %134 = vector.load %arg8[%c38_104, %c0_105] : memref<177x32xf32, #tpu.memory_space<vmem>>, vector<1x32xf32>
    %c39_106 = arith.constant 39 : index
    %c0_107 = arith.constant 0 : index
    %135 = vector.load %arg8[%c39_106, %c0_107] : memref<177x32xf32, #tpu.memory_space<vmem>>, vector<1x32xf32>
    %c53 = arith.constant 53 : index
    %c0_108 = arith.constant 0 : index
    %136 = vector.load %arg8[%c53, %c0_108] : memref<177x32xf32, #tpu.memory_space<vmem>>, vector<1x32xf32>
    %c54 = arith.constant 54 : index
    %c0_109 = arith.constant 0 : index
    %137 = vector.load %arg8[%c54, %c0_109] : memref<177x32xf32, #tpu.memory_space<vmem>>, vector<1x32xf32>
    %138 = arith.maximumf %134, %135 : vector<1x32xf32>
    %139 = arith.maximumf %136, %137 : vector<1x32xf32>
    %140 = arith.maximumf %138, %139 : vector<1x32xf32>
    %c0_110 = arith.constant 0 : index
    %c320 = arith.constant 320 : index
    %141 = vector.load %arg9[%c0_110, %c320] : memref<1x1152xf32, #tpu.memory_space<vmem>>, vector<1x32xf32>
    tpu.vector_store %arg9[%c0_110, %c320], %140 {strides = array<i32>} : memref<1x1152xf32, #tpu.memory_space<vmem>>, vector<1x32xf32>,
    %c40_111 = arith.constant 40 : index
    %c0_112 = arith.constant 0 : index
    %142 = vector.load %arg8[%c40_111, %c0_112] : memref<177x32xf32, #tpu.memory_space<vmem>>, vector<1x32xf32>
    %c41 = arith.constant 41 : index
    %c0_113 = arith.constant 0 : index
    %143 = vector.load %arg8[%c41, %c0_113] : memref<177x32xf32, #tpu.memory_space<vmem>>, vector<1x32xf32>
    %c55 = arith.constant 55 : index
    %c0_114 = arith.constant 0 : index
    %144 = vector.load %arg8[%c55, %c0_114] : memref<177x32xf32, #tpu.memory_space<vmem>>, vector<1x32xf32>
    %c56 = arith.constant 56 : index
    %c0_115 = arith.constant 0 : index
    %145 = vector.load %arg8[%c56, %c0_115] : memref<177x32xf32, #tpu.memory_space<vmem>>, vector<1x32xf32>
    %146 = arith.maximumf %142, %143 : vector<1x32xf32>
    %147 = arith.maximumf %144, %145 : vector<1x32xf32>
    %148 = arith.maximumf %146, %147 : vector<1x32xf32>
    %c0_116 = arith.constant 0 : index
    %c352 = arith.constant 352 : index
    %149 = vector.load %arg9[%c0_116, %c352] : memref<1x1152xf32, #tpu.memory_space<vmem>>, vector<1x32xf32>
    tpu.vector_store %arg9[%c0_116, %c352], %148 {strides = array<i32>} : memref<1x1152xf32, #tpu.memory_space<vmem>>, vector<1x32xf32>,
    %c60 = arith.constant 60 : index
    %c0_117 = arith.constant 0 : index
    %150 = vector.load %arg8[%c60, %c0_117] : memref<177x32xf32, #tpu.memory_space<vmem>>, vector<1x32xf32>
    %c61 = arith.constant 61 : index
    %c0_118 = arith.constant 0 : index
    %151 = vector.load %arg8[%c61, %c0_118] : memref<177x32xf32, #tpu.memory_space<vmem>>, vector<1x32xf32>
    %c75 = arith.constant 75 : index
    %c0_119 = arith.constant 0 : index
    %152 = vector.load %arg8[%c75, %c0_119] : memref<177x32xf32, #tpu.memory_space<vmem>>, vector<1x32xf32>
    %c76 = arith.constant 76 : index
    %c0_120 = arith.constant 0 : index
    %153 = vector.load %arg8[%c76, %c0_120] : memref<177x32xf32, #tpu.memory_space<vmem>>, vector<1x32xf32>
    %154 = arith.maximumf %150, %151 : vector<1x32xf32>
    %155 = arith.maximumf %152, %153 : vector<1x32xf32>
    %156 = arith.maximumf %154, %155 : vector<1x32xf32>
    %c0_121 = arith.constant 0 : index
    %c384 = arith.constant 384 : index
    %157 = vector.load %arg9[%c0_121, %c384] : memref<1x1152xf32, #tpu.memory_space<vmem>>, vector<1x32xf32>
    tpu.vector_store %arg9[%c0_121, %c384], %156 {strides = array<i32>} : memref<1x1152xf32, #tpu.memory_space<vmem>>, vector<1x32xf32>,
    %c62 = arith.constant 62 : index
    %c0_122 = arith.constant 0 : index
    %158 = vector.load %arg8[%c62, %c0_122] : memref<177x32xf32, #tpu.memory_space<vmem>>, vector<1x32xf32>
    %c63 = arith.constant 63 : index
    %c0_123 = arith.constant 0 : index
    %159 = vector.load %arg8[%c63, %c0_123] : memref<177x32xf32, #tpu.memory_space<vmem>>, vector<1x32xf32>
    %c77 = arith.constant 77 : index
    %c0_124 = arith.constant 0 : index
    %160 = vector.load %arg8[%c77, %c0_124] : memref<177x32xf32, #tpu.memory_space<vmem>>, vector<1x32xf32>
    %c78 = arith.constant 78 : index
    %c0_125 = arith.constant 0 : index
    %161 = vector.load %arg8[%c78, %c0_125] : memref<177x32xf32, #tpu.memory_space<vmem>>, vector<1x32xf32>
    %162 = arith.maximumf %158, %159 : vector<1x32xf32>
    %163 = arith.maximumf %160, %161 : vector<1x32xf32>
    %164 = arith.maximumf %162, %163 : vector<1x32xf32>
    %c0_126 = arith.constant 0 : index
    %c416 = arith.constant 416 : index
    %165 = vector.load %arg9[%c0_126, %c416] : memref<1x1152xf32, #tpu.memory_space<vmem>>, vector<1x32xf32>
    tpu.vector_store %arg9[%c0_126, %c416], %164 {strides = array<i32>} : memref<1x1152xf32, #tpu.memory_space<vmem>>, vector<1x32xf32>,
    %c64_127 = arith.constant 64 : index
    %c0_128 = arith.constant 0 : index
    %166 = vector.load %arg8[%c64_127, %c0_128] : memref<177x32xf32, #tpu.memory_space<vmem>>, vector<1x32xf32>
    %c65 = arith.constant 65 : index
    %c0_129 = arith.constant 0 : index
    %167 = vector.load %arg8[%c65, %c0_129] : memref<177x32xf32, #tpu.memory_space<vmem>>, vector<1x32xf32>
    %c79 = arith.constant 79 : index
    %c0_130 = arith.constant 0 : index
    %168 = vector.load %arg8[%c79, %c0_130] : memref<177x32xf32, #tpu.memory_space<vmem>>, vector<1x32xf32>
    %c80 = arith.constant 80 : index
    %c0_131 = arith.constant 0 : index
    %169 = vector.load %arg8[%c80, %c0_131] : memref<177x32xf32, #tpu.memory_space<vmem>>, vector<1x32xf32>
    %170 = arith.maximumf %166, %167 : vector<1x32xf32>
    %171 = arith.maximumf %168, %169 : vector<1x32xf32>
    %172 = arith.maximumf %170, %171 : vector<1x32xf32>
    %c0_132 = arith.constant 0 : index
    %c448 = arith.constant 448 : index
    %173 = vector.load %arg9[%c0_132, %c448] : memref<1x1152xf32, #tpu.memory_space<vmem>>, vector<1x32xf32>
    tpu.vector_store %arg9[%c0_132, %c448], %172 {strides = array<i32>} : memref<1x1152xf32, #tpu.memory_space<vmem>>, vector<1x32xf32>,
    %c66 = arith.constant 66 : index
    %c0_133 = arith.constant 0 : index
    %174 = vector.load %arg8[%c66, %c0_133] : memref<177x32xf32, #tpu.memory_space<vmem>>, vector<1x32xf32>
    %c67 = arith.constant 67 : index
    %c0_134 = arith.constant 0 : index
    %175 = vector.load %arg8[%c67, %c0_134] : memref<177x32xf32, #tpu.memory_space<vmem>>, vector<1x32xf32>
    %c81 = arith.constant 81 : index
    %c0_135 = arith.constant 0 : index
    %176 = vector.load %arg8[%c81, %c0_135] : memref<177x32xf32, #tpu.memory_space<vmem>>, vector<1x32xf32>
    %c82 = arith.constant 82 : index
    %c0_136 = arith.constant 0 : index
    %177 = vector.load %arg8[%c82, %c0_136] : memref<177x32xf32, #tpu.memory_space<vmem>>, vector<1x32xf32>
    %178 = arith.maximumf %174, %175 : vector<1x32xf32>
    %179 = arith.maximumf %176, %177 : vector<1x32xf32>
    %180 = arith.maximumf %178, %179 : vector<1x32xf32>
    %c0_137 = arith.constant 0 : index
    %c480 = arith.constant 480 : index
    %181 = vector.load %arg9[%c0_137, %c480] : memref<1x1152xf32, #tpu.memory_space<vmem>>, vector<1x32xf32>
    tpu.vector_store %arg9[%c0_137, %c480], %180 {strides = array<i32>} : memref<1x1152xf32, #tpu.memory_space<vmem>>, vector<1x32xf32>,
    %c68 = arith.constant 68 : index
    %c0_138 = arith.constant 0 : index
    %182 = vector.load %arg8[%c68, %c0_138] : memref<177x32xf32, #tpu.memory_space<vmem>>, vector<1x32xf32>
    %c69 = arith.constant 69 : index
    %c0_139 = arith.constant 0 : index
    %183 = vector.load %arg8[%c69, %c0_139] : memref<177x32xf32, #tpu.memory_space<vmem>>, vector<1x32xf32>
    %c83 = arith.constant 83 : index
    %c0_140 = arith.constant 0 : index
    %184 = vector.load %arg8[%c83, %c0_140] : memref<177x32xf32, #tpu.memory_space<vmem>>, vector<1x32xf32>
    %c84 = arith.constant 84 : index
    %c0_141 = arith.constant 0 : index
    %185 = vector.load %arg8[%c84, %c0_141] : memref<177x32xf32, #tpu.memory_space<vmem>>, vector<1x32xf32>
    %186 = arith.maximumf %182, %183 : vector<1x32xf32>
    %187 = arith.maximumf %184, %185 : vector<1x32xf32>
    %188 = arith.maximumf %186, %187 : vector<1x32xf32>
    %c0_142 = arith.constant 0 : index
    %c512 = arith.constant 512 : index
    %189 = vector.load %arg9[%c0_142, %c512] : memref<1x1152xf32, #tpu.memory_space<vmem>>, vector<1x32xf32>
    tpu.vector_store %arg9[%c0_142, %c512], %188 {strides = array<i32>} : memref<1x1152xf32, #tpu.memory_space<vmem>>, vector<1x32xf32>,
    %c70 = arith.constant 70 : index
    %c0_143 = arith.constant 0 : index
    %190 = vector.load %arg8[%c70, %c0_143] : memref<177x32xf32, #tpu.memory_space<vmem>>, vector<1x32xf32>
    %c71 = arith.constant 71 : index
    %c0_144 = arith.constant 0 : index
    %191 = vector.load %arg8[%c71, %c0_144] : memref<177x32xf32, #tpu.memory_space<vmem>>, vector<1x32xf32>
    %c85 = arith.constant 85 : index
    %c0_145 = arith.constant 0 : index
    %192 = vector.load %arg8[%c85, %c0_145] : memref<177x32xf32, #tpu.memory_space<vmem>>, vector<1x32xf32>
    %c86 = arith.constant 86 : index
    %c0_146 = arith.constant 0 : index
    %193 = vector.load %arg8[%c86, %c0_146] : memref<177x32xf32, #tpu.memory_space<vmem>>, vector<1x32xf32>
    %194 = arith.maximumf %190, %191 : vector<1x32xf32>
    %195 = arith.maximumf %192, %193 : vector<1x32xf32>
    %196 = arith.maximumf %194, %195 : vector<1x32xf32>
    %c0_147 = arith.constant 0 : index
    %c544 = arith.constant 544 : index
    %197 = vector.load %arg9[%c0_147, %c544] : memref<1x1152xf32, #tpu.memory_space<vmem>>, vector<1x32xf32>
    tpu.vector_store %arg9[%c0_147, %c544], %196 {strides = array<i32>} : memref<1x1152xf32, #tpu.memory_space<vmem>>, vector<1x32xf32>,
    %c90 = arith.constant 90 : index
    %c0_148 = arith.constant 0 : index
    %198 = vector.load %arg8[%c90, %c0_148] : memref<177x32xf32, #tpu.memory_space<vmem>>, vector<1x32xf32>
    %c91 = arith.constant 91 : index
    %c0_149 = arith.constant 0 : index
    %199 = vector.load %arg8[%c91, %c0_149] : memref<177x32xf32, #tpu.memory_space<vmem>>, vector<1x32xf32>
    %c105 = arith.constant 105 : index
    %c0_150 = arith.constant 0 : index
    %200 = vector.load %arg8[%c105, %c0_150] : memref<177x32xf32, #tpu.memory_space<vmem>>, vector<1x32xf32>
    %c106 = arith.constant 106 : index
    %c0_151 = arith.constant 0 : index
    %201 = vector.load %arg8[%c106, %c0_151] : memref<177x32xf32, #tpu.memory_space<vmem>>, vector<1x32xf32>
    %202 = arith.maximumf %198, %199 : vector<1x32xf32>
    %203 = arith.maximumf %200, %201 : vector<1x32xf32>
    %204 = arith.maximumf %202, %203 : vector<1x32xf32>
    %c0_152 = arith.constant 0 : index
    %c576 = arith.constant 576 : index
    %205 = vector.load %arg9[%c0_152, %c576] : memref<1x1152xf32, #tpu.memory_space<vmem>>, vector<1x32xf32>
    tpu.vector_store %arg9[%c0_152, %c576], %204 {strides = array<i32>} : memref<1x1152xf32, #tpu.memory_space<vmem>>, vector<1x32xf32>,
    %c92 = arith.constant 92 : index
    %c0_153 = arith.constant 0 : index
    %206 = vector.load %arg8[%c92, %c0_153] : memref<177x32xf32, #tpu.memory_space<vmem>>, vector<1x32xf32>
    %c93 = arith.constant 93 : index
    %c0_154 = arith.constant 0 : index
    %207 = vector.load %arg8[%c93, %c0_154] : memref<177x32xf32, #tpu.memory_space<vmem>>, vector<1x32xf32>
    %c107 = arith.constant 107 : index
    %c0_155 = arith.constant 0 : index
    %208 = vector.load %arg8[%c107, %c0_155] : memref<177x32xf32, #tpu.memory_space<vmem>>, vector<1x32xf32>
    %c108 = arith.constant 108 : index
    %c0_156 = arith.constant 0 : index
    %209 = vector.load %arg8[%c108, %c0_156] : memref<177x32xf32, #tpu.memory_space<vmem>>, vector<1x32xf32>
    %210 = arith.maximumf %206, %207 : vector<1x32xf32>
    %211 = arith.maximumf %208, %209 : vector<1x32xf32>
    %212 = arith.maximumf %210, %211 : vector<1x32xf32>
    %c0_157 = arith.constant 0 : index
    %c608 = arith.constant 608 : index
    %213 = vector.load %arg9[%c0_157, %c608] : memref<1x1152xf32, #tpu.memory_space<vmem>>, vector<1x32xf32>
    tpu.vector_store %arg9[%c0_157, %c608], %212 {strides = array<i32>} : memref<1x1152xf32, #tpu.memory_space<vmem>>, vector<1x32xf32>,
    %c94 = arith.constant 94 : index
    %c0_158 = arith.constant 0 : index
    %214 = vector.load %arg8[%c94, %c0_158] : memref<177x32xf32, #tpu.memory_space<vmem>>, vector<1x32xf32>
    %c95 = arith.constant 95 : index
    %c0_159 = arith.constant 0 : index
    %215 = vector.load %arg8[%c95, %c0_159] : memref<177x32xf32, #tpu.memory_space<vmem>>, vector<1x32xf32>
    %c109 = arith.constant 109 : index
    %c0_160 = arith.constant 0 : index
    %216 = vector.load %arg8[%c109, %c0_160] : memref<177x32xf32, #tpu.memory_space<vmem>>, vector<1x32xf32>
    %c110 = arith.constant 110 : index
    %c0_161 = arith.constant 0 : index
    %217 = vector.load %arg8[%c110, %c0_161] : memref<177x32xf32, #tpu.memory_space<vmem>>, vector<1x32xf32>
    %218 = arith.maximumf %214, %215 : vector<1x32xf32>
    %219 = arith.maximumf %216, %217 : vector<1x32xf32>
    %220 = arith.maximumf %218, %219 : vector<1x32xf32>
    %c0_162 = arith.constant 0 : index
    %c640 = arith.constant 640 : index
    %221 = vector.load %arg9[%c0_162, %c640] : memref<1x1152xf32, #tpu.memory_space<vmem>>, vector<1x32xf32>
    tpu.vector_store %arg9[%c0_162, %c640], %220 {strides = array<i32>} : memref<1x1152xf32, #tpu.memory_space<vmem>>, vector<1x32xf32>,
    %c96_163 = arith.constant 96 : index
    %c0_164 = arith.constant 0 : index
    %222 = vector.load %arg8[%c96_163, %c0_164] : memref<177x32xf32, #tpu.memory_space<vmem>>, vector<1x32xf32>
    %c97 = arith.constant 97 : index
    %c0_165 = arith.constant 0 : index
    %223 = vector.load %arg8[%c97, %c0_165] : memref<177x32xf32, #tpu.memory_space<vmem>>, vector<1x32xf32>
    %c111 = arith.constant 111 : index
    %c0_166 = arith.constant 0 : index
    %224 = vector.load %arg8[%c111, %c0_166] : memref<177x32xf32, #tpu.memory_space<vmem>>, vector<1x32xf32>
    %c112 = arith.constant 112 : index
    %c0_167 = arith.constant 0 : index
    %225 = vector.load %arg8[%c112, %c0_167] : memref<177x32xf32, #tpu.memory_space<vmem>>, vector<1x32xf32>
    %226 = arith.maximumf %222, %223 : vector<1x32xf32>
    %227 = arith.maximumf %224, %225 : vector<1x32xf32>
    %228 = arith.maximumf %226, %227 : vector<1x32xf32>
    %c0_168 = arith.constant 0 : index
    %c672 = arith.constant 672 : index
    %229 = vector.load %arg9[%c0_168, %c672] : memref<1x1152xf32, #tpu.memory_space<vmem>>, vector<1x32xf32>
    tpu.vector_store %arg9[%c0_168, %c672], %228 {strides = array<i32>} : memref<1x1152xf32, #tpu.memory_space<vmem>>, vector<1x32xf32>,
    %c98 = arith.constant 98 : index
    %c0_169 = arith.constant 0 : index
    %230 = vector.load %arg8[%c98, %c0_169] : memref<177x32xf32, #tpu.memory_space<vmem>>, vector<1x32xf32>
    %c99 = arith.constant 99 : index
    %c0_170 = arith.constant 0 : index
    %231 = vector.load %arg8[%c99, %c0_170] : memref<177x32xf32, #tpu.memory_space<vmem>>, vector<1x32xf32>
    %c113 = arith.constant 113 : index
    %c0_171 = arith.constant 0 : index
    %232 = vector.load %arg8[%c113, %c0_171] : memref<177x32xf32, #tpu.memory_space<vmem>>, vector<1x32xf32>
    %c114 = arith.constant 114 : index
    %c0_172 = arith.constant 0 : index
    %233 = vector.load %arg8[%c114, %c0_172] : memref<177x32xf32, #tpu.memory_space<vmem>>, vector<1x32xf32>
    %234 = arith.maximumf %230, %231 : vector<1x32xf32>
    %235 = arith.maximumf %232, %233 : vector<1x32xf32>
    %236 = arith.maximumf %234, %235 : vector<1x32xf32>
    %c0_173 = arith.constant 0 : index
    %c704 = arith.constant 704 : index
    %237 = vector.load %arg9[%c0_173, %c704] : memref<1x1152xf32, #tpu.memory_space<vmem>>, vector<1x32xf32>
    tpu.vector_store %arg9[%c0_173, %c704], %236 {strides = array<i32>} : memref<1x1152xf32, #tpu.memory_space<vmem>>, vector<1x32xf32>,
    %c100 = arith.constant 100 : index
    %c0_174 = arith.constant 0 : index
    %238 = vector.load %arg8[%c100, %c0_174] : memref<177x32xf32, #tpu.memory_space<vmem>>, vector<1x32xf32>
    %c101 = arith.constant 101 : index
    %c0_175 = arith.constant 0 : index
    %239 = vector.load %arg8[%c101, %c0_175] : memref<177x32xf32, #tpu.memory_space<vmem>>, vector<1x32xf32>
    %c115 = arith.constant 115 : index
    %c0_176 = arith.constant 0 : index
    %240 = vector.load %arg8[%c115, %c0_176] : memref<177x32xf32, #tpu.memory_space<vmem>>, vector<1x32xf32>
    %c116 = arith.constant 116 : index
    %c0_177 = arith.constant 0 : index
    %241 = vector.load %arg8[%c116, %c0_177] : memref<177x32xf32, #tpu.memory_space<vmem>>, vector<1x32xf32>
    %242 = arith.maximumf %238, %239 : vector<1x32xf32>
    %243 = arith.maximumf %240, %241 : vector<1x32xf32>
    %244 = arith.maximumf %242, %243 : vector<1x32xf32>
    %c0_178 = arith.constant 0 : index
    %c736 = arith.constant 736 : index
    %245 = vector.load %arg9[%c0_178, %c736] : memref<1x1152xf32, #tpu.memory_space<vmem>>, vector<1x32xf32>
    tpu.vector_store %arg9[%c0_178, %c736], %244 {strides = array<i32>} : memref<1x1152xf32, #tpu.memory_space<vmem>>, vector<1x32xf32>,
    %c120 = arith.constant 120 : index
    %c0_179 = arith.constant 0 : index
    %246 = vector.load %arg8[%c120, %c0_179] : memref<177x32xf32, #tpu.memory_space<vmem>>, vector<1x32xf32>
    %c121 = arith.constant 121 : index
    %c0_180 = arith.constant 0 : index
    %247 = vector.load %arg8[%c121, %c0_180] : memref<177x32xf32, #tpu.memory_space<vmem>>, vector<1x32xf32>
    %c135 = arith.constant 135 : index
    %c0_181 = arith.constant 0 : index
    %248 = vector.load %arg8[%c135, %c0_181] : memref<177x32xf32, #tpu.memory_space<vmem>>, vector<1x32xf32>
    %c136 = arith.constant 136 : index
    %c0_182 = arith.constant 0 : index
    %249 = vector.load %arg8[%c136, %c0_182] : memref<177x32xf32, #tpu.memory_space<vmem>>, vector<1x32xf32>
    %250 = arith.maximumf %246, %247 : vector<1x32xf32>
    %251 = arith.maximumf %248, %249 : vector<1x32xf32>
    %252 = arith.maximumf %250, %251 : vector<1x32xf32>
    %c0_183 = arith.constant 0 : index
    %c768 = arith.constant 768 : index
    %253 = vector.load %arg9[%c0_183, %c768] : memref<1x1152xf32, #tpu.memory_space<vmem>>, vector<1x32xf32>
    tpu.vector_store %arg9[%c0_183, %c768], %252 {strides = array<i32>} : memref<1x1152xf32, #tpu.memory_space<vmem>>, vector<1x32xf32>,
    %c122 = arith.constant 122 : index
    %c0_184 = arith.constant 0 : index
    %254 = vector.load %arg8[%c122, %c0_184] : memref<177x32xf32, #tpu.memory_space<vmem>>, vector<1x32xf32>
    %c123 = arith.constant 123 : index
    %c0_185 = arith.constant 0 : index
    %255 = vector.load %arg8[%c123, %c0_185] : memref<177x32xf32, #tpu.memory_space<vmem>>, vector<1x32xf32>
    %c137 = arith.constant 137 : index
    %c0_186 = arith.constant 0 : index
    %256 = vector.load %arg8[%c137, %c0_186] : memref<177x32xf32, #tpu.memory_space<vmem>>, vector<1x32xf32>
    %c138 = arith.constant 138 : index
    %c0_187 = arith.constant 0 : index
    %257 = vector.load %arg8[%c138, %c0_187] : memref<177x32xf32, #tpu.memory_space<vmem>>, vector<1x32xf32>
    %258 = arith.maximumf %254, %255 : vector<1x32xf32>
    %259 = arith.maximumf %256, %257 : vector<1x32xf32>
    %260 = arith.maximumf %258, %259 : vector<1x32xf32>
    %c0_188 = arith.constant 0 : index
    %c800 = arith.constant 800 : index
    %261 = vector.load %arg9[%c0_188, %c800] : memref<1x1152xf32, #tpu.memory_space<vmem>>, vector<1x32xf32>
    tpu.vector_store %arg9[%c0_188, %c800], %260 {strides = array<i32>} : memref<1x1152xf32, #tpu.memory_space<vmem>>, vector<1x32xf32>,
    %c124 = arith.constant 124 : index
    %c0_189 = arith.constant 0 : index
    %262 = vector.load %arg8[%c124, %c0_189] : memref<177x32xf32, #tpu.memory_space<vmem>>, vector<1x32xf32>
    %c125 = arith.constant 125 : index
    %c0_190 = arith.constant 0 : index
    %263 = vector.load %arg8[%c125, %c0_190] : memref<177x32xf32, #tpu.memory_space<vmem>>, vector<1x32xf32>
    %c139 = arith.constant 139 : index
    %c0_191 = arith.constant 0 : index
    %264 = vector.load %arg8[%c139, %c0_191] : memref<177x32xf32, #tpu.memory_space<vmem>>, vector<1x32xf32>
    %c140 = arith.constant 140 : index
    %c0_192 = arith.constant 0 : index
    %265 = vector.load %arg8[%c140, %c0_192] : memref<177x32xf32, #tpu.memory_space<vmem>>, vector<1x32xf32>
    %266 = arith.maximumf %262, %263 : vector<1x32xf32>
    %267 = arith.maximumf %264, %265 : vector<1x32xf32>
    %268 = arith.maximumf %266, %267 : vector<1x32xf32>
    %c0_193 = arith.constant 0 : index
    %c832 = arith.constant 832 : index
    %269 = vector.load %arg9[%c0_193, %c832] : memref<1x1152xf32, #tpu.memory_space<vmem>>, vector<1x32xf32>
    tpu.vector_store %arg9[%c0_193, %c832], %268 {strides = array<i32>} : memref<1x1152xf32, #tpu.memory_space<vmem>>, vector<1x32xf32>,
    %c126 = arith.constant 126 : index
    %c0_194 = arith.constant 0 : index
    %270 = vector.load %arg8[%c126, %c0_194] : memref<177x32xf32, #tpu.memory_space<vmem>>, vector<1x32xf32>
    %c127 = arith.constant 127 : index
    %c0_195 = arith.constant 0 : index
    %271 = vector.load %arg8[%c127, %c0_195] : memref<177x32xf32, #tpu.memory_space<vmem>>, vector<1x32xf32>
    %c141 = arith.constant 141 : index
    %c0_196 = arith.constant 0 : index
    %272 = vector.load %arg8[%c141, %c0_196] : memref<177x32xf32, #tpu.memory_space<vmem>>, vector<1x32xf32>
    %c142 = arith.constant 142 : index
    %c0_197 = arith.constant 0 : index
    %273 = vector.load %arg8[%c142, %c0_197] : memref<177x32xf32, #tpu.memory_space<vmem>>, vector<1x32xf32>
    %274 = arith.maximumf %270, %271 : vector<1x32xf32>
    %275 = arith.maximumf %272, %273 : vector<1x32xf32>
    %276 = arith.maximumf %274, %275 : vector<1x32xf32>
    %c0_198 = arith.constant 0 : index
    %c864 = arith.constant 864 : index
    %277 = vector.load %arg9[%c0_198, %c864] : memref<1x1152xf32, #tpu.memory_space<vmem>>, vector<1x32xf32>
    tpu.vector_store %arg9[%c0_198, %c864], %276 {strides = array<i32>} : memref<1x1152xf32, #tpu.memory_space<vmem>>, vector<1x32xf32>,
    %c128_199 = arith.constant 128 : index
    %c0_200 = arith.constant 0 : index
    %278 = vector.load %arg8[%c128_199, %c0_200] : memref<177x32xf32, #tpu.memory_space<vmem>>, vector<1x32xf32>
    %c129 = arith.constant 129 : index
    %c0_201 = arith.constant 0 : index
    %279 = vector.load %arg8[%c129, %c0_201] : memref<177x32xf32, #tpu.memory_space<vmem>>, vector<1x32xf32>
    %c143 = arith.constant 143 : index
    %c0_202 = arith.constant 0 : index
    %280 = vector.load %arg8[%c143, %c0_202] : memref<177x32xf32, #tpu.memory_space<vmem>>, vector<1x32xf32>
    %c144 = arith.constant 144 : index
    %c0_203 = arith.constant 0 : index
    %281 = vector.load %arg8[%c144, %c0_203] : memref<177x32xf32, #tpu.memory_space<vmem>>, vector<1x32xf32>
    %282 = arith.maximumf %278, %279 : vector<1x32xf32>
    %283 = arith.maximumf %280, %281 : vector<1x32xf32>
    %284 = arith.maximumf %282, %283 : vector<1x32xf32>
    %c0_204 = arith.constant 0 : index
    %c896 = arith.constant 896 : index
    %285 = vector.load %arg9[%c0_204, %c896] : memref<1x1152xf32, #tpu.memory_space<vmem>>, vector<1x32xf32>
    tpu.vector_store %arg9[%c0_204, %c896], %284 {strides = array<i32>} : memref<1x1152xf32, #tpu.memory_space<vmem>>, vector<1x32xf32>,
    %c130 = arith.constant 130 : index
    %c0_205 = arith.constant 0 : index
    %286 = vector.load %arg8[%c130, %c0_205] : memref<177x32xf32, #tpu.memory_space<vmem>>, vector<1x32xf32>
    %c131 = arith.constant 131 : index
    %c0_206 = arith.constant 0 : index
    %287 = vector.load %arg8[%c131, %c0_206] : memref<177x32xf32, #tpu.memory_space<vmem>>, vector<1x32xf32>
    %c145 = arith.constant 145 : index
    %c0_207 = arith.constant 0 : index
    %288 = vector.load %arg8[%c145, %c0_207] : memref<177x32xf32, #tpu.memory_space<vmem>>, vector<1x32xf32>
    %c146 = arith.constant 146 : index
    %c0_208 = arith.constant 0 : index
    %289 = vector.load %arg8[%c146, %c0_208] : memref<177x32xf32, #tpu.memory_space<vmem>>, vector<1x32xf32>
    %290 = arith.maximumf %286, %287 : vector<1x32xf32>
    %291 = arith.maximumf %288, %289 : vector<1x32xf32>
    %292 = arith.maximumf %290, %291 : vector<1x32xf32>
    %c0_209 = arith.constant 0 : index
    %c928 = arith.constant 928 : index
    %293 = vector.load %arg9[%c0_209, %c928] : memref<1x1152xf32, #tpu.memory_space<vmem>>, vector<1x32xf32>
    tpu.vector_store %arg9[%c0_209, %c928], %292 {strides = array<i32>} : memref<1x1152xf32, #tpu.memory_space<vmem>>, vector<1x32xf32>,
    %c150 = arith.constant 150 : index
    %c0_210 = arith.constant 0 : index
    %294 = vector.load %arg8[%c150, %c0_210] : memref<177x32xf32, #tpu.memory_space<vmem>>, vector<1x32xf32>
    %c151 = arith.constant 151 : index
    %c0_211 = arith.constant 0 : index
    %295 = vector.load %arg8[%c151, %c0_211] : memref<177x32xf32, #tpu.memory_space<vmem>>, vector<1x32xf32>
    %c165 = arith.constant 165 : index
    %c0_212 = arith.constant 0 : index
    %296 = vector.load %arg8[%c165, %c0_212] : memref<177x32xf32, #tpu.memory_space<vmem>>, vector<1x32xf32>
    %c166 = arith.constant 166 : index
    %c0_213 = arith.constant 0 : index
    %297 = vector.load %arg8[%c166, %c0_213] : memref<177x32xf32, #tpu.memory_space<vmem>>, vector<1x32xf32>
    %298 = arith.maximumf %294, %295 : vector<1x32xf32>
    %299 = arith.maximumf %296, %297 : vector<1x32xf32>
    %300 = arith.maximumf %298, %299 : vector<1x32xf32>
    %c0_214 = arith.constant 0 : index
    %c960 = arith.constant 960 : index
    %301 = vector.load %arg9[%c0_214, %c960] : memref<1x1152xf32, #tpu.memory_space<vmem>>, vector<1x32xf32>
    tpu.vector_store %arg9[%c0_214, %c960], %300 {strides = array<i32>} : memref<1x1152xf32, #tpu.memory_space<vmem>>, vector<1x32xf32>,
    %c152 = arith.constant 152 : index
    %c0_215 = arith.constant 0 : index
    %302 = vector.load %arg8[%c152, %c0_215] : memref<177x32xf32, #tpu.memory_space<vmem>>, vector<1x32xf32>
    %c153 = arith.constant 153 : index
    %c0_216 = arith.constant 0 : index
    %303 = vector.load %arg8[%c153, %c0_216] : memref<177x32xf32, #tpu.memory_space<vmem>>, vector<1x32xf32>
    %c167 = arith.constant 167 : index
    %c0_217 = arith.constant 0 : index
    %304 = vector.load %arg8[%c167, %c0_217] : memref<177x32xf32, #tpu.memory_space<vmem>>, vector<1x32xf32>
    %c168 = arith.constant 168 : index
    %c0_218 = arith.constant 0 : index
    %305 = vector.load %arg8[%c168, %c0_218] : memref<177x32xf32, #tpu.memory_space<vmem>>, vector<1x32xf32>
    %306 = arith.maximumf %302, %303 : vector<1x32xf32>
    %307 = arith.maximumf %304, %305 : vector<1x32xf32>
    %308 = arith.maximumf %306, %307 : vector<1x32xf32>
    %c0_219 = arith.constant 0 : index
    %c992 = arith.constant 992 : index
    %309 = vector.load %arg9[%c0_219, %c992] : memref<1x1152xf32, #tpu.memory_space<vmem>>, vector<1x32xf32>
    tpu.vector_store %arg9[%c0_219, %c992], %308 {strides = array<i32>} : memref<1x1152xf32, #tpu.memory_space<vmem>>, vector<1x32xf32>,
    %c154 = arith.constant 154 : index
    %c0_220 = arith.constant 0 : index
    %310 = vector.load %arg8[%c154, %c0_220] : memref<177x32xf32, #tpu.memory_space<vmem>>, vector<1x32xf32>
    %c155 = arith.constant 155 : index
    %c0_221 = arith.constant 0 : index
    %311 = vector.load %arg8[%c155, %c0_221] : memref<177x32xf32, #tpu.memory_space<vmem>>, vector<1x32xf32>
    %c169 = arith.constant 169 : index
    %c0_222 = arith.constant 0 : index
    %312 = vector.load %arg8[%c169, %c0_222] : memref<177x32xf32, #tpu.memory_space<vmem>>, vector<1x32xf32>
    %c170 = arith.constant 170 : index
    %c0_223 = arith.constant 0 : index
    %313 = vector.load %arg8[%c170, %c0_223] : memref<177x32xf32, #tpu.memory_space<vmem>>, vector<1x32xf32>
    %314 = arith.maximumf %310, %311 : vector<1x32xf32>
    %315 = arith.maximumf %312, %313 : vector<1x32xf32>
    %316 = arith.maximumf %314, %315 : vector<1x32xf32>
    %c0_224 = arith.constant 0 : index
    %c1024 = arith.constant 1024 : index
    %317 = vector.load %arg9[%c0_224, %c1024] : memref<1x1152xf32, #tpu.memory_space<vmem>>, vector<1x32xf32>
    tpu.vector_store %arg9[%c0_224, %c1024], %316 {strides = array<i32>} : memref<1x1152xf32, #tpu.memory_space<vmem>>, vector<1x32xf32>,
    %c156 = arith.constant 156 : index
    %c0_225 = arith.constant 0 : index
    %318 = vector.load %arg8[%c156, %c0_225] : memref<177x32xf32, #tpu.memory_space<vmem>>, vector<1x32xf32>
    %c157 = arith.constant 157 : index
    %c0_226 = arith.constant 0 : index
    %319 = vector.load %arg8[%c157, %c0_226] : memref<177x32xf32, #tpu.memory_space<vmem>>, vector<1x32xf32>
    %c171 = arith.constant 171 : index
    %c0_227 = arith.constant 0 : index
    %320 = vector.load %arg8[%c171, %c0_227] : memref<177x32xf32, #tpu.memory_space<vmem>>, vector<1x32xf32>
    %c172 = arith.constant 172 : index
    %c0_228 = arith.constant 0 : index
    %321 = vector.load %arg8[%c172, %c0_228] : memref<177x32xf32, #tpu.memory_space<vmem>>, vector<1x32xf32>
    %322 = arith.maximumf %318, %319 : vector<1x32xf32>
    %323 = arith.maximumf %320, %321 : vector<1x32xf32>
    %324 = arith.maximumf %322, %323 : vector<1x32xf32>
    %c0_229 = arith.constant 0 : index
    %c1056 = arith.constant 1056 : index
    %325 = vector.load %arg9[%c0_229, %c1056] : memref<1x1152xf32, #tpu.memory_space<vmem>>, vector<1x32xf32>
    tpu.vector_store %arg9[%c0_229, %c1056], %324 {strides = array<i32>} : memref<1x1152xf32, #tpu.memory_space<vmem>>, vector<1x32xf32>,
    %c158 = arith.constant 158 : index
    %c0_230 = arith.constant 0 : index
    %326 = vector.load %arg8[%c158, %c0_230] : memref<177x32xf32, #tpu.memory_space<vmem>>, vector<1x32xf32>
    %c159 = arith.constant 159 : index
    %c0_231 = arith.constant 0 : index
    %327 = vector.load %arg8[%c159, %c0_231] : memref<177x32xf32, #tpu.memory_space<vmem>>, vector<1x32xf32>
    %c173 = arith.constant 173 : index
    %c0_232 = arith.constant 0 : index
    %328 = vector.load %arg8[%c173, %c0_232] : memref<177x32xf32, #tpu.memory_space<vmem>>, vector<1x32xf32>
    %c174 = arith.constant 174 : index
    %c0_233 = arith.constant 0 : index
    %329 = vector.load %arg8[%c174, %c0_233] : memref<177x32xf32, #tpu.memory_space<vmem>>, vector<1x32xf32>
    %330 = arith.maximumf %326, %327 : vector<1x32xf32>
    %331 = arith.maximumf %328, %329 : vector<1x32xf32>
    %332 = arith.maximumf %330, %331 : vector<1x32xf32>
    %c0_234 = arith.constant 0 : index
    %c1088 = arith.constant 1088 : index
    %333 = vector.load %arg9[%c0_234, %c1088] : memref<1x1152xf32, #tpu.memory_space<vmem>>, vector<1x32xf32>
    tpu.vector_store %arg9[%c0_234, %c1088], %332 {strides = array<i32>} : memref<1x1152xf32, #tpu.memory_space<vmem>>, vector<1x32xf32>,
    %c160_235 = arith.constant 160 : index
    %c0_236 = arith.constant 0 : index
    %334 = vector.load %arg8[%c160_235, %c0_236] : memref<177x32xf32, #tpu.memory_space<vmem>>, vector<1x32xf32>
    %c161 = arith.constant 161 : index
    %c0_237 = arith.constant 0 : index
    %335 = vector.load %arg8[%c161, %c0_237] : memref<177x32xf32, #tpu.memory_space<vmem>>, vector<1x32xf32>
    %c175 = arith.constant 175 : index
    %c0_238 = arith.constant 0 : index
    %336 = vector.load %arg8[%c175, %c0_238] : memref<177x32xf32, #tpu.memory_space<vmem>>, vector<1x32xf32>
    %c176 = arith.constant 176 : index
    %c0_239 = arith.constant 0 : index
    %337 = vector.load %arg8[%c176, %c0_239] : memref<177x32xf32, #tpu.memory_space<vmem>>, vector<1x32xf32>
    %338 = arith.maximumf %334, %335 : vector<1x32xf32>
    %339 = arith.maximumf %336, %337 : vector<1x32xf32>
    %340 = arith.maximumf %338, %339 : vector<1x32xf32>
    %c0_240 = arith.constant 0 : index
    %c1120 = arith.constant 1120 : index
    %341 = vector.load %arg9[%c0_240, %c1120] : memref<1x1152xf32, #tpu.memory_space<vmem>>, vector<1x32xf32>
    tpu.vector_store %arg9[%c0_240, %c1120], %340 {strides = array<i32>} : memref<1x1152xf32, #tpu.memory_space<vmem>>, vector<1x32xf32>,
    %c0_241 = arith.constant 0 : index
    %c0_242 = arith.constant 0 : index
    %342 = vector.load %arg9[%c0_241, %c0_242] : memref<1x1152xf32, #tpu.memory_space<vmem>>, vector<1x1152xf32>
    %343 = arith.truncf %342 : vector<1x1152xf32> to vector<1x1152xbf16>
    %c0_243 = arith.constant 0 : index
    %c0_244 = arith.constant 0 : index
    %344 = vector.load %arg2[%c0_243, %c0_244] : memref<1152x32xbf16, #tpu.memory_space<vmem>>, vector<1152x32xbf16>
    %cst_245 = arith.constant dense<0.000000e+00> : vector<1x32xf32>
    %345 = tpu.matmul %343, %344, %cst_245 {dimension_numbers = #tpu.dot_dimension_numbers<[1], [0], [0], [1], [0, 0, 1, 1], [], []>} : vector<1x1152xbf16>, vector<1152x32xbf16>, vector<1x32xf32> -> vector<1x32xf32>
    %c0_246 = arith.constant 0 : index
    %c0_247 = arith.constant 0 : index
    %346 = vector.load %arg0[%c0_246, %c0_247] : memref<233x32xf32, #tpu.memory_space<vmem>>, vector<8x32xf32>
    %c0_248 = arith.constant 0 : index
    %c0_249 = arith.constant 0 : index
    %347 = vector.load %arg3[%c0_248, %c0_249] : memref<32x96xf32, #tpu.memory_space<vmem>>, vector<32x96xf32>
    %cst_250 = arith.constant dense<0.000000e+00> : vector<8x96xf32>
    %348 = tpu.matmul %346, %347, %cst_250 {dimension_numbers = #tpu.dot_dimension_numbers<[1], [0], [0], [1], [0, 0, 1, 1], [], []>} : vector<8x32xf32>, vector<32x96xf32>, vector<8x96xf32> -> vector<8x96xf32>
    %c0_251 = arith.constant 0 : index
    %c0_252 = arith.constant 0 : index
    %349 = vector.load %arg4[%c0_251, %c0_252] : memref<1x96xf32, #tpu.memory_space<vmem>>, vector<1x96xf32>
    %350 = vector.broadcast %349 : vector<1x96xf32> to vector<8x96xf32>
    %351 = arith.addf %348, %350 : vector<8x96xf32>
    %352 = vector.extract_strided_slice %351 {offsets = [0, 0], sizes = [8, 32], strides = [1, 1]} : vector<8x96xf32> to vector<8x32xf32>
    %353 = vector.extract_strided_slice %351 {offsets = [0, 32], sizes = [8, 32], strides = [1, 1]} : vector<8x96xf32> to vector<8x32xf32>
    %354 = vector.extract_strided_slice %351 {offsets = [0, 64], sizes = [8, 32], strides = [1, 1]} : vector<8x96xf32> to vector<8x32xf32>
    "tpu.trace_start"() <{level = 10 : i32, message = "md,nd->mn"}> : () -> ()
    %cst_253 = arith.constant dense<0.000000e+00> : vector<8x8xf32>
    %355 = tpu.matmul %352, %353, %cst_253 {dimension_numbers = #tpu.dot_dimension_numbers<[1], [1], [0], [0], [0, 0, 1, 0], [], []>} : vector<8x32xf32>, vector<8x32xf32>, vector<8x8xf32> -> vector<8x8xf32>
    "tpu.trace_stop"() : () -> ()
    %cst_254 = arith.constant 0.176776692 : f32
    %356 = vector.broadcast %cst_254 : f32 to vector<8x8xf32>
    %357 = arith.mulf %355, %356 : vector<8x8xf32>
    %cst_255 = arith.constant dense<0xFF800000> : vector<8xf32>
    %358 = vector.multi_reduction <maximumf>, %357, %cst_255 [1] : vector<8x8xf32> to vector<8xf32>
    %359 = vector.shape_cast %358 : vector<8xf32> to vector<8x1xf32>
    %360 = vector.broadcast %359 : vector<8x1xf32> to vector<8x8xf32>
    %361 = arith.subf %357, %360 : vector<8x8xf32>
    %362 = math.exp %361 : vector<8x8xf32>
    %cst_256 = arith.constant dense<0.000000e+00> : vector<8xf32>
    %363 = vector.multi_reduction <add>, %362, %cst_256 [1] : vector<8x8xf32> to vector<8xf32>
    %364 = vector.shape_cast %363 : vector<8xf32> to vector<8x1xf32>
    %365 = tpu.reciprocal %364 {approx = true} : vector<8x1xf32> -> vector<8x1xf32>
    %366 = vector.broadcast %365 : vector<8x1xf32> to vector<8x8xf32>
    %367 = arith.mulf %362, %366 : vector<8x8xf32>
    %cst_257 = arith.constant dense<0.000000e+00> : vector<8x32xf32>
    %368 = tpu.matmul %367, %354, %cst_257 {dimension_numbers = #tpu.dot_dimension_numbers<[1], [0], [0], [1], [0, 0, 1, 1], [], []>} : vector<8x8xf32>, vector<8x32xf32>, vector<8x32xf32> -> vector<8x32xf32>
    %cst_258 = arith.constant dense<0xFF800000> : vector<32xf32>
    %369 = vector.multi_reduction <maximumf>, %368, %cst_258 [0] : vector<8x32xf32> to vector<32xf32>
    %370 = vector.shape_cast %369 : vector<32xf32> to vector<1x32xf32>
    %c0_259 = arith.constant 0 : index
    %c0_260 = arith.constant 0 : index
    %371 = vector.load %arg5[%c0_259, %c0_260] : memref<32x32xf32, #tpu.memory_space<vmem>>, vector<32x32xf32>
    %cst_261 = arith.constant dense<0.000000e+00> : vector<1x32xf32>
    %372 = tpu.matmul %370, %371, %cst_261 {dimension_numbers = #tpu.dot_dimension_numbers<[1], [0], [0], [1], [0, 0, 1, 1], [], []>} : vector<1x32xf32>, vector<32x32xf32>, vector<1x32xf32> -> vector<1x32xf32>
    %373 = arith.addf %345, %372 : vector<1x32xf32>
    %c0_262 = arith.constant 0 : index
    %c0_263 = arith.constant 0 : index
    %374 = vector.load %arg6[%c0_262, %c0_263] : memref<1x32xf32, #tpu.memory_space<vmem>>, vector<1x32xf32>
    %375 = arith.addf %373, %374 : vector<1x32xf32>
    %c0_264 = arith.constant 0 : index
    %c0_265 = arith.constant 0 : index
    %376 = vector.load %arg7[%c0_264, %c0_265] : memref<1x32xf32, #tpu.memory_space<vmem>>, vector<1x32xf32>
    tpu.vector_store %arg7[%c0_264, %c0_265], %375 {strides = array<i32>} : memref<1x32xf32, #tpu.memory_space<vmem>>, vector<1x32xf32>,
    return
  }
}

</mosaic_0001>

<llo_original>
// kernel: entities_forward.1
$region0: #{entities_forward.1}
  #allocation0 [shape = 'u32[]', space=smem, size = 0x4, offset = 0x4, fixed_abs, tag = 'smem constant byte address 0x4 - core index']
  #allocation1 [shape = 'u32[144,128]{1,0:T(1,128)}', space=vmem, size = 0x12000, scoped, tag = 'internal scratch']
  #allocation2 [shape = 'f32[177,32]{1,0:T(8,128)}', space=vmem, size = 0x17000, scoped, tag = 'scratch operand']
  #allocation3 [shape = 'f32[1,1152]{1,0:T(1,128)}', space=vmem, size = 0x1200, scoped, tag = 'scratch operand']
  %s0 = inlined_call_operand.vmem [shape: f32[233,32], index: 0, kind: input, shape index: {}]
  %s1 = inlined_call_operand.vmem [shape: bf16[9,32,32], index: 1, kind: input, shape index: {}]
  %s2 = inlined_call_operand.vmem [shape: bf16[1152,32], index: 2, kind: input, shape index: {}]
  %s3 = inlined_call_operand.vmem [shape: f32[32,96], index: 3, kind: input, shape index: {}]
  %s4 = inlined_call_operand.vmem [shape: f32[1,96], index: 4, kind: input, shape index: {}]
  %s5 = inlined_call_operand.vmem [shape: f32[32,32], index: 5, kind: input, shape index: {}]
  %s6 = inlined_call_operand.vmem [shape: f32[1,32], index: 6, kind: input, shape index: {}]
  %s7 = inlined_call_operand.hbm [shape: f32[1,32], index: 7, kind: output, shape index: {}]
  %s8 = sld [smem:[#allocation0]]
  $region38: #{entities_forward.1} parent=0
    _
  %s10 = ssub.s32 1, %s8
  %s11 = scalar_select 0, %s10, %s8
  $region1: #{entities_forward.1} parent=0
    #allocation4 [shape = 'u8[512]{0}', space=vmem, size = 0x400, scoped, tag = 'output window, operand 0, single buffered']
    #allocation5 [shape = 's32[1]{0}', space=sflag, size = 0x4, scoped, tag = 'scoped memory for entities_forward.1']
    %12 = vsyncpa [#allocation5], 0
    // Predicated region
    $region2: #{entities_forward.1} parent=1 // pred_check
      _
    $region3: #{entities_forward.1} parent=1 // pred_check_branch
      %14 = sbr.rel (0) target = $region5
    $region4: #{entities_forward.1} parent=1 // pred_region
      _
    $region5: #{entities_forward.1} parent=1 // pred_fallthru
      _
    // Predicated region
    $region6: #{entities_forward.1} parent=1 // pred_check
      _
    $region7: #{entities_forward.1} parent=1 // pred_check_branch
      %16 = sbr.rel (0) target = $region9
    $region8: #{entities_forward.1} parent=1 // pred_region
      _
    $region9: #{entities_forward.1} parent=1 // pred_fallthru
      _
    // Predicated region
    $region10: #{entities_forward.1} parent=1 // pred_check
      _
    $region11: #{entities_forward.1} parent=1 // pred_check_branch
      %18 = sbr.rel (0) target = $region13
    $region12: #{entities_forward.1} parent=1 // pred_region
      _
    $region13: #{entities_forward.1} parent=1 // pred_fallthru
      _
    // Predicated region
    $region14: #{entities_forward.1} parent=1 // pred_check
      _
    $region15: #{entities_forward.1} parent=1 // pred_check_branch
      %20 = sbr.rel (0) target = $region17
    $region16: #{entities_forward.1} parent=1 // pred_region
      _
    $region17: #{entities_forward.1} parent=1 // pred_fallthru
      _
    // Predicated region
    $region18: #{entities_forward.1} parent=1 // pred_check
      _
    $region19: #{entities_forward.1} parent=1 // pred_check_branch
      %22 = sbr.rel (0) target = $region21
    $region20: #{entities_forward.1} parent=1 // pred_region
      _
    $region21: #{entities_forward.1} parent=1 // pred_fallthru
      _
    // Predicated region
    $region22: #{entities_forward.1} parent=1 // pred_check
      _
    $region23: #{entities_forward.1} parent=1 // pred_check_branch
      %24 = sbr.rel (0) target = $region25
    $region24: #{entities_forward.1} parent=1 // pred_region
      _
    $region25: #{entities_forward.1} parent=1 // pred_fallthru
      _
    // Predicated region
    $region26: #{entities_forward.1} parent=1 // pred_check
      _
    $region27: #{entities_forward.1} parent=1 // pred_check_branch
      %26 = sbr.rel (0) target = $region29
    $region28: #{entities_forward.1} parent=1 // pred_region
      _
    $region29: #{entities_forward.1} parent=1 // pred_fallthru
      _
    %v28 = vld [vmem:[%s0 + $0x8] sm:$0xff]
    %v29 = vld [vmem:[%s0 + $0x10] sm:$0xff]
    %v30 = vld [vmem:[%s0 + $0x18] sm:$0xff]
    %v31 = vld [vmem:[%s0 + $0x20] sm:$0xff]
    %v32 = vld [vmem:[%s0 + $0x28] sm:$0xff]
    %v33 = vld [vmem:[%s0 + $0x30] sm:$0xff]
    %v34 = vld [vmem:[%s0 + $0x38] sm:$0xff]
    %v35 = vld [vmem:[%s0 + $0x40] sm:$0xff]
    %v36 = vld [vmem:[%s0 + $0x48] sm:$0xff]
    %v37 = vld [vmem:[%s0 + $0x50] sm:$0xff]
    %v38 = vld [vmem:[%s0 + $0x58] sm:$0xff]
    %v39 = vld [vmem:[%s0 + $0x60] sm:$0xff]
    %v40 = vld [vmem:[%s0 + $0x68] sm:$0xff]
    %v41 = vld [vmem:[%s0 + $0x70] sm:$0xff]
    %v42 = vld [vmem:[%s0 + $0x78] sm:$0xff]
    %v43 = vld [vmem:[%s0 + $0x80] sm:$0xff]
    %v44 = vld [vmem:[%s0 + $0x88] sm:$0xff]
    %v45 = vld [vmem:[%s0 + $0x90] sm:$0xff]
    %v46 = vld [vmem:[%s0 + $0x98] sm:$0xff]
    %v47 = vld [vmem:[%s0 + $0xa0] sm:$0xff]
    %v48 = vld [vmem:[%s0 + $0xa8] sm:$0xff]
    %v49 = vld [vmem:[%s0 + $0xb0] sm:$0xff]
    %v50 = vld [vmem:[%s0 + $0xb8] sm:$0x1]
    %v51 = vpack.c.bf16 %v29, %v28
    %v52 = vpack.c.bf16 %v31, %v30
    %v53 = vpack.c.bf16 %v33, %v32
    %v54 = vpack.c.bf16 %v35, %v34
    %v55 = vpack.c.bf16 %v37, %v36
    %v56 = vpack.c.bf16 %v39, %v38
    %v57 = vpack.c.bf16 %v41, %v40
    %v58 = vpack.c.bf16 %v43, %v42
    %v59 = vpack.c.bf16 %v45, %v44
    %v60 = vpack.c.bf16 %v47, %v46
    %v61 = vpack.c.bf16 %v49, %v48
    %v62 = vpack.c.bf16 %v50, %v50
    %v63 = vld [vmem:[%s1] sm:$0xf]
    %v64 = vld [vmem:[%s1 + $0x4] sm:$0xf]
    %v65 = vld [vmem:[%s1 + $0x8] sm:$0xf]
    %v66 = vld [vmem:[%s1 + $0xc] sm:$0xf]
    %v67 = vld [vmem:[%s0 + $0x9] sm:$0xff]
    %v68 = vld [vmem:[%s0 + $0x11] sm:$0xff]
    %v69 = vld [vmem:[%s0 + $0x19] sm:$0xff]
    %v70 = vld [vmem:[%s0 + $0x21] sm:$0xff]
    %v71 = vld [vmem:[%s0 + $0x29] sm:$0xff]
    %v72 = vld [vmem:[%s0 + $0x31] sm:$0xff]
    %v73 = vld [vmem:[%s0 + $0x39] sm:$0xff]
    %v74 = vld [vmem:[%s0 + $0x41] sm:$0xff]
    %v75 = vld [vmem:[%s0 + $0x49] sm:$0xff]
    %v76 = vld [vmem:[%s0 + $0x51] sm:$0xff]
    %v77 = vld [vmem:[%s0 + $0x59] sm:$0xff]
    %v78 = vld [vmem:[%s0 + $0x61] sm:$0xff]
    %v79 = vld [vmem:[%s0 + $0x69] sm:$0xff]
    %v80 = vld [vmem:[%s0 + $0x71] sm:$0xff]
    %v81 = vld [vmem:[%s0 + $0x79] sm:$0xff]
    %v82 = vld [vmem:[%s0 + $0x81] sm:$0xff]
    %v83 = vld [vmem:[%s0 + $0x89] sm:$0xff]
    %v84 = vld [vmem:[%s0 + $0x91] sm:$0xff]
    %v85 = vld [vmem:[%s0 + $0x99] sm:$0xff]
    %v86 = vld [vmem:[%s0 + $0xa1] sm:$0xff]
    %v87 = vld [vmem:[%s0 + $0xa9] sm:$0xff]
    %v88 = vld [vmem:[%s0 + $0xb1] sm:$0xff]
    %v89 = vld [vmem:[%s0 + $0xb9] sm:$0x1]
    %v90 = vpack.c.bf16 %v68, %v67
    %v91 = vpack.c.bf16 %v70, %v69
    %v92 = vpack.c.bf16 %v72, %v71
    %v93 = vpack.c.bf16 %v74, %v73
    %v94 = vpack.c.bf16 %v76, %v75
    %v95 = vpack.c.bf16 %v78, %v77
    %v96 = vpack.c.bf16 %v80, %v79
    %v97 = vpack.c.bf16 %v82, %v81
    %v98 = vpack.c.bf16 %v84, %v83
    %v99 = vpack.c.bf16 %v86, %v85
    %v100 = vpack.c.bf16 %v88, %v87
    %v101 = vpack.c.bf16 %v89, %v89
    %s102 = scalar_lea.vmem %s1, 16
    %v103 = vld [vmem:[%s102] sm:$0xf]
    %v104 = vld [vmem:[%s102 + $0x4] sm:$0xf]
    %v105 = vld [vmem:[%s102 + $0x8] sm:$0xf]
    %v106 = vld [vmem:[%s102 + $0xc] sm:$0xf]
    %v111 = vunpack.c.l.b16 %v103
    %v112 = vunpack.c.l.b16 %v104
    %v113 = vunpack.c.l.b16 %v105
    %v114 = vunpack.c.l.b16 %v106
    %v115 = vpack.c.b16 %v112, %v111
    %v116 = vpack.c.b16 %v114, %v113
    %vm119 = vcmask 261120
    %v121 = vsel %vm119, %v90, 0
    %v124 = vsel %vm119, %v91, 0
    %v127 = vsel %vm119, %v92, 0
    %v130 = vsel %vm119, %v93, 0
    %v133 = vsel %vm119, %v94, 0
    %v136 = vsel %vm119, %v95, 0
    %v139 = vsel %vm119, %v96, 0
    %v142 = vsel %vm119, %v97, 0
    %v145 = vsel %vm119, %v98, 0
    %v148 = vsel %vm119, %v99, 0
    %v151 = vsel %vm119, %v100, 0
    %v154 = vsel %vm119, %v101, 0
    %156 = vmatprep.subr.bf16.mxu0 0
    %157 = vmatpush1.bf16.msra.mxu0 %v115
    %158 = vmatprep.subr.bf16.mxu0 0
    %159 = vmatpush1.bf16.msra.mxu0 %v116
    %160 = vmatprep.subr.bf16.mxu0 0
    %161 = vmatpush1.bf16.msra.mxu0 0
    %162 = vmatprep.subr.bf16.mxu0 0
    %163 = vmatpush1.bf16.msra.mxu0 0
    %164 = vmatprep.subr.bf16.mxu0 0
    %165 = vmatpush1.bf16.msra.mxu0 0
    %166 = vmatprep.subr.bf16.mxu0 0
    %167 = vmatpush1.bf16.msra.mxu0 0
    %168 = vmatprep.subr.bf16.mxu0 0
    %169 = vmatpush1.bf16.msra.mxu0 0
    %170 = vmatprep.subr.bf16.mxu0 0
    %171 = vmatpush1.bf16.msra.mxu0 0
    %172 = vmatprep.subr.bf16.mxu0 0
    %173 = vmatpush1.bf16.msra.mxu0 0
    %174 = vmatprep.subr.bf16.mxu0 0
    %175 = vmatpush1.bf16.msra.mxu0 0
    %176 = vmatprep.subr.bf16.mxu0 0
    %177 = vmatpush1.bf16.msra.mxu0 0
    %178 = vmatprep.subr.bf16.mxu0 0
    %179 = vmatpush1.bf16.msra.mxu0 0
    %180 = vmatprep.subr.bf16.mxu0 0
    %181 = vmatpush1.bf16.msra.mxu0 0
    %182 = vmatprep.subr.bf16.mxu0 0
    %183 = vmatpush1.bf16.msra.mxu0 0
    %184 = vmatprep.subr.bf16.mxu0 0
    %185 = vmatpush1.bf16.msra.mxu0 0
    %186 = vmatprep.subr.bf16.mxu0 0
    %187 = vmatpush1.bf16.msra.mxu0 0
    %188 = vmatprep.mubr.bf16.mxu0 0
    %189 = vmatmul.mubr.bf16.gmra.mrb[0].mxu0 %v121
    %v190 = vpop.f32.mrb[0].mxu0
    %v191 = vadd.f32 0.0, %v190
    %v192 = vpop.f32.mrb[0].mxu0
    %v193 = vpop.f32.mrb[0].mxu0
    %v194 = vadd.f32 0.0, %v193
    %v195 = vpop.f32.mrb[0].mxu0
    %196 = vmatprep.mubr.bf16.mxu0 0
    %197 = vmatmul.mubr.bf16.gmra.mrb[0].mxu0 %v124
    %v198 = vpop.f32.mrb[0].mxu0
    %v199 = vadd.f32 0.0, %v198
    %v200 = vpop.f32.mrb[0].mxu0
    %v201 = vpop.f32.mrb[0].mxu0
    %v202 = vadd.f32 0.0, %v201
    %v203 = vpop.f32.mrb[0].mxu0
    %204 = vmatprep.mubr.bf16.mxu0 0
    %205 = vmatmul.mubr.bf16.gmra.mrb[0].mxu0 %v127
    %v206 = vpop.f32.mrb[0].mxu0
    %v207 = vadd.f32 0.0, %v206
    %v208 = vpop.f32.mrb[0].mxu0
    %v209 = vpop.f32.mrb[0].mxu0
    %v210 = vadd.f32 0.0, %v209
    %v211 = vpop.f32.mrb[0].mxu0
    %212 = vmatprep.mubr.bf16.mxu0 0
    %213 = vmatmul.mubr.bf16.gmra.mrb[0].mxu0 %v130
    %v214 = vpop.f32.mrb[0].mxu0
    %v215 = vadd.f32 0.0, %v214
    %v216 = vpop.f32.mrb[0].mxu0
    %v217 = vpop.f32.mrb[0].mxu0
    %v218 = vadd.f32 0.0, %v217
    %v219 = vpop.f32.mrb[0].mxu0
    %220 = vmatprep.mubr.bf16.mxu0 0
    %221 = vmatmul.mubr.bf16.gmra.mrb[0].mxu0 %v133
    %v222 = vpop.f32.mrb[0].mxu0
    %v223 = vadd.f32 0.0, %v222
    %v224 = vpop.f32.mrb[0].mxu0
    %v225 = vpop.f32.mrb[0].mxu0
    %v226 = vadd.f32 0.0, %v225
    %v227 = vpop.f32.mrb[0].mxu0
    %228 = vmatprep.mubr.bf16.mxu0 0
    %229 = vmatmul.mubr.bf16.gmra.mrb[0].mxu0 %v136
    %v230 = vpop.f32.mrb[0].mxu0
    %v231 = vadd.f32 0.0, %v230
    %v232 = vpop.f32.mrb[0].mxu0
    %v233 = vpop.f32.mrb[0].mxu0
    %v234 = vadd.f32 0.0, %v233
    %v235 = vpop.f32.mrb[0].mxu0
    %236 = vmatprep.mubr.bf16.mxu0 0
    %237 = vmatmul.mubr.bf16.gmra.mrb[0].mxu0 %v139
    %v238 = vpop.f32.mrb[0].mxu0
    %v239 = vadd.f32 0.0, %v238
    %v240 = vpop.f32.mrb[0].mxu0
    %v241 = vpop.f32.mrb[0].mxu0
    %v242 = vadd.f32 0.0, %v241
    %v243 = vpop.f32.mrb[0].mxu0
    %244 = vmatprep.mubr.bf16.mxu0 0
    %245 = vmatmul.mubr.bf16.gmra.mrb[0].mxu0 %v142
    %v246 = vpop.f32.mrb[0].mxu0
    %v247 = vadd.f32 0.0, %v246
    %v248 = vpop.f32.mrb[0].mxu0
    %v249 = vpop.f32.mrb[0].mxu0
    %v250 = vadd.f32 0.0, %v249
    %v251 = vpop.f32.mrb[0].mxu0
    %252 = vmatprep.mubr.bf16.mxu0 0
    %253 = vmatmul.mubr.bf16.gmra.mrb[0].mxu0 %v145
    %v254 = vpop.f32.mrb[0].mxu0
    %v255 = vadd.f32 0.0, %v254
    %v256 = vpop.f32.mrb[0].mxu0
    %v257 = vpop.f32.mrb[0].mxu0
    %v258 = vadd.f32 0.0, %v257
    %v259 = vpop.f32.mrb[0].mxu0
    %260 = vmatprep.mubr.bf16.mxu0 0
    %261 = vmatmul.mubr.bf16.gmra.mrb[0].mxu0 %v148
    %v262 = vpop.f32.mrb[0].mxu0
    %v263 = vadd.f32 0.0, %v262
    %v264 = vpop.f32.mrb[0].mxu0
    %v265 = vpop.f32.mrb[0].mxu0
    %v266 = vadd.f32 0.0, %v265
    %v267 = vpop.f32.mrb[0].mxu0
    %268 = vmatprep.mubr.bf16.mxu0 0
    %269 = vmatmul.mubr.bf16.gmra.mrb[0].mxu0 %v151
    %v270 = vpop.f32.mrb[0].mxu0
    %v271 = vadd.f32 0.0, %v270
    %v272 = vpop.f32.mrb[0].mxu0
    %v273 = vpop.f32.mrb[0].mxu0
    %v274 = vadd.f32 0.0, %v273
    %v275 = vpop.f32.mrb[0].mxu0
    %276 = vmatprep.mubr.bf16.mxu0 0
    %277 = vmatmul.mubr.bf16.gmra.mrb[0].mxu0 %v154
    %v278 = vpop.f32.mrb[0].mxu0
    %v279 = vadd.f32 0.0, %v278
    %v280 = vpop.f32.mrb[0].mxu0
    %v281 = vpop.f32.mrb[0].mxu0
    %v282 = vpop.f32.mrb[0].mxu0
    %283 = vdwg.mxu0
    %v288 = vunpack.c.l.b16 %v63
    %v289 = vunpack.c.l.b16 %v64
    %v290 = vunpack.c.l.b16 %v65
    %v291 = vunpack.c.l.b16 %v66
    %v292 = vpack.c.b16 %v289, %v288
    %v293 = vpack.c.b16 %v291, %v290
    %v297 = vsel %vm119, %v51, 0
    %v300 = vsel %vm119, %v52, 0
    %v303 = vsel %vm119, %v53, 0
    %v306 = vsel %vm119, %v54, 0
    %v309 = vsel %vm119, %v55, 0
    %v312 = vsel %vm119, %v56, 0
    %v315 = vsel %vm119, %v57, 0
    %v318 = vsel %vm119, %v58, 0
    %v321 = vsel %vm119, %v59, 0
    %v324 = vsel %vm119, %v60, 0
    %v327 = vsel %vm119, %v61, 0
    %v330 = vsel %vm119, %v62, 0
    %332 = vmatprep.subr.bf16.mxu0 0
    %333 = vmatpush1.bf16.msra.mxu0 %v292
    %334 = vmatprep.subr.bf16.mxu0 0
    %335 = vmatpush1.bf16.msra.mxu0 %v293
    %336 = vmatprep.subr.bf16.mxu0 0
    %337 = vmatpush1.bf16.msra.mxu0 0
    %338 = vmatprep.subr.bf16.mxu0 0
    %339 = vmatpush1.bf16.msra.mxu0 0
    %340 = vmatprep.subr.bf16.mxu0 0
    %341 = vmatpush1.bf16.msra.mxu0 0
    %342 = vmatprep.subr.bf16.mxu0 0
    %343 = vmatpush1.bf16.msra.mxu0 0
    %344 = vmatprep.subr.bf16.mxu0 0
    %345 = vmatpush1.bf16.msra.mxu0 0
    %346 = vmatprep.subr.bf16.mxu0 0
    %347 = vmatpush1.bf16.msra.mxu0 0
    %348 = vmatprep.subr.bf16.mxu0 0
    %349 = vmatpush1.bf16.msra.mxu0 0
    %350 = vmatprep.subr.bf16.mxu0 0
    %351 = vmatpush1.bf16.msra.mxu0 0
    %352 = vmatprep.subr.bf16.mxu0 0
    %353 = vmatpush1.bf16.msra.mxu0 0
    %354 = vmatprep.subr.bf16.mxu0 0
    %355 = vmatpush1.bf16.msra.mxu0 0
    %356 = vmatprep.subr.bf16.mxu0 0
    %357 = vmatpush1.bf16.msra.mxu0 0
    %358 = vmatprep.subr.bf16.mxu0 0
    %359 = vmatpush1.bf16.msra.mxu0 0
    %360 = vmatprep.subr.bf16.mxu0 0
    %361 = vmatpush1.bf16.msra.mxu0 0
    %362 = vmatprep.subr.bf16.mxu0 0
    %363 = vmatpush1.bf16.msra.mxu0 0
    %364 = vmatprep.mubr.bf16.mxu0 0
    %365 = vmatmul.mubr.bf16.gmra.mrb[0].mxu0 %v297
    %v366 = vpop.f32.mrb[0].mxu0
    %v367 = vadd.f32 %v191, %v366
    %v368 = vpop.f32.mrb[0].mxu0
    %v369 = vpop.f32.mrb[0].mxu0
    %v370 = vadd.f32 %v194, %v369
    %v371 = vpop.f32.mrb[0].mxu0
    %372 = vmatprep.mubr.bf16.mxu0 0
    %373 = vmatmul.mubr.bf16.gmra.mrb[0].mxu0 %v300
    %v374 = vpop.f32.mrb[0].mxu0
    %v375 = vadd.f32 %v199, %v374
    %v376 = vpop.f32.mrb[0].mxu0
    %v377 = vpop.f32.mrb[0].mxu0
    %v378 = vadd.f32 %v202, %v377
    %v379 = vpop.f32.mrb[0].mxu0
    %380 = vmatprep.mubr.bf16.mxu0 0
    %381 = vmatmul.mubr.bf16.gmra.mrb[0].mxu0 %v303
    %v382 = vpop.f32.mrb[0].mxu0
    %v383 = vadd.f32 %v207, %v382
    %v384 = vpop.f32.mrb[0].mxu0
    %v385 = vpop.f32.mrb[0].mxu0
    %v386 = vadd.f32 %v210, %v385
    %v387 = vpop.f32.mrb[0].mxu0
    %388 = vmatprep.mubr.bf16.mxu0 0
    %389 = vmatmul.mubr.bf16.gmra.mrb[0].mxu0 %v306
    %v390 = vpop.f32.mrb[0].mxu0
    %v391 = vadd.f32 %v215, %v390
    %v392 = vpop.f32.mrb[0].mxu0
    %v393 = vpop.f32.mrb[0].mxu0
    %v394 = vadd.f32 %v218, %v393
    %v395 = vpop.f32.mrb[0].mxu0
    %396 = vmatprep.mubr.bf16.mxu0 0
    %397 = vmatmul.mubr.bf16.gmra.mrb[0].mxu0 %v309
    %v398 = vpop.f32.mrb[0].mxu0
    %v399 = vadd.f32 %v223, %v398
    %v400 = vpop.f32.mrb[0].mxu0
    %v401 = vpop.f32.mrb[0].mxu0
    %v402 = vadd.f32 %v226, %v401
    %v403 = vpop.f32.mrb[0].mxu0
    %404 = vmatprep.mubr.bf16.mxu0 0
    %405 = vmatmul.mubr.bf16.gmra.mrb[0].mxu0 %v312
    %v406 = vpop.f32.mrb[0].mxu0
    %v407 = vadd.f32 %v231, %v406
    %v408 = vpop.f32.mrb[0].mxu0
    %v409 = vpop.f32.mrb[0].mxu0
    %v410 = vadd.f32 %v234, %v409
    %v411 = vpop.f32.mrb[0].mxu0
    %412 = vmatprep.mubr.bf16.mxu0 0
    %413 = vmatmul.mubr.bf16.gmra.mrb[0].mxu0 %v315
    %v414 = vpop.f32.mrb[0].mxu0
    %v415 = vadd.f32 %v239, %v414
    %v416 = vpop.f32.mrb[0].mxu0
    %v417 = vpop.f32.mrb[0].mxu0
    %v418 = vadd.f32 %v242, %v417
    %v419 = vpop.f32.mrb[0].mxu0
    %420 = vmatprep.mubr.bf16.mxu0 0
    %421 = vmatmul.mubr.bf16.gmra.mrb[0].mxu0 %v318
    %v422 = vpop.f32.mrb[0].mxu0
    %v423 = vadd.f32 %v247, %v422
    %v424 = vpop.f32.mrb[0].mxu0
    %v425 = vpop.f32.mrb[0].mxu0
    %v426 = vadd.f32 %v250, %v425
    %v427 = vpop.f32.mrb[0].mxu0
    %428 = vmatprep.mubr.bf16.mxu0 0
    %429 = vmatmul.mubr.bf16.gmra.mrb[0].mxu0 %v321
    %v430 = vpop.f32.mrb[0].mxu0
    %v431 = vadd.f32 %v255, %v430
    %v432 = vpop.f32.mrb[0].mxu0
    %v433 = vpop.f32.mrb[0].mxu0
    %v434 = vadd.f32 %v258, %v433
    %v435 = vpop.f32.mrb[0].mxu0
    %436 = vmatprep.mubr.bf16.mxu0 0
    %437 = vmatmul.mubr.bf16.gmra.mrb[0].mxu0 %v324
    %v438 = vpop.f32.mrb[0].mxu0
    %v439 = vadd.f32 %v263, %v438
    %v440 = vpop.f32.mrb[0].mxu0
    %v441 = vpop.f32.mrb[0].mxu0
    %v442 = vadd.f32 %v266, %v441
    %v443 = vpop.f32.mrb[0].mxu0
    %444 = vmatprep.mubr.bf16.mxu0 0
    %445 = vmatmul.mubr.bf16.gmra.mrb[0].mxu0 %v327
    %v446 = vpop.f32.mrb[0].mxu0
    %v447 = vadd.f32 %v271, %v446
    %v448 = vpop.f32.mrb[0].mxu0
    %v449 = vpop.f32.mrb[0].mxu0
    %v450 = vadd.f32 %v274, %v449
    %v451 = vpop.f32.mrb[0].mxu0
    %452 = vmatprep.mubr.bf16.mxu0 0
    %453 = vmatmul.mubr.bf16.gmra.mrb[0].mxu0 %v330
    %v454 = vpop.f32.mrb[0].mxu0
    %v455 = vadd.f32 %v279, %v454
    %v456 = vpop.f32.mrb[0].mxu0
    %v457 = vpop.f32.mrb[0].mxu0
    %v458 = vpop.f32.mrb[0].mxu0
    %459 = vdwg.mxu0
    %v460 = vld [vmem:[%s0 + $0xa] sm:$0xff]
    %v461 = vld [vmem:[%s0 + $0x12] sm:$0xff]
    %v462 = vld [vmem:[%s0 + $0x1a] sm:$0xff]
    %v463 = vld [vmem:[%s0 + $0x22] sm:$0xff]
    %v464 = vld [vmem:[%s0 + $0x2a] sm:$0xff]
    %v465 = vld [vmem:[%s0 + $0x32] sm:$0xff]
    %v466 = vld [vmem:[%s0 + $0x3a] sm:$0xff]
    %v467 = vld [vmem:[%s0 + $0x42] sm:$0xff]
    %v468 = vld [vmem:[%s0 + $0x4a] sm:$0xff]
    %v469 = vld [vmem:[%s0 + $0x52] sm:$0xff]
    %v470 = vld [vmem:[%s0 + $0x5a] sm:$0xff]
    %v471 = vld [vmem:[%s0 + $0x62] sm:$0xff]
    %v472 = vld [vmem:[%s0 + $0x6a] sm:$0xff]
    %v473 = vld [vmem:[%s0 + $0x72] sm:$0xff]
    %v474 = vld [vmem:[%s0 + $0x7a] sm:$0xff]
    %v475 = vld [vmem:[%s0 + $0x82] sm:$0xff]
    %v476 = vld [vmem:[%s0 + $0x8a] sm:$0xff]
    %v477 = vld [vmem:[%s0 + $0x92] sm:$0xff]
    %v478 = vld [vmem:[%s0 + $0x9a] sm:$0xff]
    %v479 = vld [vmem:[%s0 + $0xa2] sm:$0xff]
    %v480 = vld [vmem:[%s0 + $0xaa] sm:$0xff]
    %v481 = vld [vmem:[%s0 + $0xb2] sm:$0xff]
    %v482 = vld [vmem:[%s0 + $0xba] sm:$0x1]
    %v483 = vpack.c.bf16 %v461, %v460
    %v484 = vpack.c.bf16 %v463, %v462
    %v485 = vpack.c.bf16 %v465, %v464
    %v486 = vpack.c.bf16 %v467, %v466
    %v487 = vpack.c.bf16 %v469, %v468
    %v488 = vpack.c.bf16 %v471, %v470
    %v489 = vpack.c.bf16 %v473, %v472
    %v490 = vpack.c.bf16 %v475, %v474
    %v491 = vpack.c.bf16 %v477, %v476
    %v492 = vpack.c.bf16 %v479, %v478
    %v493 = vpack.c.bf16 %v481, %v480
    %v494 = vpack.c.bf16 %v482, %v482
    %s495 = scalar_lea.vmem %s1, 32
    %v496 = vld [vmem:[%s495] sm:$0xf]
    %v497 = vld [vmem:[%s495 + $0x4] sm:$0xf]
    %v498 = vld [vmem:[%s495 + $0x8] sm:$0xf]
    %v499 = vld [vmem:[%s495 + $0xc] sm:$0xf]
    %v504 = vunpack.c.l.b16 %v496
    %v505 = vunpack.c.l.b16 %v497
    %v506 = vunpack.c.l.b16 %v498
    %v507 = vunpack.c.l.b16 %v499
    %v508 = vpack.c.b16 %v505, %v504
    %v509 = vpack.c.b16 %v507, %v506
    %v513 = vsel %vm119, %v483, 0
    %v516 = vsel %vm119, %v484, 0
    %v519 = vsel %vm119, %v485, 0
    %v522 = vsel %vm119, %v486, 0
    %v525 = vsel %vm119, %v487, 0
    %v528 = vsel %vm119, %v488, 0
    %v531 = vsel %vm119, %v489, 0
    %v534 = vsel %vm119, %v490, 0
    %v537 = vsel %vm119, %v491, 0
    %v540 = vsel %vm119, %v492, 0
    %v543 = vsel %vm119, %v493, 0
    %v546 = vsel %vm119, %v494, 0
    %548 = vmatprep.subr.bf16.mxu0 0
    %549 = vmatpush1.bf16.msra.mxu0 %v508
    %550 = vmatprep.subr.bf16.mxu0 0
    %551 = vmatpush1.bf16.msra.mxu0 %v509
    %552 = vmatprep.subr.bf16.mxu0 0
    %553 = vmatpush1.bf16.msra.mxu0 0
    %554 = vmatprep.subr.bf16.mxu0 0
    %555 = vmatpush1.bf16.msra.mxu0 0
    %556 = vmatprep.subr.bf16.mxu0 0
    %557 = vmatpush1.bf16.msra.mxu0 0
    %558 = vmatprep.subr.bf16.mxu0 0
    %559 = vmatpush1.bf16.msra.mxu0 0
    %560 = vmatprep.subr.bf16.mxu0 0
    %561 = vmatpush1.bf16.msra.mxu0 0
    %562 = vmatprep.subr.bf16.mxu0 0
    %563 = vmatpush1.bf16.msra.mxu0 0
    %564 = vmatprep.subr.bf16.mxu0 0
    %565 = vmatpush1.bf16.msra.mxu0 0
    %566 = vmatprep.subr.bf16.mxu0 0
    %567 = vmatpush1.bf16.msra.mxu0 0
    %568 = vmatprep.subr.bf16.mxu0 0
    %569 = vmatpush1.bf16.msra.mxu0 0
    %570 = vmatprep.subr.bf16.mxu0 0
    %571 = vmatpush1.bf16.msra.mxu0 0
    %572 = vmatprep.subr.bf16.mxu0 0
    %573 = vmatpush1.bf16.msra.mxu0 0
    %574 = vmatprep.subr.bf16.mxu0 0
    %575 = vmatpush1.bf16.msra.mxu0 0
    %576 = vmatprep.subr.bf16.mxu0 0
    %577 = vmatpush1.bf16.msra.mxu0 0
    %578 = vmatprep.subr.bf16.mxu0 0
    %579 = vmatpush1.bf16.msra.mxu0 0
    %580 = vmatprep.mubr.bf16.mxu0 0
    %581 = vmatmul.mubr.bf16.gmra.mrb[0].mxu0 %v513
    %v582 = vpop.f32.mrb[0].mxu0
    %v583 = vadd.f32 0.0, %v582
    %v584 = vpop.f32.mrb[0].mxu0
    %v585 = vpop.f32.mrb[0].mxu0
    %v586 = vadd.f32 0.0, %v585
    %v587 = vpop.f32.mrb[0].mxu0
    %588 = vmatprep.mubr.bf16.mxu0 0
    %589 = vmatmul.mubr.bf16.gmra.mrb[0].mxu0 %v516
    %v590 = vpop.f32.mrb[0].mxu0
    %v591 = vadd.f32 0.0, %v590
    %v592 = vpop.f32.mrb[0].mxu0
    %v593 = vpop.f32.mrb[0].mxu0
    %v594 = vadd.f32 0.0, %v593
    %v595 = vpop.f32.mrb[0].mxu0
    %596 = vmatprep.mubr.bf16.mxu0 0
    %597 = vmatmul.mubr.bf16.gmra.mrb[0].mxu0 %v519
    %v598 = vpop.f32.mrb[0].mxu0
    %v599 = vadd.f32 0.0, %v598
    %v600 = vpop.f32.mrb[0].mxu0
    %v601 = vpop.f32.mrb[0].mxu0
    %v602 = vadd.f32 0.0, %v601
    %v603 = vpop.f32.mrb[0].mxu0
    %604 = vmatprep.mubr.bf16.mxu0 0
    %605 = vmatmul.mubr.bf16.gmra.mrb[0].mxu0 %v522
    %v606 = vpop.f32.mrb[0].mxu0
    %v607 = vadd.f32 0.0, %v606
    %v608 = vpop.f32.mrb[0].mxu0
    %v609 = vpop.f32.mrb[0].mxu0
    %v610 = vadd.f32 0.0, %v609
    %v611 = vpop.f32.mrb[0].mxu0
    %612 = vmatprep.mubr.bf16.mxu0 0
    %613 = vmatmul.mubr.bf16.gmra.mrb[0].mxu0 %v525
    %v614 = vpop.f32.mrb[0].mxu0
    %v615 = vadd.f32 0.0, %v614
    %v616 = vpop.f32.mrb[0].mxu0
    %v617 = vpop.f32.mrb[0].mxu0
    %v618 = vadd.f32 0.0, %v617
    %v619 = vpop.f32.mrb[0].mxu0
    %620 = vmatprep.mubr.bf16.mxu0 0
    %621 = vmatmul.mubr.bf16.gmra.mrb[0].mxu0 %v528
    %v622 = vpop.f32.mrb[0].mxu0
    %v623 = vadd.f32 0.0, %v622
    %v624 = vpop.f32.mrb[0].mxu0
    %v625 = vpop.f32.mrb[0].mxu0
    %v626 = vadd.f32 0.0, %v625
    %v627 = vpop.f32.mrb[0].mxu0
    %628 = vmatprep.mubr.bf16.mxu0 0
    %629 = vmatmul.mubr.bf16.gmra.mrb[0].mxu0 %v531
    %v630 = vpop.f32.mrb[0].mxu0
    %v631 = vadd.f32 0.0, %v630
    %v632 = vpop.f32.mrb[0].mxu0
    %v633 = vpop.f32.mrb[0].mxu0
    %v634 = vadd.f32 0.0, %v633
    %v635 = vpop.f32.mrb[0].mxu0
    %636 = vmatprep.mubr.bf16.mxu0 0
    %637 = vmatmul.mubr.bf16.gmra.mrb[0].mxu0 %v534
    %v638 = vpop.f32.mrb[0].mxu0
    %v639 = vadd.f32 0.0, %v638
    %v640 = vpop.f32.mrb[0].mxu0
    %v641 = vpop.f32.mrb[0].mxu0
    %v642 = vadd.f32 0.0, %v641
    %v643 = vpop.f32.mrb[0].mxu0
    %644 = vmatprep.mubr.bf16.mxu0 0
    %645 = vmatmul.mubr.bf16.gmra.mrb[0].mxu0 %v537
    %v646 = vpop.f32.mrb[0].mxu0
    %v647 = vadd.f32 0.0, %v646
    %v648 = vpop.f32.mrb[0].mxu0
    %v649 = vpop.f32.mrb[0].mxu0
    %v650 = vadd.f32 0.0, %v649
    %v651 = vpop.f32.mrb[0].mxu0
    %652 = vmatprep.mubr.bf16.mxu0 0
    %653 = vmatmul.mubr.bf16.gmra.mrb[0].mxu0 %v540
    %v654 = vpop.f32.mrb[0].mxu0
    %v655 = vadd.f32 0.0, %v654
    %v656 = vpop.f32.mrb[0].mxu0
    %v657 = vpop.f32.mrb[0].mxu0
    %v658 = vadd.f32 0.0, %v657
    %v659 = vpop.f32.mrb[0].mxu0
    %660 = vmatprep.mubr.bf16.mxu0 0
    %661 = vmatmul.mubr.bf16.gmra.mrb[0].mxu0 %v543
    %v662 = vpop.f32.mrb[0].mxu0
    %v663 = vadd.f32 0.0, %v662
    %v664 = vpop.f32.mrb[0].mxu0
    %v665 = vpop.f32.mrb[0].mxu0
    %v666 = vadd.f32 0.0, %v665
    %v667 = vpop.f32.mrb[0].mxu0
    %668 = vmatprep.mubr.bf16.mxu0 0
    %669 = vmatmul.mubr.bf16.gmra.mrb[0].mxu0 %v546
    %v670 = vpop.f32.mrb[0].mxu0
    %v671 = vadd.f32 0.0, %v670
    %v672 = vpop.f32.mrb[0].mxu0
    %v673 = vpop.f32.mrb[0].mxu0
    %v674 = vpop.f32.mrb[0].mxu0
    %675 = vdwg.mxu0
    %v676 = vadd.f32 %v367, %v583
    %v677 = vadd.f32 %v370, %v586
    %v678 = vadd.f32 %v375, %v591
    %v679 = vadd.f32 %v378, %v594
    %v680 = vadd.f32 %v383, %v599
    %v681 = vadd.f32 %v386, %v602
    %v682 = vadd.f32 %v391, %v607
    %v683 = vadd.f32 %v394, %v610
    %v684 = vadd.f32 %v399, %v615
    %v685 = vadd.f32 %v402, %v618
    %v686 = vadd.f32 %v407, %v623
    %v687 = vadd.f32 %v410, %v626
    %v688 = vadd.f32 %v415, %v631
    %v689 = vadd.f32 %v418, %v634
    %v690 = vadd.f32 %v423, %v639
    %v691 = vadd.f32 %v426, %v642
    %v692 = vadd.f32 %v431, %v647
    %v693 = vadd.f32 %v434, %v650
    %v694 = vadd.f32 %v439, %v655
    %v695 = vadd.f32 %v442, %v658
    %v696 = vadd.f32 %v447, %v663
    %v697 = vadd.f32 %v450, %v666
    %v698 = vadd.f32 %v455, %v671
    %v699 = vld [vmem:[%s0 + $0x17] sm:$0xff]
    %v700 = vld [vmem:[%s0 + $0x1f] sm:$0xff]
    %v701 = vld [vmem:[%s0 + $0x27] sm:$0xff]
    %v702 = vld [vmem:[%s0 + $0x2f] sm:$0xff]
    %v703 = vld [vmem:[%s0 + $0x37] sm:$0xff]
    %v704 = vld [vmem:[%s0 + $0x3f] sm:$0xff]
    %v705 = vld [vmem:[%s0 + $0x47] sm:$0xff]
    %v706 = vld [vmem:[%s0 + $0x4f] sm:$0xff]
    %v707 = vld [vmem:[%s0 + $0x57] sm:$0xff]
    %v708 = vld [vmem:[%s0 + $0x5f] sm:$0xff]
    %v709 = vld [vmem:[%s0 + $0x67] sm:$0xff]
    %v710 = vld [vmem:[%s0 + $0x6f] sm:$0xff]
    %v711 = vld [vmem:[%s0 + $0x77] sm:$0xff]
    %v712 = vld [vmem:[%s0 + $0x7f] sm:$0xff]
    %v713 = vld [vmem:[%s0 + $0x87] sm:$0xff]
    %v714 = vld [vmem:[%s0 + $0x8f] sm:$0xff]
    %v715 = vld [vmem:[%s0 + $0x97] sm:$0xff]
    %v716 = vld [vmem:[%s0 + $0x9f] sm:$0xff]
    %v717 = vld [vmem:[%s0 + $0xa7] sm:$0xff]
    %v718 = vld [vmem:[%s0 + $0xaf] sm:$0xff]
    %v719 = vld [vmem:[%s0 + $0xb7] sm:$0xff]
    %v720 = vld [vmem:[%s0 + $0xbf] sm:$0xff]
    %v721 = vld [vmem:[%s0 + $0xc7] sm:$0x1]
    %v722 = vpack.c.bf16 %v700, %v699
    %v723 = vpack.c.bf16 %v702, %v701
    %v724 = vpack.c.bf16 %v704, %v703
    %v725 = vpack.c.bf16 %v706, %v705
    %v726 = vpack.c.bf16 %v708, %v707
    %v727 = vpack.c.bf16 %v710, %v709
    %v728 = vpack.c.bf16 %v712, %v711
    %v729 = vpack.c.bf16 %v714, %v713
    %v730 = vpack.c.bf16 %v716, %v715
    %v731 = vpack.c.bf16 %v718, %v717
    %v732 = vpack.c.bf16 %v720, %v719
    %v733 = vpack.c.bf16 %v721, %v721
    %s734 = scalar_lea.vmem %s1, 48
    %v735 = vld [vmem:[%s734] sm:$0xf]
    %v736 = vld [vmem:[%s734 + $0x4] sm:$0xf]
    %v737 = vld [vmem:[%s734 + $0x8] sm:$0xf]
    %v738 = vld [vmem:[%s734 + $0xc] sm:$0xf]
    %v743 = vunpack.c.l.b16 %v735
    %v744 = vunpack.c.l.b16 %v736
    %v745 = vunpack.c.l.b16 %v737
    %v746 = vunpack.c.l.b16 %v738
    %v747 = vpack.c.b16 %v744, %v743
    %v748 = vpack.c.b16 %v746, %v745
    %v752 = vsel %vm119, %v722, 0
    %v755 = vsel %vm119, %v723, 0
    %v758 = vsel %vm119, %v724, 0
    %v761 = vsel %vm119, %v725, 0
    %v764 = vsel %vm119, %v726, 0
    %v767 = vsel %vm119, %v727, 0
    %v770 = vsel %vm119, %v728, 0
    %v773 = vsel %vm119, %v729, 0
    %v776 = vsel %vm119, %v730, 0
    %v779 = vsel %vm119, %v731, 0
    %v782 = vsel %vm119, %v732, 0
    %v785 = vsel %vm119, %v733, 0
    %787 = vmatprep.subr.bf16.mxu0 0
    %788 = vmatpush1.bf16.msra.mxu0 %v747
    %789 = vmatprep.subr.bf16.mxu0 0
    %790 = vmatpush1.bf16.msra.mxu0 %v748
    %791 = vmatprep.subr.bf16.mxu0 0
    %792 = vmatpush1.bf16.msra.mxu0 0
    %793 = vmatprep.subr.bf16.mxu0 0
    %794 = vmatpush1.bf16.msra.mxu0 0
    %795 = vmatprep.subr.bf16.mxu0 0
    %796 = vmatpush1.bf16.msra.mxu0 0
    %797 = vmatprep.subr.bf16.mxu0 0
    %798 = vmatpush1.bf16.msra.mxu0 0
    %799 = vmatprep.subr.bf16.mxu0 0
    %800 = vmatpush1.bf16.msra.mxu0 0
    %801 = vmatprep.subr.bf16.mxu0 0
    %802 = vmatpush1.bf16.msra.mxu0 0
    %803 = vmatprep.subr.bf16.mxu0 0
    %804 = vmatpush1.bf16.msra.mxu0 0
    %805 = vmatprep.subr.bf16.mxu0 0
    %806 = vmatpush1.bf16.msra.mxu0 0
    %807 = vmatprep.subr.bf16.mxu0 0
    %808 = vmatpush1.bf16.msra.mxu0 0
    %809 = vmatprep.subr.bf16.mxu0 0
    %810 = vmatpush1.bf16.msra.mxu0 0
    %811 = vmatprep.subr.bf16.mxu0 0
    %812 = vmatpush1.bf16.msra.mxu0 0
    %813 = vmatprep.subr.bf16.mxu0 0
    %814 = vmatpush1.bf16.msra.mxu0 0
    %815 = vmatprep.subr.bf16.mxu0 0
    %816 = vmatpush1.bf16.msra.mxu0 0
    %817 = vmatprep.subr.bf16.mxu0 0
    %818 = vmatpush1.bf16.msra.mxu0 0
    %819 = vmatprep.mubr.bf16.mxu0 0
    %820 = vmatmul.mubr.bf16.gmra.mrb[0].mxu0 %v752
    %v821 = vpop.f32.mrb[0].mxu0
    %v822 = vadd.f32 0.0, %v821
    %v823 = vpop.f32.mrb[0].mxu0
    %v824 = vpop.f32.mrb[0].mxu0
    %v825 = vadd.f32 0.0, %v824
    %v826 = vpop.f32.mrb[0].mxu0
    %827 = vmatprep.mubr.bf16.mxu0 0
    %828 = vmatmul.mubr.bf16.gmra.mrb[0].mxu0 %v755
    %v829 = vpop.f32.mrb[0].mxu0
    %v830 = vadd.f32 0.0, %v829
    %v831 = vpop.f32.mrb[0].mxu0
    %v832 = vpop.f32.mrb[0].mxu0
    %v833 = vadd.f32 0.0, %v832
    %v834 = vpop.f32.mrb[0].mxu0
    %835 = vmatprep.mubr.bf16.mxu0 0
    %836 = vmatmul.mubr.bf16.gmra.mrb[0].mxu0 %v758
    %v837 = vpop.f32.mrb[0].mxu0
    %v838 = vadd.f32 0.0, %v837
    %v839 = vpop.f32.mrb[0].mxu0
    %v840 = vpop.f32.mrb[0].mxu0
    %v841 = vadd.f32 0.0, %v840
    %v842 = vpop.f32.mrb[0].mxu0
    %843 = vmatprep.mubr.bf16.mxu0 0
    %844 = vmatmul.mubr.bf16.gmra.mrb[0].mxu0 %v761
    %v845 = vpop.f32.mrb[0].mxu0
    %v846 = vadd.f32 0.0, %v845
    %v847 = vpop.f32.mrb[0].mxu0
    %v848 = vpop.f32.mrb[0].mxu0
    %v849 = vadd.f32 0.0, %v848
    %v850 = vpop.f32.mrb[0].mxu0
    %851 = vmatprep.mubr.bf16.mxu0 0
    %852 = vmatmul.mubr.bf16.gmra.mrb[0].mxu0 %v764
    %v853 = vpop.f32.mrb[0].mxu0
    %v854 = vadd.f32 0.0, %v853
    %v855 = vpop.f32.mrb[0].mxu0
    %v856 = vpop.f32.mrb[0].mxu0
    %v857 = vadd.f32 0.0, %v856
    %v858 = vpop.f32.mrb[0].mxu0
    %859 = vmatprep.mubr.bf16.mxu0 0
    %860 = vmatmul.mubr.bf16.gmra.mrb[0].mxu0 %v767
    %v861 = vpop.f32.mrb[0].mxu0
    %v862 = vadd.f32 0.0, %v861
    %v863 = vpop.f32.mrb[0].mxu0
    %v864 = vpop.f32.mrb[0].mxu0
    %v865 = vadd.f32 0.0, %v864
    %v866 = vpop.f32.mrb[0].mxu0
    %867 = vmatprep.mubr.bf16.mxu0 0
    %868 = vmatmul.mubr.bf16.gmra.mrb[0].mxu0 %v770
    %v869 = vpop.f32.mrb[0].mxu0
    %v870 = vadd.f32 0.0, %v869
    %v871 = vpop.f32.mrb[0].mxu0
    %v872 = vpop.f32.mrb[0].mxu0
    %v873 = vadd.f32 0.0, %v872
    %v874 = vpop.f32.mrb[0].mxu0
    %875 = vmatprep.mubr.bf16.mxu0 0
    %876 = vmatmul.mubr.bf16.gmra.mrb[0].mxu0 %v773
    %v877 = vpop.f32.mrb[0].mxu0
    %v878 = vadd.f32 0.0, %v877
    %v879 = vpop.f32.mrb[0].mxu0
    %v880 = vpop.f32.mrb[0].mxu0
    %v881 = vadd.f32 0.0, %v880
    %v882 = vpop.f32.mrb[0].mxu0
    %883 = vmatprep.mubr.bf16.mxu0 0
    %884 = vmatmul.mubr.bf16.gmra.mrb[0].mxu0 %v776
    %v885 = vpop.f32.mrb[0].mxu0
    %v886 = vadd.f32 0.0, %v885
    %v887 = vpop.f32.mrb[0].mxu0
    %v888 = vpop.f32.mrb[0].mxu0
    %v889 = vadd.f32 0.0, %v888
    %v890 = vpop.f32.mrb[0].mxu0
    %891 = vmatprep.mubr.bf16.mxu0 0
    %892 = vmatmul.mubr.bf16.gmra.mrb[0].mxu0 %v779
    %v893 = vpop.f32.mrb[0].mxu0
    %v894 = vadd.f32 0.0, %v893
    %v895 = vpop.f32.mrb[0].mxu0
    %v896 = vpop.f32.mrb[0].mxu0
    %v897 = vadd.f32 0.0, %v896
    %v898 = vpop.f32.mrb[0].mxu0
    %899 = vmatprep.mubr.bf16.mxu0 0
    %900 = vmatmul.mubr.bf16.gmra.mrb[0].mxu0 %v782
    %v901 = vpop.f32.mrb[0].mxu0
    %v902 = vadd.f32 0.0, %v901
    %v903 = vpop.f32.mrb[0].mxu0
    %v904 = vpop.f32.mrb[0].mxu0
    %v905 = vadd.f32 0.0, %v904
    %v906 = vpop.f32.mrb[0].mxu0
    %907 = vmatprep.mubr.bf16.mxu0 0
    %908 = vmatmul.mubr.bf16.gmra.mrb[0].mxu0 %v785
    %v909 = vpop.f32.mrb[0].mxu0
    %v910 = vadd.f32 0.0, %v909
    %v911 = vpop.f32.mrb[0].mxu0
    %v912 = vpop.f32.mrb[0].mxu0
    %v913 = vpop.f32.mrb[0].mxu0
    %914 = vdwg.mxu0
    %v915 = vadd.f32 %v676, %v822
    %v916 = vadd.f32 %v677, %v825
    %v917 = vadd.f32 %v678, %v830
    %v918 = vadd.f32 %v679, %v833
    %v919 = vadd.f32 %v680, %v838
    %v920 = vadd.f32 %v681, %v841
    %v921 = vadd.f32 %v682, %v846
    %v922 = vadd.f32 %v683, %v849
    %v923 = vadd.f32 %v684, %v854
    %v924 = vadd.f32 %v685, %v857
    %v925 = vadd.f32 %v686, %v862
    %v926 = vadd.f32 %v687, %v865
    %v927 = vadd.f32 %v688, %v870
    %v928 = vadd.f32 %v689, %v873
    %v929 = vadd.f32 %v690, %v878
    %v930 = vadd.f32 %v691, %v881
    %v931 = vadd.f32 %v692, %v886
    %v932 = vadd.f32 %v693, %v889
    %v933 = vadd.f32 %v694, %v894
    %v934 = vadd.f32 %v695, %v897
    %v935 = vadd.f32 %v696, %v902
    %v936 = vadd.f32 %v697, %v905
    %v937 = vadd.f32 %v698, %v910
    %v938 = vld [vmem:[%s0 + $0x18] sm:$0xff]
    %v939 = vld [vmem:[%s0 + $0x20] sm:$0xff]
    %v940 = vld [vmem:[%s0 + $0x28] sm:$0xff]
    %v941 = vld [vmem:[%s0 + $0x30] sm:$0xff]
    %v942 = vld [vmem:[%s0 + $0x38] sm:$0xff]
    %v943 = vld [vmem:[%s0 + $0x40] sm:$0xff]
    %v944 = vld [vmem:[%s0 + $0x48] sm:$0xff]
    %v945 = vld [vmem:[%s0 + $0x50] sm:$0xff]
    %v946 = vld [vmem:[%s0 + $0x58] sm:$0xff]
    %v947 = vld [vmem:[%s0 + $0x60] sm:$0xff]
    %v948 = vld [vmem:[%s0 + $0x68] sm:$0xff]
    %v949 = vld [vmem:[%s0 + $0x70] sm:$0xff]
    %v950 = vld [vmem:[%s0 + $0x78] sm:$0xff]
    %v951 = vld [vmem:[%s0 + $0x80] sm:$0xff]
    %v952 = vld [vmem:[%s0 + $0x88] sm:$0xff]
    %v953 = vld [vmem:[%s0 + $0x90] sm:$0xff]
    %v954 = vld [vmem:[%s0 + $0x98] sm:$0xff]
    %v955 = vld [vmem:[%s0 + $0xa0] sm:$0xff]
    %v956 = vld [vmem:[%s0 + $0xa8] sm:$0xff]
    %v957 = vld [vmem:[%s0 + $0xb0] sm:$0xff]
    %v958 = vld [vmem:[%s0 + $0xb8] sm:$0xff]
    %v959 = vld [vmem:[%s0 + $0xc0] sm:$0xff]
    %v960 = vld [vmem:[%s0 + $0xc8] sm:$0x1]
    %v961 = vpack.c.bf16 %v939, %v938
    %v962 = vpack.c.bf16 %v941, %v940
    %v963 = vpack.c.bf16 %v943, %v942
    %v964 = vpack.c.bf16 %v945, %v944
    %v965 = vpack.c.bf16 %v947, %v946
    %v966 = vpack.c.bf16 %v949, %v948
    %v967 = vpack.c.bf16 %v951, %v950
    %v968 = vpack.c.bf16 %v953, %v952
    %v969 = vpack.c.bf16 %v955, %v954
    %v970 = vpack.c.bf16 %v957, %v956
    %v971 = vpack.c.bf16 %v959, %v958
    %v972 = vpack.c.bf16 %v960, %v960
    %s973 = scalar_lea.vmem %s1, 64
    %v974 = vld [vmem:[%s973] sm:$0xf]
    %v975 = vld [vmem:[%s973 + $0x4] sm:$0xf]
    %v976 = vld [vmem:[%s973 + $0x8] sm:$0xf]
    %v977 = vld [vmem:[%s973 + $0xc] sm:$0xf]
    %v982 = vunpack.c.l.b16 %v974
    %v983 = vunpack.c.l.b16 %v975
    %v984 = vunpack.c.l.b16 %v976
    %v985 = vunpack.c.l.b16 %v977
    %v986 = vpack.c.b16 %v983, %v982
    %v987 = vpack.c.b16 %v985, %v984
    %v991 = vsel %vm119, %v961, 0
    %v994 = vsel %vm119, %v962, 0
    %v997 = vsel %vm119, %v963, 0
    %v1000 = vsel %vm119, %v964, 0
    %v1003 = vsel %vm119, %v965, 0
    %v1006 = vsel %vm119, %v966, 0
    %v1009 = vsel %vm119, %v967, 0
    %v1012 = vsel %vm119, %v968, 0
    %v1015 = vsel %vm119, %v969, 0
    %v1018 = vsel %vm119, %v970, 0
    %v1021 = vsel %vm119, %v971, 0
    %v1024 = vsel %vm119, %v972, 0
    %1026 = vmatprep.subr.bf16.mxu0 0
    %1027 = vmatpush1.bf16.msra.mxu0 %v986
    %1028 = vmatprep.subr.bf16.mxu0 0
    %1029 = vmatpush1.bf16.msra.mxu0 %v987
    %1030 = vmatprep.subr.bf16.mxu0 0
    %1031 = vmatpush1.bf16.msra.mxu0 0
    %1032 = vmatprep.subr.bf16.mxu0 0
    %1033 = vmatpush1.bf16.msra.mxu0 0
    %1034 = vmatprep.subr.bf16.mxu0 0
    %1035 = vmatpush1.bf16.msra.mxu0 0
    %1036 = vmatprep.subr.bf16.mxu0 0
    %1037 = vmatpush1.bf16.msra.mxu0 0
    %1038 = vmatprep.subr.bf16.mxu0 0
    %1039 = vmatpush1.bf16.msra.mxu0 0
    %1040 = vmatprep.subr.bf16.mxu0 0
    %1041 = vmatpush1.bf16.msra.mxu0 0
    %1042 = vmatprep.subr.bf16.mxu0 0
    %1043 = vmatpush1.bf16.msra.mxu0 0
    %1044 = vmatprep.subr.bf16.mxu0 0
    %1045 = vmatpush1.bf16.msra.mxu0 0
    %1046 = vmatprep.subr.bf16.mxu0 0
    %1047 = vmatpush1.bf16.msra.mxu0 0
    %1048 = vmatprep.subr.bf16.mxu0 0
    %1049 = vmatpush1.bf16.msra.mxu0 0
    %1050 = vmatprep.subr.bf16.mxu0 0
    %1051 = vmatpush1.bf16.msra.mxu0 0
    %1052 = vmatprep.subr.bf16.mxu0 0
    %1053 = vmatpush1.bf16.msra.mxu0 0
    %1054 = vmatprep.subr.bf16.mxu0 0
    %1055 = vmatpush1.bf16.msra.mxu0 0
    %1056 = vmatprep.subr.bf16.mxu0 0
    %1057 = vmatpush1.bf16.msra.mxu0 0
    %1058 = vmatprep.mubr.bf16.mxu0 0
    %1059 = vmatmul.mubr.bf16.gmra.mrb[0].mxu0 %v991
    %v1060 = vpop.f32.mrb[0].mxu0
    %v1061 = vadd.f32 0.0, %v1060
    %v1062 = vpop.f32.mrb[0].mxu0
    %v1063 = vpop.f32.mrb[0].mxu0
    %v1064 = vadd.f32 0.0, %v1063
    %v1065 = vpop.f32.mrb[0].mxu0
    %1066 = vmatprep.mubr.bf16.mxu0 0
    %1067 = vmatmul.mubr.bf16.gmra.mrb[0].mxu0 %v994
    %v1068 = vpop.f32.mrb[0].mxu0
    %v1069 = vadd.f32 0.0, %v1068
    %v1070 = vpop.f32.mrb[0].mxu0
    %v1071 = vpop.f32.mrb[0].mxu0
    %v1072 = vadd.f32 0.0, %v1071
    %v1073 = vpop.f32.mrb[0].mxu0
    %1074 = vmatprep.mubr.bf16.mxu0 0
    %1075 = vmatmul.mubr.bf16.gmra.mrb[0].mxu0 %v997
    %v1076 = vpop.f32.mrb[0].mxu0
    %v1077 = vadd.f32 0.0, %v1076
    %v1078 = vpop.f32.mrb[0].mxu0
    %v1079 = vpop.f32.mrb[0].mxu0
    %v1080 = vadd.f32 0.0, %v1079
    %v1081 = vpop.f32.mrb[0].mxu0
    %1082 = vmatprep.mubr.bf16.mxu0 0
    %1083 = vmatmul.mubr.bf16.gmra.mrb[0].mxu0 %v1000
    %v1084 = vpop.f32.mrb[0].mxu0
    %v1085 = vadd.f32 0.0, %v1084
    %v1086 = vpop.f32.mrb[0].mxu0
    %v1087 = vpop.f32.mrb[0].mxu0
    %v1088 = vadd.f32 0.0, %v1087
    %v1089 = vpop.f32.mrb[0].mxu0
    %1090 = vmatprep.mubr.bf16.mxu0 0
    %1091 = vmatmul.mubr.bf16.gmra.mrb[0].mxu0 %v1003
    %v1092 = vpop.f32.mrb[0].mxu0
    %v1093 = vadd.f32 0.0, %v1092
    %v1094 = vpop.f32.mrb[0].mxu0
    %v1095 = vpop.f32.mrb[0].mxu0
    %v1096 = vadd.f32 0.0, %v1095
    %v1097 = vpop.f32.mrb[0].mxu0
    %1098 = vmatprep.mubr.bf16.mxu0 0
    %1099 = vmatmul.mubr.bf16.gmra.mrb[0].mxu0 %v1006
    %v1100 = vpop.f32.mrb[0].mxu0
    %v1101 = vadd.f32 0.0, %v1100
    %v1102 = vpop.f32.mrb[0].mxu0
    %v1103 = vpop.f32.mrb[0].mxu0
    %v1104 = vadd.f32 0.0, %v1103
    %v1105 = vpop.f32.mrb[0].mxu0
    %1106 = vmatprep.mubr.bf16.mxu0 0
    %1107 = vmatmul.mubr.bf16.gmra.mrb[0].mxu0 %v1009
    %v1108 = vpop.f32.mrb[0].mxu0
    %v1109 = vadd.f32 0.0, %v1108
    %v1110 = vpop.f32.mrb[0].mxu0
    %v1111 = vpop.f32.mrb[0].mxu0
    %v1112 = vadd.f32 0.0, %v1111
    %v1113 = vpop.f32.mrb[0].mxu0
    %1114 = vmatprep.mubr.bf16.mxu0 0
    %1115 = vmatmul.mubr.bf16.gmra.mrb[0].mxu0 %v1012
    %v1116 = vpop.f32.mrb[0].mxu0
    %v1117 = vadd.f32 0.0, %v1116
    %v1118 = vpop.f32.mrb[0].mxu0
    %v1119 = vpop.f32.mrb[0].mxu0
    %v1120 = vadd.f32 0.0, %v1119
    %v1121 = vpop.f32.mrb[0].mxu0
    %1122 = vmatprep.mubr.bf16.mxu0 0
    %1123 = vmatmul.mubr.bf16.gmra.mrb[0].mxu0 %v1015
    %v1124 = vpop.f32.mrb[0].mxu0
    %v1125 = vadd.f32 0.0, %v1124
    %v1126 = vpop.f32.mrb[0].mxu0
    %v1127 = vpop.f32.mrb[0].mxu0
    %v1128 = vadd.f32 0.0, %v1127
    %v1129 = vpop.f32.mrb[0].mxu0
    %1130 = vmatprep.mubr.bf16.mxu0 0
    %1131 = vmatmul.mubr.bf16.gmra.mrb[0].mxu0 %v1018
    %v1132 = vpop.f32.mrb[0].mxu0
    %v1133 = vadd.f32 0.0, %v1132
    %v1134 = vpop.f32.mrb[0].mxu0
    %v1135 = vpop.f32.mrb[0].mxu0
    %v1136 = vadd.f32 0.0, %v1135
    %v1137 = vpop.f32.mrb[0].mxu0
    %1138 = vmatprep.mubr.bf16.mxu0 0
    %1139 = vmatmul.mubr.bf16.gmra.mrb[0].mxu0 %v1021
    %v1140 = vpop.f32.mrb[0].mxu0
    %v1141 = vadd.f32 0.0, %v1140
    %v1142 = vpop.f32.mrb[0].mxu0
    %v1143 = vpop.f32.mrb[0].mxu0
    %v1144 = vadd.f32 0.0, %v1143
    %v1145 = vpop.f32.mrb[0].mxu0
    %1146 = vmatprep.mubr.bf16.mxu0 0
    %1147 = vmatmul.mubr.bf16.gmra.mrb[0].mxu0 %v1024
    %v1148 = vpop.f32.mrb[0].mxu0
    %v1149 = vadd.f32 0.0, %v1148
    %v1150 = vpop.f32.mrb[0].mxu0
    %v1151 = vpop.f32.mrb[0].mxu0
    %v1152 = vpop.f32.mrb[0].mxu0
    %1153 = vdwg.mxu0
    %v1154 = vadd.f32 %v915, %v1061
    %v1155 = vadd.f32 %v916, %v1064
    %v1156 = vadd.f32 %v917, %v1069
    %v1157 = vadd.f32 %v918, %v1072
    %v1158 = vadd.f32 %v919, %v1077
    %v1159 = vadd.f32 %v920, %v1080
    %v1160 = vadd.f32 %v921, %v1085
    %v1161 = vadd.f32 %v922, %v1088
    %v1162 = vadd.f32 %v923, %v1093
    %v1163 = vadd.f32 %v924, %v1096
    %v1164 = vadd.f32 %v925, %v1101
    %v1165 = vadd.f32 %v926, %v1104
    %v1166 = vadd.f32 %v927, %v1109
    %v1167 = vadd.f32 %v928, %v1112
    %v1168 = vadd.f32 %v929, %v1117
    %v1169 = vadd.f32 %v930, %v1120
    %v1170 = vadd.f32 %v931, %v1125
    %v1171 = vadd.f32 %v932, %v1128
    %v1172 = vadd.f32 %v933, %v1133
    %v1173 = vadd.f32 %v934, %v1136
    %v1174 = vadd.f32 %v935, %v1141
    %v1175 = vadd.f32 %v936, %v1144
    %v1176 = vadd.f32 %v937, %v1149
    %v1177 = vld [vmem:[%s0 + $0x19] sm:$0xff]
    %v1178 = vld [vmem:[%s0 + $0x21] sm:$0xff]
    %v1179 = vld [vmem:[%s0 + $0x29] sm:$0xff]
    %v1180 = vld [vmem:[%s0 + $0x31] sm:$0xff]
    %v1181 = vld [vmem:[%s0 + $0x39] sm:$0xff]
    %v1182 = vld [vmem:[%s0 + $0x41] sm:$0xff]
    %v1183 = vld [vmem:[%s0 + $0x49] sm:$0xff]
    %v1184 = vld [vmem:[%s0 + $0x51] sm:$0xff]
    %v1185 = vld [vmem:[%s0 + $0x59] sm:$0xff]
    %v1186 = vld [vmem:[%s0 + $0x61] sm:$0xff]
    %v1187 = vld [vmem:[%s0 + $0x69] sm:$0xff]
    %v1188 = vld [vmem:[%s0 + $0x71] sm:$0xff]
    %v1189 = vld [vmem:[%s0 + $0x79] sm:$0xff]
    %v1190 = vld [vmem:[%s0 + $0x81] sm:$0xff]
    %v1191 = vld [vmem:[%s0 + $0x89] sm:$0xff]
    %v1192 = vld [vmem:[%s0 + $0x91] sm:$0xff]
    %v1193 = vld [vmem:[%s0 + $0x99] sm:$0xff]
    %v1194 = vld [vmem:[%s0 + $0xa1] sm:$0xff]
    %v1195 = vld [vmem:[%s0 + $0xa9] sm:$0xff]
    %v1196 = vld [vmem:[%s0 + $0xb1] sm:$0xff]
    %v1197 = vld [vmem:[%s0 + $0xb9] sm:$0xff]
    %v1198 = vld [vmem:[%s0 + $0xc1] sm:$0xff]
    %v1199 = vld [vmem:[%s0 + $0xc9] sm:$0x1]
    %v1200 = vpack.c.bf16 %v1178, %v1177
    %v1201 = vpack.c.bf16 %v1180, %v1179
    %v1202 = vpack.c.bf16 %v1182, %v1181
    %v1203 = vpack.c.bf16 %v1184, %v1183
    %v1204 = vpack.c.bf16 %v1186, %v1185
    %v1205 = vpack.c.bf16 %v1188, %v1187
    %v1206 = vpack.c.bf16 %v1190, %v1189
    %v1207 = vpack.c.bf16 %v1192, %v1191
    %v1208 = vpack.c.bf16 %v1194, %v1193
    %v1209 = vpack.c.bf16 %v1196, %v1195
    %v1210 = vpack.c.bf16 %v1198, %v1197
    %v1211 = vpack.c.bf16 %v1199, %v1199
    %s1212 = scalar_lea.vmem %s1, 80
    %v1213 = vld [vmem:[%s1212] sm:$0xf]
    %v1214 = vld [vmem:[%s1212 + $0x4] sm:$0xf]
    %v1215 = vld [vmem:[%s1212 + $0x8] sm:$0xf]
    %v1216 = vld [vmem:[%s1212 + $0xc] sm:$0xf]
    %v1221 = vunpack.c.l.b16 %v1213
    %v1222 = vunpack.c.l.b16 %v1214
    %v1223 = vunpack.c.l.b16 %v1215
    %v1224 = vunpack.c.l.b16 %v1216
    %v1225 = vpack.c.b16 %v1222, %v1221
    %v1226 = vpack.c.b16 %v1224, %v1223
    %v1230 = vsel %vm119, %v1200, 0
    %v1233 = vsel %vm119, %v1201, 0
    %v1236 = vsel %vm119, %v1202, 0
    %v1239 = vsel %vm119, %v1203, 0
    %v1242 = vsel %vm119, %v1204, 0
    %v1245 = vsel %vm119, %v1205, 0
    %v1248 = vsel %vm119, %v1206, 0
    %v1251 = vsel %vm119, %v1207, 0
    %v1254 = vsel %vm119, %v1208, 0
    %v1257 = vsel %vm119, %v1209, 0
    %v1260 = vsel %vm119, %v1210, 0
    %v1263 = vsel %vm119, %v1211, 0
    %1265 = vmatprep.subr.bf16.mxu0 0
    %1266 = vmatpush1.bf16.msra.mxu0 %v1225
    %1267 = vmatprep.subr.bf16.mxu0 0
    %1268 = vmatpush1.bf16.msra.mxu0 %v1226
    %1269 = vmatprep.subr.bf16.mxu0 0
    %1270 = vmatpush1.bf16.msra.mxu0 0
    %1271 = vmatprep.subr.bf16.mxu0 0
    %1272 = vmatpush1.bf16.msra.mxu0 0
    %1273 = vmatprep.subr.bf16.mxu0 0
    %1274 = vmatpush1.bf16.msra.mxu0 0
    %1275 = vmatprep.subr.bf16.mxu0 0
    %1276 = vmatpush1.bf16.msra.mxu0 0
    %1277 = vmatprep.subr.bf16.mxu0 0
    %1278 = vmatpush1.bf16.msra.mxu0 0
    %1279 = vmatprep.subr.bf16.mxu0 0
    %1280 = vmatpush1.bf16.msra.mxu0 0
    %1281 = vmatprep.subr.bf16.mxu0 0
    %1282 = vmatpush1.bf16.msra.mxu0 0
    %1283 = vmatprep.subr.bf16.mxu0 0
    %1284 = vmatpush1.bf16.msra.mxu0 0
    %1285 = vmatprep.subr.bf16.mxu0 0
    %1286 = vmatpush1.bf16.msra.mxu0 0
    %1287 = vmatprep.subr.bf16.mxu0 0
    %1288 = vmatpush1.bf16.msra.mxu0 0
    %1289 = vmatprep.subr.bf16.mxu0 0
    %1290 = vmatpush1.bf16.msra.mxu0 0
    %1291 = vmatprep.subr.bf16.mxu0 0
    %1292 = vmatpush1.bf16.msra.mxu0 0
    %1293 = vmatprep.subr.bf16.mxu0 0
    %1294 = vmatpush1.bf16.msra.mxu0 0
    %1295 = vmatprep.subr.bf16.mxu0 0
    %1296 = vmatpush1.bf16.msra.mxu0 0
    %1297 = vmatprep.mubr.bf16.mxu0 0
    %1298 = vmatmul.mubr.bf16.gmra.mrb[0].mxu0 %v1230
    %v1299 = vpop.f32.mrb[0].mxu0
    %v1300 = vadd.f32 0.0, %v1299
    %v1301 = vpop.f32.mrb[0].mxu0
    %v1302 = vpop.f32.mrb[0].mxu0
    %v1303 = vadd.f32 0.0, %v1302
    %v1304 = vpop.f32.mrb[0].mxu0
    %1305 = vmatprep.mubr.bf16.mxu0 0
    %1306 = vmatmul.mubr.bf16.gmra.mrb[0].mxu0 %v1233
    %v1307 = vpop.f32.mrb[0].mxu0
    %v1308 = vadd.f32 0.0, %v1307
    %v1309 = vpop.f32.mrb[0].mxu0
    %v1310 = vpop.f32.mrb[0].mxu0
    %v1311 = vadd.f32 0.0, %v1310
    %v1312 = vpop.f32.mrb[0].mxu0
    %1313 = vmatprep.mubr.bf16.mxu0 0
    %1314 = vmatmul.mubr.bf16.gmra.mrb[0].mxu0 %v1236
    %v1315 = vpop.f32.mrb[0].mxu0
    %v1316 = vadd.f32 0.0, %v1315
    %v1317 = vpop.f32.mrb[0].mxu0
    %v1318 = vpop.f32.mrb[0].mxu0
    %v1319 = vadd.f32 0.0, %v1318
    %v1320 = vpop.f32.mrb[0].mxu0
    %1321 = vmatprep.mubr.bf16.mxu0 0
    %1322 = vmatmul.mubr.bf16.gmra.mrb[0].mxu0 %v1239
    %v1323 = vpop.f32.mrb[0].mxu0
    %v1324 = vadd.f32 0.0, %v1323
    %v1325 = vpop.f32.mrb[0].mxu0
    %v1326 = vpop.f32.mrb[0].mxu0
    %v1327 = vadd.f32 0.0, %v1326
    %v1328 = vpop.f32.mrb[0].mxu0
    %1329 = vmatprep.mubr.bf16.mxu0 0
    %1330 = vmatmul.mubr.bf16.gmra.mrb[0].mxu0 %v1242
    %v1331 = vpop.f32.mrb[0].mxu0
    %v1332 = vadd.f32 0.0, %v1331
    %v1333 = vpop.f32.mrb[0].mxu0
    %v1334 = vpop.f32.mrb[0].mxu0
    %v1335 = vadd.f32 0.0, %v1334
    %v1336 = vpop.f32.mrb[0].mxu0
    %1337 = vmatprep.mubr.bf16.mxu0 0
    %1338 = vmatmul.mubr.bf16.gmra.mrb[0].mxu0 %v1245
    %v1339 = vpop.f32.mrb[0].mxu0
    %v1340 = vadd.f32 0.0, %v1339
    %v1341 = vpop.f32.mrb[0].mxu0
    %v1342 = vpop.f32.mrb[0].mxu0
    %v1343 = vadd.f32 0.0, %v1342
    %v1344 = vpop.f32.mrb[0].mxu0
    %1345 = vmatprep.mubr.bf16.mxu0 0
    %1346 = vmatmul.mubr.bf16.gmra.mrb[0].mxu0 %v1248
    %v1347 = vpop.f32.mrb[0].mxu0
    %v1348 = vadd.f32 0.0, %v1347
    %v1349 = vpop.f32.mrb[0].mxu0
    %v1350 = vpop.f32.mrb[0].mxu0
    %v1351 = vadd.f32 0.0, %v1350
    %v1352 = vpop.f32.mrb[0].mxu0
    %1353 = vmatprep.mubr.bf16.mxu0 0
    %1354 = vmatmul.mubr.bf16.gmra.mrb[0].mxu0 %v1251
    %v1355 = vpop.f32.mrb[0].mxu0
    %v1356 = vadd.f32 0.0, %v1355
    %v1357 = vpop.f32.mrb[0].mxu0
    %v1358 = vpop.f32.mrb[0].mxu0
    %v1359 = vadd.f32 0.0, %v1358
    %v1360 = vpop.f32.mrb[0].mxu0
    %1361 = vmatprep.mubr.bf16.mxu0 0
    %1362 = vmatmul.mubr.bf16.gmra.mrb[0].mxu0 %v1254
    %v1363 = vpop.f32.mrb[0].mxu0
    %v1364 = vadd.f32 0.0, %v1363
    %v1365 = vpop.f32.mrb[0].mxu0
    %v1366 = vpop.f32.mrb[0].mxu0
    %v1367 = vadd.f32 0.0, %v1366
    %v1368 = vpop.f32.mrb[0].mxu0
    %1369 = vmatprep.mubr.bf16.mxu0 0
    %1370 = vmatmul.mubr.bf16.gmra.mrb[0].mxu0 %v1257
    %v1371 = vpop.f32.mrb[0].mxu0
    %v1372 = vadd.f32 0.0, %v1371
    %v1373 = vpop.f32.mrb[0].mxu0
    %v1374 = vpop.f32.mrb[0].mxu0
    %v1375 = vadd.f32 0.0, %v1374
    %v1376 = vpop.f32.mrb[0].mxu0
    %1377 = vmatprep.mubr.bf16.mxu0 0
    %1378 = vmatmul.mubr.bf16.gmra.mrb[0].mxu0 %v1260
    %v1379 = vpop.f32.mrb[0].mxu0
    %v1380 = vadd.f32 0.0, %v1379
    %v1381 = vpop.f32.mrb[0].mxu0
    %v1382 = vpop.f32.mrb[0].mxu0
    %v1383 = vadd.f32 0.0, %v1382
    %v1384 = vpop.f32.mrb[0].mxu0
    %1385 = vmatprep.mubr.bf16.mxu0 0
    %1386 = vmatmul.mubr.bf16.gmra.mrb[0].mxu0 %v1263
    %v1387 = vpop.f32.mrb[0].mxu0
    %v1388 = vadd.f32 0.0, %v1387
    %v1389 = vpop.f32.mrb[0].mxu0
    %v1390 = vpop.f32.mrb[0].mxu0
    %v1391 = vpop.f32.mrb[0].mxu0
    %1392 = vdwg.mxu0
    %v1393 = vadd.f32 %v1154, %v1300
    %v1394 = vadd.f32 %v1155, %v1303
    %v1395 = vadd.f32 %v1156, %v1308
    %v1396 = vadd.f32 %v1157, %v1311
    %v1397 = vadd.f32 %v1158, %v1316
    %v1398 = vadd.f32 %v1159, %v1319
    %v1399 = vadd.f32 %v1160, %v1324
    %v1400 = vadd.f32 %v1161, %v1327
    %v1401 = vadd.f32 %v1162, %v1332
    %v1402 = vadd.f32 %v1163, %v1335
    %v1403 = vadd.f32 %v1164, %v1340
    %v1404 = vadd.f32 %v1165, %v1343
    %v1405 = vadd.f32 %v1166, %v1348
    %v1406 = vadd.f32 %v1167, %v1351
    %v1407 = vadd.f32 %v1168, %v1356
    %v1408 = vadd.f32 %v1169, %v1359
    %v1409 = vadd.f32 %v1170, %v1364
    %v1410 = vadd.f32 %v1171, %v1367
    %v1411 = vadd.f32 %v1172, %v1372
    %v1412 = vadd.f32 %v1173, %v1375
    %v1413 = vadd.f32 %v1174, %v1380
    %v1414 = vadd.f32 %v1175, %v1383
    %v1415 = vadd.f32 %v1176, %v1388
    %v1416 = vld [vmem:[%s0 + $0x26] sm:$0xff]
    %v1417 = vld [vmem:[%s0 + $0x2e] sm:$0xff]
    %v1418 = vld [vmem:[%s0 + $0x36] sm:$0xff]
    %v1419 = vld [vmem:[%s0 + $0x3e] sm:$0xff]
    %v1420 = vld [vmem:[%s0 + $0x46] sm:$0xff]
    %v1421 = vld [vmem:[%s0 + $0x4e] sm:$0xff]
    %v1422 = vld [vmem:[%s0 + $0x56] sm:$0xff]
    %v1423 = vld [vmem:[%s0 + $0x5e] sm:$0xff]
    %v1424 = vld [vmem:[%s0 + $0x66] sm:$0xff]
    %v1425 = vld [vmem:[%s0 + $0x6e] sm:$0xff]
    %v1426 = vld [vmem:[%s0 + $0x76] sm:$0xff]
    %v1427 = vld [vmem:[%s0 + $0x7e] sm:$0xff]
    %v1428 = vld [vmem:[%s0 + $0x86] sm:$0xff]
    %v1429 = vld [vmem:[%s0 + $0x8e] sm:$0xff]
    %v1430 = vld [vmem:[%s0 + $0x96] sm:$0xff]
    %v1431 = vld [vmem:[%s0 + $0x9e] sm:$0xff]
    %v1432 = vld [vmem:[%s0 + $0xa6] sm:$0xff]
    %v1433 = vld [vmem:[%s0 + $0xae] sm:$0xff]
    %v1434 = vld [vmem:[%s0 + $0xb6] sm:$0xff]
    %v1435 = vld [vmem:[%s0 + $0xbe] sm:$0xff]
    %v1436 = vld [vmem:[%s0 + $0xc6] sm:$0xff]
    %v1437 = vld [vmem:[%s0 + $0xce] sm:$0xff]
    %v1438 = vld [vmem:[%s0 + $0xd6] sm:$0x1]
    %v1439 = vpack.c.bf16 %v1417, %v1416
    %v1440 = vpack.c.bf16 %v1419, %v1418
    %v1441 = vpack.c.bf16 %v1421, %v1420
    %v1442 = vpack.c.bf16 %v1423, %v1422
    %v1443 = vpack.c.bf16 %v1425, %v1424
    %v1444 = vpack.c.bf16 %v1427, %v1426
    %v1445 = vpack.c.bf16 %v1429, %v1428
    %v1446 = vpack.c.bf16 %v1431, %v1430
    %v1447 = vpack.c.bf16 %v1433, %v1432
    %v1448 = vpack.c.bf16 %v1435, %v1434
    %v1449 = vpack.c.bf16 %v1437, %v1436
    %v1450 = vpack.c.bf16 %v1438, %v1438
    %s1451 = scalar_lea.vmem %s1, 96
    %v1452 = vld [vmem:[%s1451] sm:$0xf]
    %v1453 = vld [vmem:[%s1451 + $0x4] sm:$0xf]
    %v1454 = vld [vmem:[%s1451 + $0x8] sm:$0xf]
    %v1455 = vld [vmem:[%s1451 + $0xc] sm:$0xf]
    %v1460 = vunpack.c.l.b16 %v1452
    %v1461 = vunpack.c.l.b16 %v1453
    %v1462 = vunpack.c.l.b16 %v1454
    %v1463 = vunpack.c.l.b16 %v1455
    %v1464 = vpack.c.b16 %v1461, %v1460
    %v1465 = vpack.c.b16 %v1463, %v1462
    %v1469 = vsel %vm119, %v1439, 0
    %v1472 = vsel %vm119, %v1440, 0
    %v1475 = vsel %vm119, %v1441, 0
    %v1478 = vsel %vm119, %v1442, 0
    %v1481 = vsel %vm119, %v1443, 0
    %v1484 = vsel %vm119, %v1444, 0
    %v1487 = vsel %vm119, %v1445, 0
    %v1490 = vsel %vm119, %v1446, 0
    %v1493 = vsel %vm119, %v1447, 0
    %v1496 = vsel %vm119, %v1448, 0
    %v1499 = vsel %vm119, %v1449, 0
    %v1502 = vsel %vm119, %v1450, 0
    %1504 = vmatprep.subr.bf16.mxu0 0
    %1505 = vmatpush1.bf16.msra.mxu0 %v1464
    %1506 = vmatprep.subr.bf16.mxu0 0
    %1507 = vmatpush1.bf16.msra.mxu0 %v1465
    %1508 = vmatprep.subr.bf16.mxu0 0
    %1509 = vmatpush1.bf16.msra.mxu0 0
    %1510 = vmatprep.subr.bf16.mxu0 0
    %1511 = vmatpush1.bf16.msra.mxu0 0
    %1512 = vmatprep.subr.bf16.mxu0 0
    %1513 = vmatpush1.bf16.msra.mxu0 0
    %1514 = vmatprep.subr.bf16.mxu0 0
    %1515 = vmatpush1.bf16.msra.mxu0 0
    %1516 = vmatprep.subr.bf16.mxu0 0
    %1517 = vmatpush1.bf16.msra.mxu0 0
    %1518 = vmatprep.subr.bf16.mxu0 0
    %1519 = vmatpush1.bf16.msra.mxu0 0
    %1520 = vmatprep.subr.bf16.mxu0 0
    %1521 = vmatpush1.bf16.msra.mxu0 0
    %1522 = vmatprep.subr.bf16.mxu0 0
    %1523 = vmatpush1.bf16.msra.mxu0 0
    %1524 = vmatprep.subr.bf16.mxu0 0
    %1525 = vmatpush1.bf16.msra.mxu0 0
    %1526 = vmatprep.subr.bf16.mxu0 0
    %1527 = vmatpush1.bf16.msra.mxu0 0
    %1528 = vmatprep.subr.bf16.mxu0 0
    %1529 = vmatpush1.bf16.msra.mxu0 0
    %1530 = vmatprep.subr.bf16.mxu0 0
    %1531 = vmatpush1.bf16.msra.mxu0 0
    %1532 = vmatprep.subr.bf16.mxu0 0
    %1533 = vmatpush1.bf16.msra.mxu0 0
    %1534 = vmatprep.subr.bf16.mxu0 0
    %1535 = vmatpush1.bf16.msra.mxu0 0
    %1536 = vmatprep.mubr.bf16.mxu0 0
    %1537 = vmatmul.mubr.bf16.gmra.mrb[0].mxu0 %v1469
    %v1538 = vpop.f32.mrb[0].mxu0
    %v1539 = vadd.f32 0.0, %v1538
    %v1540 = vpop.f32.mrb[0].mxu0
    %v1541 = vpop.f32.mrb[0].mxu0
    %v1542 = vadd.f32 0.0, %v1541
    %v1543 = vpop.f32.mrb[0].mxu0
    %1544 = vmatprep.mubr.bf16.mxu0 0
    %1545 = vmatmul.mubr.bf16.gmra.mrb[0].mxu0 %v1472
    %v1546 = vpop.f32.mrb[0].mxu0
    %v1547 = vadd.f32 0.0, %v1546
    %v1548 = vpop.f32.mrb[0].mxu0
    %v1549 = vpop.f32.mrb[0].mxu0
    %v1550 = vadd.f32 0.0, %v1549
    %v1551 = vpop.f32.mrb[0].mxu0
    %1552 = vmatprep.mubr.bf16.mxu0 0
    %1553 = vmatmul.mubr.bf16.gmra.mrb[0].mxu0 %v1475
    %v1554 = vpop.f32.mrb[0].mxu0
    %v1555 = vadd.f32 0.0, %v1554
    %v1556 = vpop.f32.mrb[0].mxu0
    %v1557 = vpop.f32.mrb[0].mxu0
    %v1558 = vadd.f32 0.0, %v1557
    %v1559 = vpop.f32.mrb[0].mxu0
    %1560 = vmatprep.mubr.bf16.mxu0 0
    %1561 = vmatmul.mubr.bf16.gmra.mrb[0].mxu0 %v1478
    %v1562 = vpop.f32.mrb[0].mxu0
    %v1563 = vadd.f32 0.0, %v1562
    %v1564 = vpop.f32.mrb[0].mxu0
    %v1565 = vpop.f32.mrb[0].mxu0
    %v1566 = vadd.f32 0.0, %v1565
    %v1567 = vpop.f32.mrb[0].mxu0
    %1568 = vmatprep.mubr.bf16.mxu0 0
    %1569 = vmatmul.mubr.bf16.gmra.mrb[0].mxu0 %v1481
    %v1570 = vpop.f32.mrb[0].mxu0
    %v1571 = vadd.f32 0.0, %v1570
    %v1572 = vpop.f32.mrb[0].mxu0
    %v1573 = vpop.f32.mrb[0].mxu0
    %v1574 = vadd.f32 0.0, %v1573
    %v1575 = vpop.f32.mrb[0].mxu0
    %1576 = vmatprep.mubr.bf16.mxu0 0
    %1577 = vmatmul.mubr.bf16.gmra.mrb[0].mxu0 %v1484
    %v1578 = vpop.f32.mrb[0].mxu0
    %v1579 = vadd.f32 0.0, %v1578
    %v1580 = vpop.f32.mrb[0].mxu0
    %v1581 = vpop.f32.mrb[0].mxu0
    %v1582 = vadd.f32 0.0, %v1581
    %v1583 = vpop.f32.mrb[0].mxu0
    %1584 = vmatprep.mubr.bf16.mxu0 0
    %1585 = vmatmul.mubr.bf16.gmra.mrb[0].mxu0 %v1487
    %v1586 = vpop.f32.mrb[0].mxu0
    %v1587 = vadd.f32 0.0, %v1586
    %v1588 = vpop.f32.mrb[0].mxu0
    %v1589 = vpop.f32.mrb[0].mxu0
    %v1590 = vadd.f32 0.0, %v1589
    %v1591 = vpop.f32.mrb[0].mxu0
    %1592 = vmatprep.mubr.bf16.mxu0 0
    %1593 = vmatmul.mubr.bf16.gmra.mrb[0].mxu0 %v1490
    %v1594 = vpop.f32.mrb[0].mxu0
    %v1595 = vadd.f32 0.0, %v1594
    %v1596 = vpop.f32.mrb[0].mxu0
    %v1597 = vpop.f32.mrb[0].mxu0
    %v1598 = vadd.f32 0.0, %v1597
    %v1599 = vpop.f32.mrb[0].mxu0
    %1600 = vmatprep.mubr.bf16.mxu0 0
    %1601 = vmatmul.mubr.bf16.gmra.mrb[0].mxu0 %v1493
    %v1602 = vpop.f32.mrb[0].mxu0
    %v1603 = vadd.f32 0.0, %v1602
    %v1604 = vpop.f32.mrb[0].mxu0
    %v1605 = vpop.f32.mrb[0].mxu0
    %v1606 = vadd.f32 0.0, %v1605
    %v1607 = vpop.f32.mrb[0].mxu0
    %1608 = vmatprep.mubr.bf16.mxu0 0
    %1609 = vmatmul.mubr.bf16.gmra.mrb[0].mxu0 %v1496
    %v1610 = vpop.f32.mrb[0].mxu0
    %v1611 = vadd.f32 0.0, %v1610
    %v1612 = vpop.f32.mrb[0].mxu0
    %v1613 = vpop.f32.mrb[0].mxu0
    %v1614 = vadd.f32 0.0, %v1613
    %v1615 = vpop.f32.mrb[0].mxu0
    %1616 = vmatprep.mubr.bf16.mxu0 0
    %1617 = vmatmul.mubr.bf16.gmra.mrb[0].mxu0 %v1499
    %v1618 = vpop.f32.mrb[0].mxu0
    %v1619 = vadd.f32 0.0, %v1618
    %v1620 = vpop.f32.mrb[0].mxu0
    %v1621 = vpop.f32.mrb[0].mxu0
    %v1622 = vadd.f32 0.0, %v1621
    %v1623 = vpop.f32.mrb[0].mxu0
    %1624 = vmatprep.mubr.bf16.mxu0 0
    %1625 = vmatmul.mubr.bf16.gmra.mrb[0].mxu0 %v1502
    %v1626 = vpop.f32.mrb[0].mxu0
    %v1627 = vadd.f32 0.0, %v1626
    %v1628 = vpop.f32.mrb[0].mxu0
    %v1629 = vpop.f32.mrb[0].mxu0
    %v1630 = vpop.f32.mrb[0].mxu0
    %1631 = vdwg.mxu0
    %v1632 = vadd.f32 %v1393, %v1539
    %v1633 = vadd.f32 %v1394, %v1542
    %v1634 = vadd.f32 %v1395, %v1547
    %v1635 = vadd.f32 %v1396, %v1550
    %v1636 = vadd.f32 %v1397, %v1555
    %v1637 = vadd.f32 %v1398, %v1558
    %v1638 = vadd.f32 %v1399, %v1563
    %v1639 = vadd.f32 %v1400, %v1566
    %v1640 = vadd.f32 %v1401, %v1571
    %v1641 = vadd.f32 %v1402, %v1574
    %v1642 = vadd.f32 %v1403, %v1579
    %v1643 = vadd.f32 %v1404, %v1582
    %v1644 = vadd.f32 %v1405, %v1587
    %v1645 = vadd.f32 %v1406, %v1590
    %v1646 = vadd.f32 %v1407, %v1595
    %v1647 = vadd.f32 %v1408, %v1598
    %v1648 = vadd.f32 %v1409, %v1603
    %v1649 = vadd.f32 %v1410, %v1606
    %v1650 = vadd.f32 %v1411, %v1611
    %v1651 = vadd.f32 %v1412, %v1614
    %v1652 = vadd.f32 %v1413, %v1619
    %v1653 = vadd.f32 %v1414, %v1622
    %v1654 = vadd.f32 %v1415, %v1627
    %v1655 = vld [vmem:[%s0 + $0x27] sm:$0xff]
    %v1656 = vld [vmem:[%s0 + $0x2f] sm:$0xff]
    %v1657 = vld [vmem:[%s0 + $0x37] sm:$0xff]
    %v1658 = vld [vmem:[%s0 + $0x3f] sm:$0xff]
    %v1659 = vld [vmem:[%s0 + $0x47] sm:$0xff]
    %v1660 = vld [vmem:[%s0 + $0x4f] sm:$0xff]
    %v1661 = vld [vmem:[%s0 + $0x57] sm:$0xff]
    %v1662 = vld [vmem:[%s0 + $0x5f] sm:$0xff]
    %v1663 = vld [vmem:[%s0 + $0x67] sm:$0xff]
    %v1664 = vld [vmem:[%s0 + $0x6f] sm:$0xff]
    %v1665 = vld [vmem:[%s0 + $0x77] sm:$0xff]
    %v1666 = vld [vmem:[%s0 + $0x7f] sm:$0xff]
    %v1667 = vld [vmem:[%s0 + $0x87] sm:$0xff]
    %v1668 = vld [vmem:[%s0 + $0x8f] sm:$0xff]
    %v1669 = vld [vmem:[%s0 + $0x97] sm:$0xff]
    %v1670 = vld [vmem:[%s0 + $0x9f] sm:$0xff]
    %v1671 = vld [vmem:[%s0 + $0xa7] sm:$0xff]
    %v1672 = vld [vmem:[%s0 + $0xaf] sm:$0xff]
    %v1673 = vld [vmem:[%s0 + $0xb7] sm:$0xff]
    %v1674 = vld [vmem:[%s0 + $0xbf] sm:$0xff]
    %v1675 = vld [vmem:[%s0 + $0xc7] sm:$0xff]
    %v1676 = vld [vmem:[%s0 + $0xcf] sm:$0xff]
    %v1677 = vld [vmem:[%s0 + $0xd7] sm:$0x1]
    %v1678 = vpack.c.bf16 %v1656, %v1655
    %v1679 = vpack.c.bf16 %v1658, %v1657
    %v1680 = vpack.c.bf16 %v1660, %v1659
    %v1681 = vpack.c.bf16 %v1662, %v1661
    %v1682 = vpack.c.bf16 %v1664, %v1663
    %v1683 = vpack.c.bf16 %v1666, %v1665
    %v1684 = vpack.c.bf16 %v1668, %v1667
    %v1685 = vpack.c.bf16 %v1670, %v1669
    %v1686 = vpack.c.bf16 %v1672, %v1671
    %v1687 = vpack.c.bf16 %v1674, %v1673
    %v1688 = vpack.c.bf16 %v1676, %v1675
    %v1689 = vpack.c.bf16 %v1677, %v1677
    %s1690 = scalar_lea.vmem %s1, 112
    %v1691 = vld [vmem:[%s1690] sm:$0xf]
    %v1692 = vld [vmem:[%s1690 + $0x4] sm:$0xf]
    %v1693 = vld [vmem:[%s1690 + $0x8] sm:$0xf]
    %v1694 = vld [vmem:[%s1690 + $0xc] sm:$0xf]
    %v1699 = vunpack.c.l.b16 %v1691
    %v1700 = vunpack.c.l.b16 %v1692
    %v1701 = vunpack.c.l.b16 %v1693
    %v1702 = vunpack.c.l.b16 %v1694
    %v1703 = vpack.c.b16 %v1700, %v1699
    %v1704 = vpack.c.b16 %v1702, %v1701
    %v1708 = vsel %vm119, %v1678, 0
    %v1711 = vsel %vm119, %v1679, 0
    %v1714 = vsel %vm119, %v1680, 0
    %v1717 = vsel %vm119, %v1681, 0
    %v1720 = vsel %vm119, %v1682, 0
    %v1723 = vsel %vm119, %v1683, 0
    %v1726 = vsel %vm119, %v1684, 0
    %v1729 = vsel %vm119, %v1685, 0
    %v1732 = vsel %vm119, %v1686, 0
    %v1735 = vsel %vm119, %v1687, 0
    %v1738 = vsel %vm119, %v1688, 0
    %v1741 = vsel %vm119, %v1689, 0
    %1743 = vmatprep.subr.bf16.mxu0 0
    %1744 = vmatpush1.bf16.msra.mxu0 %v1703
    %1745 = vmatprep.subr.bf16.mxu0 0
    %1746 = vmatpush1.bf16.msra.mxu0 %v1704
    %1747 = vmatprep.subr.bf16.mxu0 0
    %1748 = vmatpush1.bf16.msra.mxu0 0
    %1749 = vmatprep.subr.bf16.mxu0 0
    %1750 = vmatpush1.bf16.msra.mxu0 0
    %1751 = vmatprep.subr.bf16.mxu0 0
    %1752 = vmatpush1.bf16.msra.mxu0 0
    %1753 = vmatprep.subr.bf16.mxu0 0
    %1754 = vmatpush1.bf16.msra.mxu0 0
    %1755 = vmatprep.subr.bf16.mxu0 0
    %1756 = vmatpush1.bf16.msra.mxu0 0
    %1757 = vmatprep.subr.bf16.mxu0 0
    %1758 = vmatpush1.bf16.msra.mxu0 0
    %1759 = vmatprep.subr.bf16.mxu0 0
    %1760 = vmatpush1.bf16.msra.mxu0 0
    %1761 = vmatprep.subr.bf16.mxu0 0
    %1762 = vmatpush1.bf16.msra.mxu0 0
    %1763 = vmatprep.subr.bf16.mxu0 0
    %1764 = vmatpush1.bf16.msra.mxu0 0
    %1765 = vmatprep.subr.bf16.mxu0 0
    %1766 = vmatpush1.bf16.msra.mxu0 0
    %1767 = vmatprep.subr.bf16.mxu0 0
    %1768 = vmatpush1.bf16.msra.mxu0 0
    %1769 = vmatprep.subr.bf16.mxu0 0
    %1770 = vmatpush1.bf16.msra.mxu0 0
    %1771 = vmatprep.subr.bf16.mxu0 0
    %1772 = vmatpush1.bf16.msra.mxu0 0
    %1773 = vmatprep.subr.bf16.mxu0 0
    %1774 = vmatpush1.bf16.msra.mxu0 0
    %1775 = vmatprep.mubr.bf16.mxu0 0
    %1776 = vmatmul.mubr.bf16.gmra.mrb[0].mxu0 %v1708
    %v1777 = vpop.f32.mrb[0].mxu0
    %v1778 = vadd.f32 0.0, %v1777
    %v1779 = vpop.f32.mrb[0].mxu0
    %v1780 = vpop.f32.mrb[0].mxu0
    %v1781 = vadd.f32 0.0, %v1780
    %v1782 = vpop.f32.mrb[0].mxu0
    %1783 = vmatprep.mubr.bf16.mxu0 0
    %1784 = vmatmul.mubr.bf16.gmra.mrb[0].mxu0 %v1711
    %v1785 = vpop.f32.mrb[0].mxu0
    %v1786 = vadd.f32 0.0, %v1785
    %v1787 = vpop.f32.mrb[0].mxu0
    %v1788 = vpop.f32.mrb[0].mxu0
    %v1789 = vadd.f32 0.0, %v1788
    %v1790 = vpop.f32.mrb[0].mxu0
    %1791 = vmatprep.mubr.bf16.mxu0 0
    %1792 = vmatmul.mubr.bf16.gmra.mrb[0].mxu0 %v1714
    %v1793 = vpop.f32.mrb[0].mxu0
    %v1794 = vadd.f32 0.0, %v1793
    %v1795 = vpop.f32.mrb[0].mxu0
    %v1796 = vpop.f32.mrb[0].mxu0
    %v1797 = vadd.f32 0.0, %v1796
    %v1798 = vpop.f32.mrb[0].mxu0
    %1799 = vmatprep.mubr.bf16.mxu0 0
    %1800 = vmatmul.mubr.bf16.gmra.mrb[0].mxu0 %v1717
    %v1801 = vpop.f32.mrb[0].mxu0
    %v1802 = vadd.f32 0.0, %v1801
    %v1803 = vpop.f32.mrb[0].mxu0
    %v1804 = vpop.f32.mrb[0].mxu0
    %v1805 = vadd.f32 0.0, %v1804
    %v1806 = vpop.f32.mrb[0].mxu0
    %1807 = vmatprep.mubr.bf16.mxu0 0
    %1808 = vmatmul.mubr.bf16.gmra.mrb[0].mxu0 %v1720
    %v1809 = vpop.f32.mrb[0].mxu0
    %v1810 = vadd.f32 0.0, %v1809
    %v1811 = vpop.f32.mrb[0].mxu0
    %v1812 = vpop.f32.mrb[0].mxu0
    %v1813 = vadd.f32 0.0, %v1812
    %v1814 = vpop.f32.mrb[0].mxu0
    %1815 = vmatprep.mubr.bf16.mxu0 0
    %1816 = vmatmul.mubr.bf16.gmra.mrb[0].mxu0 %v1723
    %v1817 = vpop.f32.mrb[0].mxu0
    %v1818 = vadd.f32 0.0, %v1817
    %v1819 = vpop.f32.mrb[0].mxu0
    %v1820 = vpop.f32.mrb[0].mxu0
    %v1821 = vadd.f32 0.0, %v1820
    %v1822 = vpop.f32.mrb[0].mxu0
    %1823 = vmatprep.mubr.bf16.mxu0 0
    %1824 = vmatmul.mubr.bf16.gmra.mrb[0].mxu0 %v1726
    %v1825 = vpop.f32.mrb[0].mxu0
    %v1826 = vadd.f32 0.0, %v1825
    %v1827 = vpop.f32.mrb[0].mxu0
    %v1828 = vpop.f32.mrb[0].mxu0
    %v1829 = vadd.f32 0.0, %v1828
    %v1830 = vpop.f32.mrb[0].mxu0
    %1831 = vmatprep.mubr.bf16.mxu0 0
    %1832 = vmatmul.mubr.bf16.gmra.mrb[0].mxu0 %v1729
    %v1833 = vpop.f32.mrb[0].mxu0
    %v1834 = vadd.f32 0.0, %v1833
    %v1835 = vpop.f32.mrb[0].mxu0
    %v1836 = vpop.f32.mrb[0].mxu0
    %v1837 = vadd.f32 0.0, %v1836
    %v1838 = vpop.f32.mrb[0].mxu0
    %1839 = vmatprep.mubr.bf16.mxu0 0
    %1840 = vmatmul.mubr.bf16.gmra.mrb[0].mxu0 %v1732
    %v1841 = vpop.f32.mrb[0].mxu0
    %v1842 = vadd.f32 0.0, %v1841
    %v1843 = vpop.f32.mrb[0].mxu0
    %v1844 = vpop.f32.mrb[0].mxu0
    %v1845 = vadd.f32 0.0, %v1844
    %v1846 = vpop.f32.mrb[0].mxu0
    %1847 = vmatprep.mubr.bf16.mxu0 0
    %1848 = vmatmul.mubr.bf16.gmra.mrb[0].mxu0 %v1735
    %v1849 = vpop.f32.mrb[0].mxu0
    %v1850 = vadd.f32 0.0, %v1849
    %v1851 = vpop.f32.mrb[0].mxu0
    %v1852 = vpop.f32.mrb[0].mxu0
    %v1853 = vadd.f32 0.0, %v1852
    %v1854 = vpop.f32.mrb[0].mxu0
    %1855 = vmatprep.mubr.bf16.mxu0 0
    %1856 = vmatmul.mubr.bf16.gmra.mrb[0].mxu0 %v1738
    %v1857 = vpop.f32.mrb[0].mxu0
    %v1858 = vadd.f32 0.0, %v1857
    %v1859 = vpop.f32.mrb[0].mxu0
    %v1860 = vpop.f32.mrb[0].mxu0
    %v1861 = vadd.f32 0.0, %v1860
    %v1862 = vpop.f32.mrb[0].mxu0
    %1863 = vmatprep.mubr.bf16.mxu0 0
    %1864 = vmatmul.mubr.bf16.gmra.mrb[0].mxu0 %v1741
    %v1865 = vpop.f32.mrb[0].mxu0
    %v1866 = vadd.f32 0.0, %v1865
    %v1867 = vpop.f32.mrb[0].mxu0
    %v1868 = vpop.f32.mrb[0].mxu0
    %v1869 = vpop.f32.mrb[0].mxu0
    %1870 = vdwg.mxu0
    %v1871 = vadd.f32 %v1632, %v1778
    %v1872 = vadd.f32 %v1633, %v1781
    %v1873 = vadd.f32 %v1634, %v1786
    %v1874 = vadd.f32 %v1635, %v1789
    %v1875 = vadd.f32 %v1636, %v1794
    %v1876 = vadd.f32 %v1637, %v1797
    %v1877 = vadd.f32 %v1638, %v1802
    %v1878 = vadd.f32 %v1639, %v1805
    %v1879 = vadd.f32 %v1640, %v1810
    %v1880 = vadd.f32 %v1641, %v1813
    %v1881 = vadd.f32 %v1642, %v1818
    %v1882 = vadd.f32 %v1643, %v1821
    %v1883 = vadd.f32 %v1644, %v1826
    %v1884 = vadd.f32 %v1645, %v1829
    %v1885 = vadd.f32 %v1646, %v1834
    %v1886 = vadd.f32 %v1647, %v1837
    %v1887 = vadd.f32 %v1648, %v1842
    %v1888 = vadd.f32 %v1649, %v1845
    %v1889 = vadd.f32 %v1650, %v1850
    %v1890 = vadd.f32 %v1651, %v1853
    %v1891 = vadd.f32 %v1652, %v1858
    %v1892 = vadd.f32 %v1653, %v1861
    %v1893 = vadd.f32 %v1654, %v1866
    %v1894 = vld [vmem:[%s0 + $0x28] sm:$0xff]
    %v1895 = vld [vmem:[%s0 + $0x30] sm:$0xff]
    %v1896 = vld [vmem:[%s0 + $0x38] sm:$0xff]
    %v1897 = vld [vmem:[%s0 + $0x40] sm:$0xff]
    %v1898 = vld [vmem:[%s0 + $0x48] sm:$0xff]
    %v1899 = vld [vmem:[%s0 + $0x50] sm:$0xff]
    %v1900 = vld [vmem:[%s0 + $0x58] sm:$0xff]
    %v1901 = vld [vmem:[%s0 + $0x60] sm:$0xff]
    %v1902 = vld [vmem:[%s0 + $0x68] sm:$0xff]
    %v1903 = vld [vmem:[%s0 + $0x70] sm:$0xff]
    %v1904 = vld [vmem:[%s0 + $0x78] sm:$0xff]
    %v1905 = vld [vmem:[%s0 + $0x80] sm:$0xff]
    %v1906 = vld [vmem:[%s0 + $0x88] sm:$0xff]
    %v1907 = vld [vmem:[%s0 + $0x90] sm:$0xff]
    %v1908 = vld [vmem:[%s0 + $0x98] sm:$0xff]
    %v1909 = vld [vmem:[%s0 + $0xa0] sm:$0xff]
    %v1910 = vld [vmem:[%s0 + $0xa8] sm:$0xff]
    %v1911 = vld [vmem:[%s0 + $0xb0] sm:$0xff]
    %v1912 = vld [vmem:[%s0 + $0xb8] sm:$0xff]
    %v1913 = vld [vmem:[%s0 + $0xc0] sm:$0xff]
    %v1914 = vld [vmem:[%s0 + $0xc8] sm:$0xff]
    %v1915 = vld [vmem:[%s0 + $0xd0] sm:$0xff]
    %v1916 = vld [vmem:[%s0 + $0xd8] sm:$0x1]
    %v1917 = vpack.c.bf16 %v1895, %v1894
    %v1918 = vpack.c.bf16 %v1897, %v1896
    %v1919 = vpack.c.bf16 %v1899, %v1898
    %v1920 = vpack.c.bf16 %v1901, %v1900
    %v1921 = vpack.c.bf16 %v1903, %v1902
    %v1922 = vpack.c.bf16 %v1905, %v1904
    %v1923 = vpack.c.bf16 %v1907, %v1906
    %v1924 = vpack.c.bf16 %v1909, %v1908
    %v1925 = vpack.c.bf16 %v1911, %v1910
    %v1926 = vpack.c.bf16 %v1913, %v1912
    %v1927 = vpack.c.bf16 %v1915, %v1914
    %v1928 = vpack.c.bf16 %v1916, %v1916
    %s1929 = scalar_lea.vmem %s1, 128
    %v1930 = vld [vmem:[%s1929] sm:$0xf]
    %v1931 = vld [vmem:[%s1929 + $0x4] sm:$0xf]
    %v1932 = vld [vmem:[%s1929 + $0x8] sm:$0xf]
    %v1933 = vld [vmem:[%s1929 + $0xc] sm:$0xf]
    %v1938 = vunpack.c.l.b16 %v1930
    %v1939 = vunpack.c.l.b16 %v1931
    %v1940 = vunpack.c.l.b16 %v1932
    %v1941 = vunpack.c.l.b16 %v1933
    %v1942 = vpack.c.b16 %v1939, %v1938
    %v1943 = vpack.c.b16 %v1941, %v1940
    %v1947 = vsel %vm119, %v1917, 0
    %v1950 = vsel %vm119, %v1918, 0
    %v1953 = vsel %vm119, %v1919, 0
    %v1956 = vsel %vm119, %v1920, 0
    %v1959 = vsel %vm119, %v1921, 0
    %v1962 = vsel %vm119, %v1922, 0
    %v1965 = vsel %vm119, %v1923, 0
    %v1968 = vsel %vm119, %v1924, 0
    %v1971 = vsel %vm119, %v1925, 0
    %v1974 = vsel %vm119, %v1926, 0
    %v1977 = vsel %vm119, %v1927, 0
    %v1980 = vsel %vm119, %v1928, 0
    %1982 = vmatprep.subr.bf16.mxu0 0
    %1983 = vmatpush1.bf16.msra.mxu0 %v1942
    %1984 = vmatprep.subr.bf16.mxu0 0
    %1985 = vmatpush1.bf16.msra.mxu0 %v1943
    %1986 = vmatprep.subr.bf16.mxu0 0
    %1987 = vmatpush1.bf16.msra.mxu0 0
    %1988 = vmatprep.subr.bf16.mxu0 0
    %1989 = vmatpush1.bf16.msra.mxu0 0
    %1990 = vmatprep.subr.bf16.mxu0 0
    %1991 = vmatpush1.bf16.msra.mxu0 0
    %1992 = vmatprep.subr.bf16.mxu0 0
    %1993 = vmatpush1.bf16.msra.mxu0 0
    %1994 = vmatprep.subr.bf16.mxu0 0
    %1995 = vmatpush1.bf16.msra.mxu0 0
    %1996 = vmatprep.subr.bf16.mxu0 0
    %1997 = vmatpush1.bf16.msra.mxu0 0
    %1998 = vmatprep.subr.bf16.mxu0 0
    %1999 = vmatpush1.bf16.msra.mxu0 0
    %2000 = vmatprep.subr.bf16.mxu0 0
    %2001 = vmatpush1.bf16.msra.mxu0 0
    %2002 = vmatprep.subr.bf16.mxu0 0
    %2003 = vmatpush1.bf16.msra.mxu0 0
    %2004 = vmatprep.subr.bf16.mxu0 0
    %2005 = vmatpush1.bf16.msra.mxu0 0
    %2006 = vmatprep.subr.bf16.mxu0 0
    %2007 = vmatpush1.bf16.msra.mxu0 0
    %2008 = vmatprep.subr.bf16.mxu0 0
    %2009 = vmatpush1.bf16.msra.mxu0 0
    %2010 = vmatprep.subr.bf16.mxu0 0
    %2011 = vmatpush1.bf16.msra.mxu0 0
    %2012 = vmatprep.subr.bf16.mxu0 0
    %2013 = vmatpush1.bf16.msra.mxu0 0
    %2014 = vmatprep.mubr.bf16.mxu0 0
    %2015 = vmatmul.mubr.bf16.gmra.mrb[0].mxu0 %v1947
    %v2016 = vpop.f32.mrb[0].mxu0
    %v2017 = vadd.f32 0.0, %v2016
    %v2018 = vpop.f32.mrb[0].mxu0
    %v2019 = vpop.f32.mrb[0].mxu0
    %v2020 = vadd.f32 0.0, %v2019
    %v2021 = vpop.f32.mrb[0].mxu0
    %2022 = vmatprep.mubr.bf16.mxu0 0
    %2023 = vmatmul.mubr.bf16.gmra.mrb[0].mxu0 %v1950
    %v2024 = vpop.f32.mrb[0].mxu0
    %v2025 = vadd.f32 0.0, %v2024
    %v2026 = vpop.f32.mrb[0].mxu0
    %v2027 = vpop.f32.mrb[0].mxu0
    %v2028 = vadd.f32 0.0, %v2027
    %v2029 = vpop.f32.mrb[0].mxu0
    %2030 = vmatprep.mubr.bf16.mxu0 0
    %2031 = vmatmul.mubr.bf16.gmra.mrb[0].mxu0 %v1953
    %v2032 = vpop.f32.mrb[0].mxu0
    %v2033 = vadd.f32 0.0, %v2032
    %v2034 = vpop.f32.mrb[0].mxu0
    %v2035 = vpop.f32.mrb[0].mxu0
    %v2036 = vadd.f32 0.0, %v2035
    %v2037 = vpop.f32.mrb[0].mxu0
    %2038 = vmatprep.mubr.bf16.mxu0 0
    %2039 = vmatmul.mubr.bf16.gmra.mrb[0].mxu0 %v1956
    %v2040 = vpop.f32.mrb[0].mxu0
    %v2041 = vadd.f32 0.0, %v2040
    %v2042 = vpop.f32.mrb[0].mxu0
    %v2043 = vpop.f32.mrb[0].mxu0
    %v2044 = vadd.f32 0.0, %v2043
    %v2045 = vpop.f32.mrb[0].mxu0
    %2046 = vmatprep.mubr.bf16.mxu0 0
    %2047 = vmatmul.mubr.bf16.gmra.mrb[0].mxu0 %v1959
    %v2048 = vpop.f32.mrb[0].mxu0
    %v2049 = vadd.f32 0.0, %v2048
    %v2050 = vpop.f32.mrb[0].mxu0
    %v2051 = vpop.f32.mrb[0].mxu0
    %v2052 = vadd.f32 0.0, %v2051
    %v2053 = vpop.f32.mrb[0].mxu0
    %2054 = vmatprep.mubr.bf16.mxu0 0
    %2055 = vmatmul.mubr.bf16.gmra.mrb[0].mxu0 %v1962
    %v2056 = vpop.f32.mrb[0].mxu0
    %v2057 = vadd.f32 0.0, %v2056
    %v2058 = vpop.f32.mrb[0].mxu0
    %v2059 = vpop.f32.mrb[0].mxu0
    %v2060 = vadd.f32 0.0, %v2059
    %v2061 = vpop.f32.mrb[0].mxu0
    %2062 = vmatprep.mubr.bf16.mxu0 0
    %2063 = vmatmul.mubr.bf16.gmra.mrb[0].mxu0 %v1965
    %v2064 = vpop.f32.mrb[0].mxu0
    %v2065 = vadd.f32 0.0, %v2064
    %v2066 = vpop.f32.mrb[0].mxu0
    %v2067 = vpop.f32.mrb[0].mxu0
    %v2068 = vadd.f32 0.0, %v2067
    %v2069 = vpop.f32.mrb[0].mxu0
    %2070 = vmatprep.mubr.bf16.mxu0 0
    %2071 = vmatmul.mubr.bf16.gmra.mrb[0].mxu0 %v1968
    %v2072 = vpop.f32.mrb[0].mxu0
    %v2073 = vadd.f32 0.0, %v2072
    %v2074 = vpop.f32.mrb[0].mxu0
    %v2075 = vpop.f32.mrb[0].mxu0
    %v2076 = vadd.f32 0.0, %v2075
    %v2077 = vpop.f32.mrb[0].mxu0
    %2078 = vmatprep.mubr.bf16.mxu0 0
    %2079 = vmatmul.mubr.bf16.gmra.mrb[0].mxu0 %v1971
    %v2080 = vpop.f32.mrb[0].mxu0
    %v2081 = vadd.f32 0.0, %v2080
    %v2082 = vpop.f32.mrb[0].mxu0
    %v2083 = vpop.f32.mrb[0].mxu0
    %v2084 = vadd.f32 0.0, %v2083
    %v2085 = vpop.f32.mrb[0].mxu0
    %2086 = vmatprep.mubr.bf16.mxu0 0
    %2087 = vmatmul.mubr.bf16.gmra.mrb[0].mxu0 %v1974
    %v2088 = vpop.f32.mrb[0].mxu0
    %v2089 = vadd.f32 0.0, %v2088
    %v2090 = vpop.f32.mrb[0].mxu0
    %v2091 = vpop.f32.mrb[0].mxu0
    %v2092 = vadd.f32 0.0, %v2091
    %v2093 = vpop.f32.mrb[0].mxu0
    %2094 = vmatprep.mubr.bf16.mxu0 0
    %2095 = vmatmul.mubr.bf16.gmra.mrb[0].mxu0 %v1977
    %v2096 = vpop.f32.mrb[0].mxu0
    %v2097 = vadd.f32 0.0, %v2096
    %v2098 = vpop.f32.mrb[0].mxu0
    %v2099 = vpop.f32.mrb[0].mxu0
    %v2100 = vadd.f32 0.0, %v2099
    %v2101 = vpop.f32.mrb[0].mxu0
    %2102 = vmatprep.mubr.bf16.mxu0 0
    %2103 = vmatmul.mubr.bf16.gmra.mrb[0].mxu0 %v1980
    %v2104 = vpop.f32.mrb[0].mxu0
    %v2105 = vadd.f32 0.0, %v2104
    %v2106 = vpop.f32.mrb[0].mxu0
    %v2107 = vpop.f32.mrb[0].mxu0
    %v2108 = vpop.f32.mrb[0].mxu0
    %2109 = vdwg.mxu0
    %v2110 = vadd.f32 %v1871, %v2017
    %v2111 = vadd.f32 %v1872, %v2020
    %v2112 = vadd.f32 %v1873, %v2025
    %v2113 = vadd.f32 %v1874, %v2028
    %v2114 = vadd.f32 %v1875, %v2033
    %v2115 = vadd.f32 %v1876, %v2036
    %v2116 = vadd.f32 %v1877, %v2041
    %v2117 = vadd.f32 %v1878, %v2044
    %v2118 = vadd.f32 %v1879, %v2049
    %v2119 = vadd.f32 %v1880, %v2052
    %v2120 = vadd.f32 %v1881, %v2057
    %v2121 = vadd.f32 %v1882, %v2060
    %v2122 = vadd.f32 %v1883, %v2065
    %v2123 = vadd.f32 %v1884, %v2068
    %v2124 = vadd.f32 %v1885, %v2073
    %v2125 = vadd.f32 %v1886, %v2076
    %v2126 = vadd.f32 %v1887, %v2081
    %v2127 = vadd.f32 %v1888, %v2084
    %v2128 = vadd.f32 %v1889, %v2089
    %v2129 = vadd.f32 %v1890, %v2092
    %v2130 = vadd.f32 %v1891, %v2097
    %v2131 = vadd.f32 %v1892, %v2100
    %v2132 = vadd.f32 %v1893, %v2105
    %2133 = vst.msk [vmem:[#allocation2] sm:$0xff] %vm119, %v2110
    %2134 = vst.msk [vmem:[#allocation2 + $0x8] sm:$0xff] %vm119, %v2111
    %2135 = vst.msk [vmem:[#allocation2 + $0x10] sm:$0xff] %vm119, %v2112
    %2136 = vst.msk [vmem:[#allocation2 + $0x18] sm:$0xff] %vm119, %v2113
    %2137 = vst.msk [vmem:[#allocation2 + $0x20] sm:$0xff] %vm119, %v2114
    %2138 = vst.msk [vmem:[#allocation2 + $0x28] sm:$0xff] %vm119, %v2115
    %2139 = vst.msk [vmem:[#allocation2 + $0x30] sm:$0xff] %vm119, %v2116
    %2140 = vst.msk [vmem:[#allocation2 + $0x38] sm:$0xff] %vm119, %v2117
    %2141 = vst.msk [vmem:[#allocation2 + $0x40] sm:$0xff] %vm119, %v2118
    %2142 = vst.msk [vmem:[#allocation2 + $0x48] sm:$0xff] %vm119, %v2119
    %2143 = vst.msk [vmem:[#allocation2 + $0x50] sm:$0xff] %vm119, %v2120
    %2144 = vst.msk [vmem:[#allocation2 + $0x58] sm:$0xff] %vm119, %v2121
    %2145 = vst.msk [vmem:[#allocation2 + $0x60] sm:$0xff] %vm119, %v2122
    %2146 = vst.msk [vmem:[#allocation2 + $0x68] sm:$0xff] %vm119, %v2123
    %2147 = vst.msk [vmem:[#allocation2 + $0x70] sm:$0xff] %vm119, %v2124
    %2148 = vst.msk [vmem:[#allocation2 + $0x78] sm:$0xff] %vm119, %v2125
    %2149 = vst.msk [vmem:[#allocation2 + $0x80] sm:$0xff] %vm119, %v2126
    %2150 = vst.msk [vmem:[#allocation2 + $0x88] sm:$0xff] %vm119, %v2127
    %2151 = vst.msk [vmem:[#allocation2 + $0x90] sm:$0xff] %vm119, %v2128
    %2152 = vst.msk [vmem:[#allocation2 + $0x98] sm:$0xff] %vm119, %v2129
    %2153 = vst.msk [vmem:[#allocation2 + $0xa0] sm:$0xff] %vm119, %v2130
    %2154 = vst.msk [vmem:[#allocation2 + $0xa8] sm:$0xff] %vm119, %v2131
    %vm2155 = vcmask 253952
    %2156 = vst.msk [vmem:[#allocation2 + $0xb0] sm:$0x1] %vm2155, %v2132
    %v2157 = vld [vmem:[#allocation2] sm:$0x1]
    %v2158 = vld [vmem:[#allocation2 + $0x1] sm:$0x1]
    %v2159 = vld [vmem:[#allocation2 + $0xf] sm:$0x1]
    %v2160 = vld [vmem:[#allocation2 + $0x10] sm:$0x1]
    %v2161 = vmax.f32 %v2157, %v2158
    %v2162 = vmax.f32 %v2159, %v2160
    %v2163 = vmax.f32 %v2161, %v2162
    %v2164 = vlaneseq
    %vm2165 = vcmp.ge.s32.totalorder %v2164, 0
    %vm2166 = vcmp.lt.s32.totalorder %v2164, 32
    %vm2167 = vmand %vm2165, %vm2166
    %2168 = vst.msk [vmem:[#allocation3] sm:$0x1] %vm2167, %v2163
    %v2169 = vld [vmem:[#allocation2 + $0x2] sm:$0x1]
    %v2170 = vld [vmem:[#allocation2 + $0x3] sm:$0x1]
    %v2171 = vld [vmem:[#allocation2 + $0x11] sm:$0x1]
    %v2172 = vld [vmem:[#allocation2 + $0x12] sm:$0x1]
    %v2173 = vmax.f32 %v2169, %v2170
    %v2174 = vmax.f32 %v2171, %v2172
    %v2175 = vmax.f32 %v2173, %v2174
    %v2178 = vunpack.c.l.s4 1966171168
    %v2179 = vunpack.c.0.s8 %v2178
    %v2180 = vlaneseq
    %v2181 = vshrl.u32 %v2180, 7
    %v2182 = vsub.s32 %v2179, %v2181
    %v2183 = vrot.slane %v2175, %v2182
    %v2185 = vunpack.c.l.s4 1966171168
    %v2186 = vunpack.c.0.s8 %v2185
    %v2187 = vlaneseq
    %v2188 = vshrl.u32 %v2187, 7
    %v2189 = vsub.s32 %v2186, %v2188
    %v2190 = vrot.slane %v2183, %v2189
    %2191 = vrot.lane.b32.xlu0 %v2190, 32
    %v2192 = vpop.permute.xlu0 %2191
    %vm2194 = vcmp.ge.s32.totalorder %v2164, 32
    %vm2195 = vcmp.lt.s32.totalorder %v2164, 64
    %vm2196 = vmand %vm2194, %vm2195
    %2197 = vst.msk [vmem:[#allocation3] sm:$0x1] %vm2196, %v2192
    %v2198 = vld [vmem:[#allocation2 + $0x4] sm:$0x1]
    %v2199 = vld [vmem:[#allocation2 + $0x5] sm:$0x1]
    %v2200 = vld [vmem:[#allocation2 + $0x13] sm:$0x1]
    %v2201 = vld [vmem:[#allocation2 + $0x14] sm:$0x1]
    %v2202 = vmax.f32 %v2198, %v2199
    %v2203 = vmax.f32 %v2200, %v2201
    %v2204 = vmax.f32 %v2202, %v2203
    %v2207 = vunpack.c.l.s4 1966171168
    %v2208 = vunpack.c.0.s8 %v2207
    %v2209 = vlaneseq
    %v2210 = vshrl.u32 %v2209, 7
    %v2211 = vsub.s32 %v2208, %v2210
    %v2212 = vrot.slane %v2204, %v2211
    %v2214 = vunpack.c.l.s4 1966171168
    %v2215 = vunpack.c.0.s8 %v2214
    %v2216 = vlaneseq
    %v2217 = vshrl.u32 %v2216, 7
    %v2218 = vsub.s32 %v2215, %v2217
    %v2219 = vrot.slane %v2212, %v2218
    %2220 = vrot.lane.b32.xlu0 %v2219, 64
    %v2221 = vpop.permute.xlu0 %2220
    %vm2223 = vcmp.ge.s32.totalorder %v2164, 64
    %vm2224 = vcmp.lt.s32.totalorder %v2164, 96
    %vm2225 = vmand %vm2223, %vm2224
    %2226 = vst.msk [vmem:[#allocation3] sm:$0x1] %vm2225, %v2221
    %v2227 = vld [vmem:[#allocation2 + $0x6] sm:$0x1]
    %v2228 = vld [vmem:[#allocation2 + $0x7] sm:$0x1]
    %v2229 = vld [vmem:[#allocation2 + $0x15] sm:$0x1]
    %v2230 = vld [vmem:[#allocation2 + $0x16] sm:$0x1]
    %v2231 = vmax.f32 %v2227, %v2228
    %v2232 = vmax.f32 %v2229, %v2230
    %v2233 = vmax.f32 %v2231, %v2232
    %v2236 = vunpack.c.l.s4 1966171168
    %v2237 = vunpack.c.0.s8 %v2236
    %v2238 = vlaneseq
    %v2239 = vshrl.u32 %v2238, 7
    %v2240 = vsub.s32 %v2237, %v2239
    %v2241 = vrot.slane %v2233, %v2240
    %v2243 = vunpack.c.l.s4 1966171168
    %v2244 = vunpack.c.0.s8 %v2243
    %v2245 = vlaneseq
    %v2246 = vshrl.u32 %v2245, 7
    %v2247 = vsub.s32 %v2244, %v2246
    %v2248 = vrot.slane %v2241, %v2247
    %2249 = vrot.lane.b32.xlu0 %v2248, 96
    %v2250 = vpop.permute.xlu0 %2249
    %vm2252 = vcmp.ge.s32.totalorder %v2164, 96
    %vm2253 = vcmp.lt.s32.totalorder %v2164, 128
    %vm2254 = vmand %vm2252, %vm2253
    %2255 = vst.msk [vmem:[#allocation3] sm:$0x1] %vm2254, %v2250
    %v2256 = vld [vmem:[#allocation2 + $0x8] sm:$0x1]
    %v2257 = vld [vmem:[#allocation2 + $0x9] sm:$0x1]
    %v2258 = vld [vmem:[#allocation2 + $0x17] sm:$0x1]
    %v2259 = vld [vmem:[#allocation2 + $0x18] sm:$0x1]
    %v2260 = vmax.f32 %v2256, %v2257
    %v2261 = vmax.f32 %v2258, %v2259
    %v2262 = vmax.f32 %v2260, %v2261
    %2263 = vst.msk [vmem:[#allocation3 + $0x1] sm:$0x1] %vm2167, %v2262
    %v2264 = vld [vmem:[#allocation2 + $0xa] sm:$0x1]
    %v2265 = vld [vmem:[#allocation2 + $0xb] sm:$0x1]
    %v2266 = vld [vmem:[#allocation2 + $0x19] sm:$0x1]
    %v2267 = vld [vmem:[#allocation2 + $0x1a] sm:$0x1]
    %v2268 = vmax.f32 %v2264, %v2265
    %v2269 = vmax.f32 %v2266, %v2267
    %v2270 = vmax.f32 %v2268, %v2269
    %v2273 = vunpack.c.l.s4 1966171168
    %v2274 = vunpack.c.0.s8 %v2273
    %v2275 = vlaneseq
    %v2276 = vshrl.u32 %v2275, 7
    %v2277 = vsub.s32 %v2274, %v2276
    %v2278 = vrot.slane %v2270, %v2277
    %v2280 = vunpack.c.l.s4 1966171168
    %v2281 = vunpack.c.0.s8 %v2280
    %v2282 = vlaneseq
    %v2283 = vshrl.u32 %v2282, 7
    %v2284 = vsub.s32 %v2281, %v2283
    %v2285 = vrot.slane %v2278, %v2284
    %2286 = vrot.lane.b32.xlu0 %v2285, 32
    %v2287 = vpop.permute.xlu0 %2286
    %2289 = vst.msk [vmem:[#allocation3 + $0x1] sm:$0x1] %vm2196, %v2287
    %v2290 = vld [vmem:[#allocation2 + $0x1e] sm:$0x1]
    %v2291 = vld [vmem:[#allocation2 + $0x1f] sm:$0x1]
    %v2292 = vld [vmem:[#allocation2 + $0x2d] sm:$0x1]
    %v2293 = vld [vmem:[#allocation2 + $0x2e] sm:$0x1]
    %v2294 = vmax.f32 %v2290, %v2291
    %v2295 = vmax.f32 %v2292, %v2293
    %v2296 = vmax.f32 %v2294, %v2295
    %v2299 = vunpack.c.l.s4 1966171168
    %v2300 = vunpack.c.0.s8 %v2299
    %v2301 = vlaneseq
    %v2302 = vshrl.u32 %v2301, 7
    %v2303 = vsub.s32 %v2300, %v2302
    %v2304 = vrot.slane %v2296, %v2303
    %v2306 = vunpack.c.l.s4 1966171168
    %v2307 = vunpack.c.0.s8 %v2306
    %v2308 = vlaneseq
    %v2309 = vshrl.u32 %v2308, 7
    %v2310 = vsub.s32 %v2307, %v2309
    %v2311 = vrot.slane %v2304, %v2310
    %2312 = vrot.lane.b32.xlu0 %v2311, 64
    %v2313 = vpop.permute.xlu0 %2312
    %2315 = vst.msk [vmem:[#allocation3 + $0x1] sm:$0x1] %vm2225, %v2313
    %v2316 = vld [vmem:[#allocation2 + $0x20] sm:$0x1]
    %v2317 = vld [vmem:[#allocation2 + $0x21] sm:$0x1]
    %v2318 = vld [vmem:[#allocation2 + $0x2f] sm:$0x1]
    %v2319 = vld [vmem:[#allocation2 + $0x30] sm:$0x1]
    %v2320 = vmax.f32 %v2316, %v2317
    %v2321 = vmax.f32 %v2318, %v2319
    %v2322 = vmax.f32 %v2320, %v2321
    %v2325 = vunpack.c.l.s4 1966171168
    %v2326 = vunpack.c.0.s8 %v2325
    %v2327 = vlaneseq
    %v2328 = vshrl.u32 %v2327, 7
    %v2329 = vsub.s32 %v2326, %v2328
    %v2330 = vrot.slane %v2322, %v2329
    %v2332 = vunpack.c.l.s4 1966171168
    %v2333 = vunpack.c.0.s8 %v2332
    %v2334 = vlaneseq
    %v2335 = vshrl.u32 %v2334, 7
    %v2336 = vsub.s32 %v2333, %v2335
    %v2337 = vrot.slane %v2330, %v2336
    %2338 = vrot.lane.b32.xlu0 %v2337, 96
    %v2339 = vpop.permute.xlu0 %2338
    %2341 = vst.msk [vmem:[#allocation3 + $0x1] sm:$0x1] %vm2254, %v2339
    %v2342 = vld [vmem:[#allocation2 + $0x22] sm:$0x1]
    %v2343 = vld [vmem:[#allocation2 + $0x23] sm:$0x1]
    %v2344 = vld [vmem:[#allocation2 + $0x31] sm:$0x1]
    %v2345 = vld [vmem:[#allocation2 + $0x32] sm:$0x1]
    %v2346 = vmax.f32 %v2342, %v2343
    %v2347 = vmax.f32 %v2344, %v2345
    %v2348 = vmax.f32 %v2346, %v2347
    %2349 = vst.msk [vmem:[#allocation3 + $0x2] sm:$0x1] %vm2167, %v2348
    %v2350 = vld [vmem:[#allocation2 + $0x24] sm:$0x1]
    %v2351 = vld [vmem:[#allocation2 + $0x25] sm:$0x1]
    %v2352 = vld [vmem:[#allocation2 + $0x33] sm:$0x1]
    %v2353 = vld [vmem:[#allocation2 + $0x34] sm:$0x1]
    %v2354 = vmax.f32 %v2350, %v2351
    %v2355 = vmax.f32 %v2352, %v2353
    %v2356 = vmax.f32 %v2354, %v2355
    %v2359 = vunpack.c.l.s4 1966171168
    %v2360 = vunpack.c.0.s8 %v2359
    %v2361 = vlaneseq
    %v2362 = vshrl.u32 %v2361, 7
    %v2363 = vsub.s32 %v2360, %v2362
    %v2364 = vrot.slane %v2356, %v2363
    %v2366 = vunpack.c.l.s4 1966171168
    %v2367 = vunpack.c.0.s8 %v2366
    %v2368 = vlaneseq
    %v2369 = vshrl.u32 %v2368, 7
    %v2370 = vsub.s32 %v2367, %v2369
    %v2371 = vrot.slane %v2364, %v2370
    %2372 = vrot.lane.b32.xlu0 %v2371, 32
    %v2373 = vpop.permute.xlu0 %2372
    %2375 = vst.msk [vmem:[#allocation3 + $0x2] sm:$0x1] %vm2196, %v2373
    %v2376 = vld [vmem:[#allocation2 + $0x26] sm:$0x1]
    %v2377 = vld [vmem:[#allocation2 + $0x27] sm:$0x1]
    %v2378 = vld [vmem:[#allocation2 + $0x35] sm:$0x1]
    %v2379 = vld [vmem:[#allocation2 + $0x36] sm:$0x1]
    %v2380 = vmax.f32 %v2376, %v2377
    %v2381 = vmax.f32 %v2378, %v2379
    %v2382 = vmax.f32 %v2380, %v2381
    %v2385 = vunpack.c.l.s4 1966171168
    %v2386 = vunpack.c.0.s8 %v2385
    %v2387 = vlaneseq
    %v2388 = vshrl.u32 %v2387, 7
    %v2389 = vsub.s32 %v2386, %v2388
    %v2390 = vrot.slane %v2382, %v2389
    %v2392 = vunpack.c.l.s4 1966171168
    %v2393 = vunpack.c.0.s8 %v2392
    %v2394 = vlaneseq
    %v2395 = vshrl.u32 %v2394, 7
    %v2396 = vsub.s32 %v2393, %v2395
    %v2397 = vrot.slane %v2390, %v2396
    %2398 = vrot.lane.b32.xlu0 %v2397, 64
    %v2399 = vpop.permute.xlu0 %2398
    %2401 = vst.msk [vmem:[#allocation3 + $0x2] sm:$0x1] %vm2225, %v2399
    %v2402 = vld [vmem:[#allocation2 + $0x28] sm:$0x1]
    %v2403 = vld [vmem:[#allocation2 + $0x29] sm:$0x1]
    %v2404 = vld [vmem:[#allocation2 + $0x37] sm:$0x1]
    %v2405 = vld [vmem:[#allocation2 + $0x38] sm:$0x1]
    %v2406 = vmax.f32 %v2402, %v2403
    %v2407 = vmax.f32 %v2404, %v2405
    %v2408 = vmax.f32 %v2406, %v2407
    %v2411 = vunpack.c.l.s4 1966171168
    %v2412 = vunpack.c.0.s8 %v2411
    %v2413 = vlaneseq
    %v2414 = vshrl.u32 %v2413, 7
    %v2415 = vsub.s32 %v2412, %v2414
    %v2416 = vrot.slane %v2408, %v2415
    %v2418 = vunpack.c.l.s4 1966171168
    %v2419 = vunpack.c.0.s8 %v2418
    %v2420 = vlaneseq
    %v2421 = vshrl.u32 %v2420, 7
    %v2422 = vsub.s32 %v2419, %v2421
    %v2423 = vrot.slane %v2416, %v2422
    %2424 = vrot.lane.b32.xlu0 %v2423, 96
    %v2425 = vpop.permute.xlu0 %2424
    %2427 = vst.msk [vmem:[#allocation3 + $0x2] sm:$0x1] %vm2254, %v2425
    %v2428 = vld [vmem:[#allocation2 + $0x3c] sm:$0x1]
    %v2429 = vld [vmem:[#allocation2 + $0x3d] sm:$0x1]
    %v2430 = vld [vmem:[#allocation2 + $0x4b] sm:$0x1]
    %v2431 = vld [vmem:[#allocation2 + $0x4c] sm:$0x1]
    %v2432 = vmax.f32 %v2428, %v2429
    %v2433 = vmax.f32 %v2430, %v2431
    %v2434 = vmax.f32 %v2432, %v2433
    %2435 = vst.msk [vmem:[#allocation3 + $0x3] sm:$0x1] %vm2167, %v2434
    %v2436 = vld [vmem:[#allocation2 + $0x3e] sm:$0x1]
    %v2437 = vld [vmem:[#allocation2 + $0x3f] sm:$0x1]
    %v2438 = vld [vmem:[#allocation2 + $0x4d] sm:$0x1]
    %v2439 = vld [vmem:[#allocation2 + $0x4e] sm:$0x1]
    %v2440 = vmax.f32 %v2436, %v2437
    %v2441 = vmax.f32 %v2438, %v2439
    %v2442 = vmax.f32 %v2440, %v2441
    %v2445 = vunpack.c.l.s4 1966171168
    %v2446 = vunpack.c.0.s8 %v2445
    %v2447 = vlaneseq
    %v2448 = vshrl.u32 %v2447, 7
    %v2449 = vsub.s32 %v2446, %v2448
    %v2450 = vrot.slane %v2442, %v2449
    %v2452 = vunpack.c.l.s4 1966171168
    %v2453 = vunpack.c.0.s8 %v2452
    %v2454 = vlaneseq
    %v2455 = vshrl.u32 %v2454, 7
    %v2456 = vsub.s32 %v2453, %v2455
    %v2457 = vrot.slane %v2450, %v2456
    %2458 = vrot.lane.b32.xlu0 %v2457, 32
    %v2459 = vpop.permute.xlu0 %2458
    %2461 = vst.msk [vmem:[#allocation3 + $0x3] sm:$0x1] %vm2196, %v2459
    %v2462 = vld [vmem:[#allocation2 + $0x40] sm:$0x1]
    %v2463 = vld [vmem:[#allocation2 + $0x41] sm:$0x1]
    %v2464 = vld [vmem:[#allocation2 + $0x4f] sm:$0x1]
    %v2465 = vld [vmem:[#allocation2 + $0x50] sm:$0x1]
    %v2466 = vmax.f32 %v2462, %v2463
    %v2467 = vmax.f32 %v2464, %v2465
    %v2468 = vmax.f32 %v2466, %v2467
    %v2471 = vunpack.c.l.s4 1966171168
    %v2472 = vunpack.c.0.s8 %v2471
    %v2473 = vlaneseq
    %v2474 = vshrl.u32 %v2473, 7
    %v2475 = vsub.s32 %v2472, %v2474
    %v2476 = vrot.slane %v2468, %v2475
    %v2478 = vunpack.c.l.s4 1966171168
    %v2479 = vunpack.c.0.s8 %v2478
    %v2480 = vlaneseq
    %v2481 = vshrl.u32 %v2480, 7
    %v2482 = vsub.s32 %v2479, %v2481
    %v2483 = vrot.slane %v2476, %v2482
    %2484 = vrot.lane.b32.xlu0 %v2483, 64
    %v2485 = vpop.permute.xlu0 %2484
    %2487 = vst.msk [vmem:[#allocation3 + $0x3] sm:$0x1] %vm2225, %v2485
    %v2488 = vld [vmem:[#allocation2 + $0x42] sm:$0x1]
    %v2489 = vld [vmem:[#allocation2 + $0x43] sm:$0x1]
    %v2490 = vld [vmem:[#allocation2 + $0x51] sm:$0x1]
    %v2491 = vld [vmem:[#allocation2 + $0x52] sm:$0x1]
    %v2492 = vmax.f32 %v2488, %v2489
    %v2493 = vmax.f32 %v2490, %v2491
    %v2494 = vmax.f32 %v2492, %v2493
    %v2497 = vunpack.c.l.s4 1966171168
    %v2498 = vunpack.c.0.s8 %v2497
    %v2499 = vlaneseq
    %v2500 = vshrl.u32 %v2499, 7
    %v2501 = vsub.s32 %v2498, %v2500
    %v2502 = vrot.slane %v2494, %v2501
    %v2504 = vunpack.c.l.s4 1966171168
    %v2505 = vunpack.c.0.s8 %v2504
    %v2506 = vlaneseq
    %v2507 = vshrl.u32 %v2506, 7
    %v2508 = vsub.s32 %v2505, %v2507
    %v2509 = vrot.slane %v2502, %v2508
    %2510 = vrot.lane.b32.xlu0 %v2509, 96
    %v2511 = vpop.permute.xlu0 %2510
    %2513 = vst.msk [vmem:[#allocation3 + $0x3] sm:$0x1] %vm2254, %v2511
    %v2514 = vld [vmem:[#allocation2 + $0x44] sm:$0x1]
    %v2515 = vld [vmem:[#allocation2 + $0x45] sm:$0x1]
    %v2516 = vld [vmem:[#allocation2 + $0x53] sm:$0x1]
    %v2517 = vld [vmem:[#allocation2 + $0x54] sm:$0x1]
    %v2518 = vmax.f32 %v2514, %v2515
    %v2519 = vmax.f32 %v2516, %v2517
    %v2520 = vmax.f32 %v2518, %v2519
    %2521 = vst.msk [vmem:[#allocation3 + $0x4] sm:$0x1] %vm2167, %v2520
    %v2522 = vld [vmem:[#allocation2 + $0x46] sm:$0x1]
    %v2523 = vld [vmem:[#allocation2 + $0x47] sm:$0x1]
    %v2524 = vld [vmem:[#allocation2 + $0x55] sm:$0x1]
    %v2525 = vld [vmem:[#allocation2 + $0x56] sm:$0x1]
    %v2526 = vmax.f32 %v2522, %v2523
    %v2527 = vmax.f32 %v2524, %v2525
    %v2528 = vmax.f32 %v2526, %v2527
    %v2531 = vunpack.c.l.s4 1966171168
    %v2532 = vunpack.c.0.s8 %v2531
    %v2533 = vlaneseq
    %v2534 = vshrl.u32 %v2533, 7
    %v2535 = vsub.s32 %v2532, %v2534
    %v2536 = vrot.slane %v2528, %v2535
    %v2538 = vunpack.c.l.s4 1966171168
    %v2539 = vunpack.c.0.s8 %v2538
    %v2540 = vlaneseq
    %v2541 = vshrl.u32 %v2540, 7
    %v2542 = vsub.s32 %v2539, %v2541
    %v2543 = vrot.slane %v2536, %v2542
    %2544 = vrot.lane.b32.xlu0 %v2543, 32
    %v2545 = vpop.permute.xlu0 %2544
    %2547 = vst.msk [vmem:[#allocation3 + $0x4] sm:$0x1] %vm2196, %v2545
    %v2548 = vld [vmem:[#allocation2 + $0x5a] sm:$0x1]
    %v2549 = vld [vmem:[#allocation2 + $0x5b] sm:$0x1]
    %v2550 = vld [vmem:[#allocation2 + $0x69] sm:$0x1]
    %v2551 = vld [vmem:[#allocation2 + $0x6a] sm:$0x1]
    %v2552 = vmax.f32 %v2548, %v2549
    %v2553 = vmax.f32 %v2550, %v2551
    %v2554 = vmax.f32 %v2552, %v2553
    %v2557 = vunpack.c.l.s4 1966171168
    %v2558 = vunpack.c.0.s8 %v2557
    %v2559 = vlaneseq
    %v2560 = vshrl.u32 %v2559, 7
    %v2561 = vsub.s32 %v2558, %v2560
    %v2562 = vrot.slane %v2554, %v2561
    %v2564 = vunpack.c.l.s4 1966171168
    %v2565 = vunpack.c.0.s8 %v2564
    %v2566 = vlaneseq
    %v2567 = vshrl.u32 %v2566, 7
    %v2568 = vsub.s32 %v2565, %v2567
    %v2569 = vrot.slane %v2562, %v2568
    %2570 = vrot.lane.b32.xlu0 %v2569, 64
    %v2571 = vpop.permute.xlu0 %2570
    %2573 = vst.msk [vmem:[#allocation3 + $0x4] sm:$0x1] %vm2225, %v2571
    %v2574 = vld [vmem:[#allocation2 + $0x5c] sm:$0x1]
    %v2575 = vld [vmem:[#allocation2 + $0x5d] sm:$0x1]
    %v2576 = vld [vmem:[#allocation2 + $0x6b] sm:$0x1]
    %v2577 = vld [vmem:[#allocation2 + $0x6c] sm:$0x1]
    %v2578 = vmax.f32 %v2574, %v2575
    %v2579 = vmax.f32 %v2576, %v2577
    %v2580 = vmax.f32 %v2578, %v2579
    %v2583 = vunpack.c.l.s4 1966171168
    %v2584 = vunpack.c.0.s8 %v2583
    %v2585 = vlaneseq
    %v2586 = vshrl.u32 %v2585, 7
    %v2587 = vsub.s32 %v2584, %v2586
    %v2588 = vrot.slane %v2580, %v2587
    %v2590 = vunpack.c.l.s4 1966171168
    %v2591 = vunpack.c.0.s8 %v2590
    %v2592 = vlaneseq
    %v2593 = vshrl.u32 %v2592, 7
    %v2594 = vsub.s32 %v2591, %v2593
    %v2595 = vrot.slane %v2588, %v2594
    %2596 = vrot.lane.b32.xlu0 %v2595, 96
    %v2597 = vpop.permute.xlu0 %2596
    %2599 = vst.msk [vmem:[#allocation3 + $0x4] sm:$0x1] %vm2254, %v2597
    %v2600 = vld [vmem:[#allocation2 + $0x5e] sm:$0x1]
    %v2601 = vld [vmem:[#allocation2 + $0x5f] sm:$0x1]
    %v2602 = vld [vmem:[#allocation2 + $0x6d] sm:$0x1]
    %v2603 = vld [vmem:[#allocation2 + $0x6e] sm:$0x1]
    %v2604 = vmax.f32 %v2600, %v2601
    %v2605 = vmax.f32 %v2602, %v2603
    %v2606 = vmax.f32 %v2604, %v2605
    %2607 = vst.msk [vmem:[#allocation3 + $0x5] sm:$0x1] %vm2167, %v2606
    %v2608 = vld [vmem:[#allocation2 + $0x60] sm:$0x1]
    %v2609 = vld [vmem:[#allocation2 + $0x61] sm:$0x1]
    %v2610 = vld [vmem:[#allocation2 + $0x6f] sm:$0x1]
    %v2611 = vld [vmem:[#allocation2 + $0x70] sm:$0x1]
    %v2612 = vmax.f32 %v2608, %v2609
    %v2613 = vmax.f32 %v2610, %v2611
    %v2614 = vmax.f32 %v2612, %v2613
    %v2617 = vunpack.c.l.s4 1966171168
    %v2618 = vunpack.c.0.s8 %v2617
    %v2619 = vlaneseq
    %v2620 = vshrl.u32 %v2619, 7
    %v2621 = vsub.s32 %v2618, %v2620
    %v2622 = vrot.slane %v2614, %v2621
    %v2624 = vunpack.c.l.s4 1966171168
    %v2625 = vunpack.c.0.s8 %v2624
    %v2626 = vlaneseq
    %v2627 = vshrl.u32 %v2626, 7
    %v2628 = vsub.s32 %v2625, %v2627
    %v2629 = vrot.slane %v2622, %v2628
    %2630 = vrot.lane.b32.xlu0 %v2629, 32
    %v2631 = vpop.permute.xlu0 %2630
    %2633 = vst.msk [vmem:[#allocation3 + $0x5] sm:$0x1] %vm2196, %v2631
    %v2634 = vld [vmem:[#allocation2 + $0x62] sm:$0x1]
    %v2635 = vld [vmem:[#allocation2 + $0x63] sm:$0x1]
    %v2636 = vld [vmem:[#allocation2 + $0x71] sm:$0x1]
    %v2637 = vld [vmem:[#allocation2 + $0x72] sm:$0x1]
    %v2638 = vmax.f32 %v2634, %v2635
    %v2639 = vmax.f32 %v2636, %v2637
    %v2640 = vmax.f32 %v2638, %v2639
    %v2643 = vunpack.c.l.s4 1966171168
    %v2644 = vunpack.c.0.s8 %v2643
    %v2645 = vlaneseq
    %v2646 = vshrl.u32 %v2645, 7
    %v2647 = vsub.s32 %v2644, %v2646
    %v2648 = vrot.slane %v2640, %v2647
    %v2650 = vunpack.c.l.s4 1966171168
    %v2651 = vunpack.c.0.s8 %v2650
    %v2652 = vlaneseq
    %v2653 = vshrl.u32 %v2652, 7
    %v2654 = vsub.s32 %v2651, %v2653
    %v2655 = vrot.slane %v2648, %v2654
    %2656 = vrot.lane.b32.xlu0 %v2655, 64
    %v2657 = vpop.permute.xlu0 %2656
    %2659 = vst.msk [vmem:[#allocation3 + $0x5] sm:$0x1] %vm2225, %v2657
    %v2660 = vld [vmem:[#allocation2 + $0x64] sm:$0x1]
    %v2661 = vld [vmem:[#allocation2 + $0x65] sm:$0x1]
    %v2662 = vld [vmem:[#allocation2 + $0x73] sm:$0x1]
    %v2663 = vld [vmem:[#allocation2 + $0x74] sm:$0x1]
    %v2664 = vmax.f32 %v2660, %v2661
    %v2665 = vmax.f32 %v2662, %v2663
    %v2666 = vmax.f32 %v2664, %v2665
    %v2669 = vunpack.c.l.s4 1966171168
    %v2670 = vunpack.c.0.s8 %v2669
    %v2671 = vlaneseq
    %v2672 = vshrl.u32 %v2671, 7
    %v2673 = vsub.s32 %v2670, %v2672
    %v2674 = vrot.slane %v2666, %v2673
    %v2676 = vunpack.c.l.s4 1966171168
    %v2677 = vunpack.c.0.s8 %v2676
    %v2678 = vlaneseq
    %v2679 = vshrl.u32 %v2678, 7
    %v2680 = vsub.s32 %v2677, %v2679
    %v2681 = vrot.slane %v2674, %v2680
    %2682 = vrot.lane.b32.xlu0 %v2681, 96
    %v2683 = vpop.permute.xlu0 %2682
    %2685 = vst.msk [vmem:[#allocation3 + $0x5] sm:$0x1] %vm2254, %v2683
    %v2686 = vld [vmem:[#allocation2 + $0x78] sm:$0x1]
    %v2687 = vld [vmem:[#allocation2 + $0x79] sm:$0x1]
    %v2688 = vld [vmem:[#allocation2 + $0x87] sm:$0x1]
    %v2689 = vld [vmem:[#allocation2 + $0x88] sm:$0x1]
    %v2690 = vmax.f32 %v2686, %v2687
    %v2691 = vmax.f32 %v2688, %v2689
    %v2692 = vmax.f32 %v2690, %v2691
    %2693 = vst.msk [vmem:[#allocation3 + $0x6] sm:$0x1] %vm2167, %v2692
    %v2694 = vld [vmem:[#allocation2 + $0x7a] sm:$0x1]
    %v2695 = vld [vmem:[#allocation2 + $0x7b] sm:$0x1]
    %v2696 = vld [vmem:[#allocation2 + $0x89] sm:$0x1]
    %v2697 = vld [vmem:[#allocation2 + $0x8a] sm:$0x1]
    %v2698 = vmax.f32 %v2694, %v2695
    %v2699 = vmax.f32 %v2696, %v2697
    %v2700 = vmax.f32 %v2698, %v2699
    %v2703 = vunpack.c.l.s4 1966171168
    %v2704 = vunpack.c.0.s8 %v2703
    %v2705 = vlaneseq
    %v2706 = vshrl.u32 %v2705, 7
    %v2707 = vsub.s32 %v2704, %v2706
    %v2708 = vrot.slane %v2700, %v2707
    %v2710 = vunpack.c.l.s4 1966171168
    %v2711 = vunpack.c.0.s8 %v2710
    %v2712 = vlaneseq
    %v2713 = vshrl.u32 %v2712, 7
    %v2714 = vsub.s32 %v2711, %v2713
    %v2715 = vrot.slane %v2708, %v2714
    %2716 = vrot.lane.b32.xlu0 %v2715, 32
    %v2717 = vpop.permute.xlu0 %2716
    %2719 = vst.msk [vmem:[#allocation3 + $0x6] sm:$0x1] %vm2196, %v2717
    %v2720 = vld [vmem:[#allocation2 + $0x7c] sm:$0x1]
    %v2721 = vld [vmem:[#allocation2 + $0x7d] sm:$0x1]
    %v2722 = vld [vmem:[#allocation2 + $0x8b] sm:$0x1]
    %v2723 = vld [vmem:[#allocation2 + $0x8c] sm:$0x1]
    %v2724 = vmax.f32 %v2720, %v2721
    %v2725 = vmax.f32 %v2722, %v2723
    %v2726 = vmax.f32 %v2724, %v2725
    %v2729 = vunpack.c.l.s4 1966171168
    %v2730 = vunpack.c.0.s8 %v2729
    %v2731 = vlaneseq
    %v2732 = vshrl.u32 %v2731, 7
    %v2733 = vsub.s32 %v2730, %v2732
    %v2734 = vrot.slane %v2726, %v2733
    %v2736 = vunpack.c.l.s4 1966171168
    %v2737 = vunpack.c.0.s8 %v2736
    %v2738 = vlaneseq
    %v2739 = vshrl.u32 %v2738, 7
    %v2740 = vsub.s32 %v2737, %v2739
    %v2741 = vrot.slane %v2734, %v2740
    %2742 = vrot.lane.b32.xlu0 %v2741, 64
    %v2743 = vpop.permute.xlu0 %2742
    %2745 = vst.msk [vmem:[#allocation3 + $0x6] sm:$0x1] %vm2225, %v2743
    %v2746 = vld [vmem:[#allocation2 + $0x7e] sm:$0x1]
    %v2747 = vld [vmem:[#allocation2 + $0x7f] sm:$0x1]
    %v2748 = vld [vmem:[#allocation2 + $0x8d] sm:$0x1]
    %v2749 = vld [vmem:[#allocation2 + $0x8e] sm:$0x1]
    %v2750 = vmax.f32 %v2746, %v2747
    %v2751 = vmax.f32 %v2748, %v2749
    %v2752 = vmax.f32 %v2750, %v2751
    %v2755 = vunpack.c.l.s4 1966171168
    %v2756 = vunpack.c.0.s8 %v2755
    %v2757 = vlaneseq
    %v2758 = vshrl.u32 %v2757, 7
    %v2759 = vsub.s32 %v2756, %v2758
    %v2760 = vrot.slane %v2752, %v2759
    %v2762 = vunpack.c.l.s4 1966171168
    %v2763 = vunpack.c.0.s8 %v2762
    %v2764 = vlaneseq
    %v2765 = vshrl.u32 %v2764, 7
    %v2766 = vsub.s32 %v2763, %v2765
    %v2767 = vrot.slane %v2760, %v2766
    %2768 = vrot.lane.b32.xlu0 %v2767, 96
    %v2769 = vpop.permute.xlu0 %2768
    %2771 = vst.msk [vmem:[#allocation3 + $0x6] sm:$0x1] %vm2254, %v2769
    %v2772 = vld [vmem:[#allocation2 + $0x80] sm:$0x1]
    %v2773 = vld [vmem:[#allocation2 + $0x81] sm:$0x1]
    %v2774 = vld [vmem:[#allocation2 + $0x8f] sm:$0x1]
    %v2775 = vld [vmem:[#allocation2 + $0x90] sm:$0x1]
    %v2776 = vmax.f32 %v2772, %v2773
    %v2777 = vmax.f32 %v2774, %v2775
    %v2778 = vmax.f32 %v2776, %v2777
    %2779 = vst.msk [vmem:[#allocation3 + $0x7] sm:$0x1] %vm2167, %v2778
    %v2780 = vld [vmem:[#allocation2 + $0x82] sm:$0x1]
    %v2781 = vld [vmem:[#allocation2 + $0x83] sm:$0x1]
    %v2782 = vld [vmem:[#allocation2 + $0x91] sm:$0x1]
    %v2783 = vld [vmem:[#allocation2 + $0x92] sm:$0x1]
    %v2784 = vmax.f32 %v2780, %v2781
    %v2785 = vmax.f32 %v2782, %v2783
    %v2786 = vmax.f32 %v2784, %v2785
    %v2789 = vunpack.c.l.s4 1966171168
    %v2790 = vunpack.c.0.s8 %v2789
    %v2791 = vlaneseq
    %v2792 = vshrl.u32 %v2791, 7
    %v2793 = vsub.s32 %v2790, %v2792
    %v2794 = vrot.slane %v2786, %v2793
    %v2796 = vunpack.c.l.s4 1966171168
    %v2797 = vunpack.c.0.s8 %v2796
    %v2798 = vlaneseq
    %v2799 = vshrl.u32 %v2798, 7
    %v2800 = vsub.s32 %v2797, %v2799
    %v2801 = vrot.slane %v2794, %v2800
    %2802 = vrot.lane.b32.xlu0 %v2801, 32
    %v2803 = vpop.permute.xlu0 %2802
    %2805 = vst.msk [vmem:[#allocation3 + $0x7] sm:$0x1] %vm2196, %v2803
    %v2806 = vld [vmem:[#allocation2 + $0x96] sm:$0x1]
    %v2807 = vld [vmem:[#allocation2 + $0x97] sm:$0x1]
    %v2808 = vld [vmem:[#allocation2 + $0xa5] sm:$0x1]
    %v2809 = vld [vmem:[#allocation2 + $0xa6] sm:$0x1]
    %v2810 = vmax.f32 %v2806, %v2807
    %v2811 = vmax.f32 %v2808, %v2809
    %v2812 = vmax.f32 %v2810, %v2811
    %v2815 = vunpack.c.l.s4 1966171168
    %v2816 = vunpack.c.0.s8 %v2815
    %v2817 = vlaneseq
    %v2818 = vshrl.u32 %v2817, 7
    %v2819 = vsub.s32 %v2816, %v2818
    %v2820 = vrot.slane %v2812, %v2819
    %v2822 = vunpack.c.l.s4 1966171168
    %v2823 = vunpack.c.0.s8 %v2822
    %v2824 = vlaneseq
    %v2825 = vshrl.u32 %v2824, 7
    %v2826 = vsub.s32 %v2823, %v2825
    %v2827 = vrot.slane %v2820, %v2826
    %2828 = vrot.lane.b32.xlu0 %v2827, 64
    %v2829 = vpop.permute.xlu0 %2828
    %2831 = vst.msk [vmem:[#allocation3 + $0x7] sm:$0x1] %vm2225, %v2829
    %v2832 = vld [vmem:[#allocation2 + $0x98] sm:$0x1]
    %v2833 = vld [vmem:[#allocation2 + $0x99] sm:$0x1]
    %v2834 = vld [vmem:[#allocation2 + $0xa7] sm:$0x1]
    %v2835 = vld [vmem:[#allocation2 + $0xa8] sm:$0x1]
    %v2836 = vmax.f32 %v2832, %v2833
    %v2837 = vmax.f32 %v2834, %v2835
    %v2838 = vmax.f32 %v2836, %v2837
    %v2841 = vunpack.c.l.s4 1966171168
    %v2842 = vunpack.c.0.s8 %v2841
    %v2843 = vlaneseq
    %v2844 = vshrl.u32 %v2843, 7
    %v2845 = vsub.s32 %v2842, %v2844
    %v2846 = vrot.slane %v2838, %v2845
    %v2848 = vunpack.c.l.s4 1966171168
    %v2849 = vunpack.c.0.s8 %v2848
    %v2850 = vlaneseq
    %v2851 = vshrl.u32 %v2850, 7
    %v2852 = vsub.s32 %v2849, %v2851
    %v2853 = vrot.slane %v2846, %v2852
    %2854 = vrot.lane.b32.xlu0 %v2853, 96
    %v2855 = vpop.permute.xlu0 %2854
    %2857 = vst.msk [vmem:[#allocation3 + $0x7] sm:$0x1] %vm2254, %v2855
    %v2858 = vld [vmem:[#allocation2 + $0x9a] sm:$0x1]
    %v2859 = vld [vmem:[#allocation2 + $0x9b] sm:$0x1]
    %v2860 = vld [vmem:[#allocation2 + $0xa9] sm:$0x1]
    %v2861 = vld [vmem:[#allocation2 + $0xaa] sm:$0x1]
    %v2862 = vmax.f32 %v2858, %v2859
    %v2863 = vmax.f32 %v2860, %v2861
    %v2864 = vmax.f32 %v2862, %v2863
    %2865 = vst.msk [vmem:[#allocation3 + $0x8] sm:$0x1] %vm2167, %v2864
    %v2866 = vld [vmem:[#allocation2 + $0x9c] sm:$0x1]
    %v2867 = vld [vmem:[#allocation2 + $0x9d] sm:$0x1]
    %v2868 = vld [vmem:[#allocation2 + $0xab] sm:$0x1]
    %v2869 = vld [vmem:[#allocation2 + $0xac] sm:$0x1]
    %v2870 = vmax.f32 %v2866, %v2867
    %v2871 = vmax.f32 %v2868, %v2869
    %v2872 = vmax.f32 %v2870, %v2871
    %v2875 = vunpack.c.l.s4 1966171168
    %v2876 = vunpack.c.0.s8 %v2875
    %v2877 = vlaneseq
    %v2878 = vshrl.u32 %v2877, 7
    %v2879 = vsub.s32 %v2876, %v2878
    %v2880 = vrot.slane %v2872, %v2879
    %v2882 = vunpack.c.l.s4 1966171168
    %v2883 = vunpack.c.0.s8 %v2882
    %v2884 = vlaneseq
    %v2885 = vshrl.u32 %v2884, 7
    %v2886 = vsub.s32 %v2883, %v2885
    %v2887 = vrot.slane %v2880, %v2886
    %2888 = vrot.lane.b32.xlu0 %v2887, 32
    %v2889 = vpop.permute.xlu0 %2888
    %2891 = vst.msk [vmem:[#allocation3 + $0x8] sm:$0x1] %vm2196, %v2889
    %v2892 = vld [vmem:[#allocation2 + $0x9e] sm:$0x1]
    %v2893 = vld [vmem:[#allocation2 + $0x9f] sm:$0x1]
    %v2894 = vld [vmem:[#allocation2 + $0xad] sm:$0x1]
    %v2895 = vld [vmem:[#allocation2 + $0xae] sm:$0x1]
    %v2896 = vmax.f32 %v2892, %v2893
    %v2897 = vmax.f32 %v2894, %v2895
    %v2898 = vmax.f32 %v2896, %v2897
    %v2901 = vunpack.c.l.s4 1966171168
    %v2902 = vunpack.c.0.s8 %v2901
    %v2903 = vlaneseq
    %v2904 = vshrl.u32 %v2903, 7
    %v2905 = vsub.s32 %v2902, %v2904
    %v2906 = vrot.slane %v2898, %v2905
    %v2908 = vunpack.c.l.s4 1966171168
    %v2909 = vunpack.c.0.s8 %v2908
    %v2910 = vlaneseq
    %v2911 = vshrl.u32 %v2910, 7
    %v2912 = vsub.s32 %v2909, %v2911
    %v2913 = vrot.slane %v2906, %v2912
    %2914 = vrot.lane.b32.xlu0 %v2913, 64
    %v2915 = vpop.permute.xlu0 %2914
    %2917 = vst.msk [vmem:[#allocation3 + $0x8] sm:$0x1] %vm2225, %v2915
    %v2918 = vld [vmem:[#allocation2 + $0xa0] sm:$0x1]
    %v2919 = vld [vmem:[#allocation2 + $0xa1] sm:$0x1]
    %v2920 = vld [vmem:[#allocation2 + $0xaf] sm:$0x1]
    %v2921 = vld [vmem:[#allocation2 + $0xb0] sm:$0x1]
    %v2922 = vmax.f32 %v2918, %v2919
    %v2923 = vmax.f32 %v2920, %v2921
    %v2924 = vmax.f32 %v2922, %v2923
    %v2927 = vunpack.c.l.s4 1966171168
    %v2928 = vunpack.c.0.s8 %v2927
    %v2929 = vlaneseq
    %v2930 = vshrl.u32 %v2929, 7
    %v2931 = vsub.s32 %v2928, %v2930
    %v2932 = vrot.slane %v2924, %v2931
    %v2934 = vunpack.c.l.s4 1966171168
    %v2935 = vunpack.c.0.s8 %v2934
    %v2936 = vlaneseq
    %v2937 = vshrl.u32 %v2936, 7
    %v2938 = vsub.s32 %v2935, %v2937
    %v2939 = vrot.slane %v2932, %v2938
    %2940 = vrot.lane.b32.xlu0 %v2939, 96
    %v2941 = vpop.permute.xlu0 %2940
    %2943 = vst.msk [vmem:[#allocation3 + $0x8] sm:$0x1] %vm2254, %v2941
    %v2944 = vld [vmem:[#allocation3] sm:$0xff]
    %v2945 = vld [vmem:[#allocation3 + $0x8] sm:$0x1]
    %v2948 = vlaneseq
    %v2949 = vshrl.u32 %v2948, 7
    %v2950 = vsub.s32 0, %v2949
    %v2951 = vrot.slane %v2944, %v2950
    %v2952 = vlaneseq
    %v2953 = vshrl.u32 %v2952, 7
    %v2954 = vsub.s32 1, %v2953
    %v2955 = vrot.slane %v2944, %v2954
    %v2956 = vlaneseq
    %v2957 = vshrl.u32 %v2956, 7
    %v2958 = vsub.s32 2, %v2957
    %v2959 = vrot.slane %v2944, %v2958
    %v2960 = vlaneseq
    %v2961 = vshrl.u32 %v2960, 7
    %v2962 = vsub.s32 3, %v2961
    %v2963 = vrot.slane %v2944, %v2962
    %v2964 = vlaneseq
    %v2965 = vshrl.u32 %v2964, 7
    %v2966 = vsub.s32 4, %v2965
    %v2967 = vrot.slane %v2944, %v2966
    %v2968 = vlaneseq
    %v2969 = vshrl.u32 %v2968, 7
    %v2970 = vsub.s32 5, %v2969
    %v2971 = vrot.slane %v2944, %v2970
    %v2972 = vlaneseq
    %v2973 = vshrl.u32 %v2972, 7
    %v2974 = vsub.s32 6, %v2973
    %v2975 = vrot.slane %v2944, %v2974
    %v2976 = vlaneseq
    %v2977 = vshrl.u32 %v2976, 7
    %v2978 = vsub.s32 7, %v2977
    %v2979 = vrot.slane %v2944, %v2978
    %v2980 = vlaneseq
    %v2981 = vshrl.u32 %v2980, 7
    %v2982 = vsub.s32 0, %v2981
    %v2983 = vrot.slane %v2945, %v2982
    %v2993 = vpack.c.bf16 %v2951, %v2951
    %v2994 = vpack.c.bf16 %v2955, %v2955
    %v2995 = vpack.c.bf16 %v2959, %v2959
    %v2996 = vpack.c.bf16 %v2963, %v2963
    %v2997 = vpack.c.bf16 %v2967, %v2967
    %v2998 = vpack.c.bf16 %v2971, %v2971
    %v2999 = vpack.c.bf16 %v2975, %v2975
    %v3000 = vpack.c.bf16 %v2979, %v2979
    %v3001 = vpack.c.bf16 %v2983, %v2983
    %v3002 = vld [vmem:[%s2] sm:$0xf]
    %v3003 = vld [vmem:[%s2 + $0x4] sm:$0xf]
    %v3004 = vld [vmem:[%s2 + $0x8] sm:$0xf]
    %v3005 = vld [vmem:[%s2 + $0xc] sm:$0xf]
    %v3006 = vld [vmem:[%s2 + $0x10] sm:$0xf]
    %v3007 = vld [vmem:[%s2 + $0x14] sm:$0xf]
    %v3008 = vld [vmem:[%s2 + $0x18] sm:$0xf]
    %v3009 = vld [vmem:[%s2 + $0x1c] sm:$0xf]
    %v3010 = vld [vmem:[%s2 + $0x20] sm:$0xf]
    %v3011 = vld [vmem:[%s2 + $0x24] sm:$0xf]
    %v3012 = vld [vmem:[%s2 + $0x28] sm:$0xf]
    %v3013 = vld [vmem:[%s2 + $0x2c] sm:$0xf]
    %v3014 = vld [vmem:[%s2 + $0x30] sm:$0xf]
    %v3015 = vld [vmem:[%s2 + $0x34] sm:$0xf]
    %v3016 = vld [vmem:[%s2 + $0x38] sm:$0xf]
    %v3017 = vld [vmem:[%s2 + $0x3c] sm:$0xf]
    %v3018 = vld [vmem:[%s2 + $0x40] sm:$0xf]
    %v3019 = vld [vmem:[%s2 + $0x44] sm:$0xf]
    %v3020 = vld [vmem:[%s2 + $0x48] sm:$0xf]
    %v3021 = vld [vmem:[%s2 + $0x4c] sm:$0xf]
    %v3022 = vld [vmem:[%s2 + $0x50] sm:$0xf]
    %v3023 = vld [vmem:[%s2 + $0x54] sm:$0xf]
    %v3024 = vld [vmem:[%s2 + $0x58] sm:$0xf]
    %v3025 = vld [vmem:[%s2 + $0x5c] sm:$0xf]
    %v3026 = vld [vmem:[%s2 + $0x60] sm:$0xf]
    %v3027 = vld [vmem:[%s2 + $0x64] sm:$0xf]
    %v3028 = vld [vmem:[%s2 + $0x68] sm:$0xf]
    %v3029 = vld [vmem:[%s2 + $0x6c] sm:$0xf]
    %v3030 = vld [vmem:[%s2 + $0x70] sm:$0xf]
    %v3031 = vld [vmem:[%s2 + $0x74] sm:$0xf]
    %v3032 = vld [vmem:[%s2 + $0x78] sm:$0xf]
    %v3033 = vld [vmem:[%s2 + $0x7c] sm:$0xf]
    %v3034 = vld [vmem:[%s2 + $0x80] sm:$0xf]
    %v3035 = vld [vmem:[%s2 + $0x84] sm:$0xf]
    %v3036 = vld [vmem:[%s2 + $0x88] sm:$0xf]
    %v3037 = vld [vmem:[%s2 + $0x8c] sm:$0xf]
    %v3038 = vld [vmem:[%s2 + $0x90] sm:$0xf]
    %v3039 = vld [vmem:[%s2 + $0x94] sm:$0xf]
    %v3040 = vld [vmem:[%s2 + $0x98] sm:$0xf]
    %v3041 = vld [vmem:[%s2 + $0x9c] sm:$0xf]
    %v3042 = vld [vmem:[%s2 + $0xa0] sm:$0xf]
    %v3043 = vld [vmem:[%s2 + $0xa4] sm:$0xf]
    %v3044 = vld [vmem:[%s2 + $0xa8] sm:$0xf]
    %v3045 = vld [vmem:[%s2 + $0xac] sm:$0xf]
    %v3046 = vld [vmem:[%s2 + $0xb0] sm:$0xf]
    %v3047 = vld [vmem:[%s2 + $0xb4] sm:$0xf]
    %v3048 = vld [vmem:[%s2 + $0xb8] sm:$0xf]
    %v3049 = vld [vmem:[%s2 + $0xbc] sm:$0xf]
    %v3050 = vld [vmem:[%s2 + $0xc0] sm:$0xf]
    %v3051 = vld [vmem:[%s2 + $0xc4] sm:$0xf]
    %v3052 = vld [vmem:[%s2 + $0xc8] sm:$0xf]
    %v3053 = vld [vmem:[%s2 + $0xcc] sm:$0xf]
    %v3054 = vld [vmem:[%s2 + $0xd0] sm:$0xf]
    %v3055 = vld [vmem:[%s2 + $0xd4] sm:$0xf]
    %v3056 = vld [vmem:[%s2 + $0xd8] sm:$0xf]
    %v3057 = vld [vmem:[%s2 + $0xdc] sm:$0xf]
    %v3058 = vld [vmem:[%s2 + $0xe0] sm:$0xf]
    %v3059 = vld [vmem:[%s2 + $0xe4] sm:$0xf]
    %v3060 = vld [vmem:[%s2 + $0xe8] sm:$0xf]
    %v3061 = vld [vmem:[%s2 + $0xec] sm:$0xf]
    %v3062 = vld [vmem:[%s2 + $0xf0] sm:$0xf]
    %v3063 = vld [vmem:[%s2 + $0xf4] sm:$0xf]
    %v3064 = vld [vmem:[%s2 + $0xf8] sm:$0xf]
    %v3065 = vld [vmem:[%s2 + $0xfc] sm:$0xf]
    %v3066 = vld [vmem:[%s2 + $0x100] sm:$0xf]
    %v3067 = vld [vmem:[%s2 + $0x104] sm:$0xf]
    %v3068 = vld [vmem:[%s2 + $0x108] sm:$0xf]
    %v3069 = vld [vmem:[%s2 + $0x10c] sm:$0xf]
    %v3070 = vld [vmem:[%s2 + $0x110] sm:$0xf]
    %v3071 = vld [vmem:[%s2 + $0x114] sm:$0xf]
    %v3072 = vld [vmem:[%s2 + $0x118] sm:$0xf]
    %v3073 = vld [vmem:[%s2 + $0x11c] sm:$0xf]
    %v3074 = vld [vmem:[%s2 + $0x120] sm:$0xf]
    %v3075 = vld [vmem:[%s2 + $0x124] sm:$0xf]
    %v3076 = vld [vmem:[%s2 + $0x128] sm:$0xf]
    %v3077 = vld [vmem:[%s2 + $0x12c] sm:$0xf]
    %v3078 = vld [vmem:[%s2 + $0x130] sm:$0xf]
    %v3079 = vld [vmem:[%s2 + $0x134] sm:$0xf]
    %v3080 = vld [vmem:[%s2 + $0x138] sm:$0xf]
    %v3081 = vld [vmem:[%s2 + $0x13c] sm:$0xf]
    %v3082 = vld [vmem:[%s2 + $0x140] sm:$0xf]
    %v3083 = vld [vmem:[%s2 + $0x144] sm:$0xf]
    %v3084 = vld [vmem:[%s2 + $0x148] sm:$0xf]
    %v3085 = vld [vmem:[%s2 + $0x14c] sm:$0xf]
    %v3086 = vld [vmem:[%s2 + $0x150] sm:$0xf]
    %v3087 = vld [vmem:[%s2 + $0x154] sm:$0xf]
    %v3088 = vld [vmem:[%s2 + $0x158] sm:$0xf]
    %v3089 = vld [vmem:[%s2 + $0x15c] sm:$0xf]
    %v3090 = vld [vmem:[%s2 + $0x160] sm:$0xf]
    %v3091 = vld [vmem:[%s2 + $0x164] sm:$0xf]
    %v3092 = vld [vmem:[%s2 + $0x168] sm:$0xf]
    %v3093 = vld [vmem:[%s2 + $0x16c] sm:$0xf]
    %v3094 = vld [vmem:[%s2 + $0x170] sm:$0xf]
    %v3095 = vld [vmem:[%s2 + $0x174] sm:$0xf]
    %v3096 = vld [vmem:[%s2 + $0x178] sm:$0xf]
    %v3097 = vld [vmem:[%s2 + $0x17c] sm:$0xf]
    %v3098 = vld [vmem:[%s2 + $0x180] sm:$0xf]
    %v3099 = vld [vmem:[%s2 + $0x184] sm:$0xf]
    %v3100 = vld [vmem:[%s2 + $0x188] sm:$0xf]
    %v3101 = vld [vmem:[%s2 + $0x18c] sm:$0xf]
    %v3102 = vld [vmem:[%s2 + $0x190] sm:$0xf]
    %v3103 = vld [vmem:[%s2 + $0x194] sm:$0xf]
    %v3104 = vld [vmem:[%s2 + $0x198] sm:$0xf]
    %v3105 = vld [vmem:[%s2 + $0x19c] sm:$0xf]
    %v3106 = vld [vmem:[%s2 + $0x1a0] sm:$0xf]
    %v3107 = vld [vmem:[%s2 + $0x1a4] sm:$0xf]
    %v3108 = vld [vmem:[%s2 + $0x1a8] sm:$0xf]
    %v3109 = vld [vmem:[%s2 + $0x1ac] sm:$0xf]
    %v3110 = vld [vmem:[%s2 + $0x1b0] sm:$0xf]
    %v3111 = vld [vmem:[%s2 + $0x1b4] sm:$0xf]
    %v3112 = vld [vmem:[%s2 + $0x1b8] sm:$0xf]
    %v3113 = vld [vmem:[%s2 + $0x1bc] sm:$0xf]
    %v3114 = vld [vmem:[%s2 + $0x1c0] sm:$0xf]
    %v3115 = vld [vmem:[%s2 + $0x1c4] sm:$0xf]
    %v3116 = vld [vmem:[%s2 + $0x1c8] sm:$0xf]
    %v3117 = vld [vmem:[%s2 + $0x1cc] sm:$0xf]
    %v3118 = vld [vmem:[%s2 + $0x1d0] sm:$0xf]
    %v3119 = vld [vmem:[%s2 + $0x1d4] sm:$0xf]
    %v3120 = vld [vmem:[%s2 + $0x1d8] sm:$0xf]
    %v3121 = vld [vmem:[%s2 + $0x1dc] sm:$0xf]
    %v3122 = vld [vmem:[%s2 + $0x1e0] sm:$0xf]
    %v3123 = vld [vmem:[%s2 + $0x1e4] sm:$0xf]
    %v3124 = vld [vmem:[%s2 + $0x1e8] sm:$0xf]
    %v3125 = vld [vmem:[%s2 + $0x1ec] sm:$0xf]
    %v3126 = vld [vmem:[%s2 + $0x1f0] sm:$0xf]
    %v3127 = vld [vmem:[%s2 + $0x1f4] sm:$0xf]
    %v3128 = vld [vmem:[%s2 + $0x1f8] sm:$0xf]
    %v3129 = vld [vmem:[%s2 + $0x1fc] sm:$0xf]
    %v3130 = vld [vmem:[%s2 + $0x200] sm:$0xf]
    %v3131 = vld [vmem:[%s2 + $0x204] sm:$0xf]
    %v3132 = vld [vmem:[%s2 + $0x208] sm:$0xf]
    %v3133 = vld [vmem:[%s2 + $0x20c] sm:$0xf]
    %v3134 = vld [vmem:[%s2 + $0x210] sm:$0xf]
    %v3135 = vld [vmem:[%s2 + $0x214] sm:$0xf]
    %v3136 = vld [vmem:[%s2 + $0x218] sm:$0xf]
    %v3137 = vld [vmem:[%s2 + $0x21c] sm:$0xf]
    %v3138 = vld [vmem:[%s2 + $0x220] sm:$0xf]
    %v3139 = vld [vmem:[%s2 + $0x224] sm:$0xf]
    %v3140 = vld [vmem:[%s2 + $0x228] sm:$0xf]
    %v3141 = vld [vmem:[%s2 + $0x22c] sm:$0xf]
    %v3142 = vld [vmem:[%s2 + $0x230] sm:$0xf]
    %v3143 = vld [vmem:[%s2 + $0x234] sm:$0xf]
    %v3144 = vld [vmem:[%s2 + $0x238] sm:$0xf]
    %v3145 = vld [vmem:[%s2 + $0x23c] sm:$0xf]
    %v3146 = vld [vmem:[%s0] sm:$0xff]
    %v3147 = vld [vmem:[%s3] sm:$0xff]
    %v3148 = vld [vmem:[%s3 + $0x8] sm:$0xff]
    %v3149 = vld [vmem:[%s3 + $0x10] sm:$0xff]
    %v3150 = vld [vmem:[%s3 + $0x18] sm:$0xff]
    %v3151 = vld [vmem:[%s4] sm:$0x1]
    %v3153 = vlaneseq
    %v3154 = vshrl.u32 %v3153, 7
    %v3155 = vsub.s32 0, %v3154
    %v3156 = vrot.slane %v3151, %v3155
    %v3159 = vsel %vm119, %v3146, 0
    %3161 = vmatprep.subr.mxu0 0.0
    %3162 = vmatpush1.msra.mxu0 %v3147
    %3163 = vmatprep.subr.mxu0 0.0
    %3164 = vmatpush1.msra.mxu0 %v3148
    %3165 = vmatprep.subr.mxu0 0.0
    %3166 = vmatpush1.msra.mxu0 %v3149
    %3167 = vmatprep.subr.mxu0 0.0
    %3168 = vmatpush1.msra.mxu0 %v3150
    %3169 = vmatprep.subr.mxu0 0.0
    %3170 = vmatpush1.msra.mxu0 0.0
    %3171 = vmatprep.subr.mxu0 0.0
    %3172 = vmatpush1.msra.mxu0 0.0
    %3173 = vmatprep.subr.mxu0 0.0
    %3174 = vmatpush1.msra.mxu0 0.0
    %3175 = vmatprep.subr.mxu0 0.0
    %3176 = vmatpush1.msra.mxu0 0.0
    %3177 = vmatprep.subr.mxu0 0.0
    %3178 = vmatpush1.msra.mxu0 0.0
    %3179 = vmatprep.subr.mxu0 0.0
    %3180 = vmatpush1.msra.mxu0 0.0
    %3181 = vmatprep.subr.mxu0 0.0
    %3182 = vmatpush1.msra.mxu0 0.0
    %3183 = vmatprep.subr.mxu0 0.0
    %3184 = vmatpush1.msra.mxu0 0.0
    %3185 = vmatprep.subr.mxu0 0.0
    %3186 = vmatpush1.msra.mxu0 0.0
    %3187 = vmatprep.subr.mxu0 0.0
    %3188 = vmatpush1.msra.mxu0 0.0
    %3189 = vmatprep.subr.mxu0 0.0
    %3190 = vmatpush1.msra.mxu0 0.0
    %3191 = vmatprep.subr.mxu0 0.0
    %3192 = vmatpush1.msra.mxu0 0.0
    %3193 = vmatprep.subr.mxu0 0.0
    %3194 = vmatpush1.msra.mxu0 0.0
    %3195 = vmatprep.subr.mxu0 0.0
    %3196 = vmatpush1.msra.mxu0 0.0
    %3197 = vmatprep.subr.mxu0 0.0
    %3198 = vmatpush1.msra.mxu0 0.0
    %3199 = vmatprep.subr.mxu0 0.0
    %3200 = vmatpush1.msra.mxu0 0.0
    %3201 = vmatprep.subr.mxu0 0.0
    %3202 = vmatpush1.msra.mxu0 0.0
    %3203 = vmatprep.subr.mxu0 0.0
    %3204 = vmatpush1.msra.mxu0 0.0
    %3205 = vmatprep.subr.mxu0 0.0
    %3206 = vmatpush1.msra.mxu0 0.0
    %3207 = vmatprep.subr.mxu0 0.0
    %3208 = vmatpush1.msra.mxu0 0.0
    %3209 = vmatprep.subr.mxu0 0.0
    %3210 = vmatpush1.msra.mxu0 0.0
    %3211 = vmatprep.subr.mxu0 0.0
    %3212 = vmatpush1.msra.mxu0 0.0
    %3213 = vmatprep.subr.mxu0 0.0
    %3214 = vmatpush1.msra.mxu0 0.0
    %3215 = vmatprep.subr.mxu0 0.0
    %3216 = vmatpush1.msra.mxu0 0.0
    %3217 = vmatprep.subr.mxu0 0.0
    %3218 = vmatpush1.msra.mxu0 0.0
    %3219 = vmatprep.subr.mxu0 0.0
    %3220 = vmatpush1.msra.mxu0 0.0
    %3221 = vmatprep.subr.mxu0 0.0
    %3222 = vmatpush1.msra.mxu0 0.0
    %3223 = vmatprep.subr.mxu0 0.0
    %3224 = vmatpush1.msra.mxu0 0.0
    %3225 = vmatprep.mubr.f32.mxu0 0.0
    %3226 = vmatmul.mubr.f32.gmra.mrb[0].mxu0 %v3159
    %v3227 = vpop.f32.mrb[0].mxu0
    %v3228 = vadd.f32 %v3156, %v3227
    %v3229 = vpop.f32.mrb[0].mxu0
    %3230 = vdwg.mxu0
    %3232 = vrot.lane.b32.xlu0 %v3228, 96
    %v3233 = vpop.permute.xlu0 %3232
    %v3234 = vsel %vm119, %v3228, 0
    %v3236 = vsel %vm119, %v3233, 0
    %3238 = vmatprep.subr.mxu0 0.0
    %3239 = vmatpush1.xpose.msra.mxu0 %v3236
    %3240 = vmatprep.subr.mxu0 0.0
    %3241 = vmatpush1.xpose.msra.mxu0 0.0
    %3242 = vmatprep.subr.mxu0 0.0
    %3243 = vmatpush1.xpose.msra.mxu0 0.0
    %3244 = vmatprep.subr.mxu0 0.0
    %3245 = vmatpush1.xpose.msra.mxu0 0.0
    %3246 = vmatprep.subr.mxu0 0.0
    %3247 = vmatpush1.xpose.msra.mxu0 0.0
    %3248 = vmatprep.subr.mxu0 0.0
    %3249 = vmatpush1.xpose.msra.mxu0 0.0
    %3250 = vmatprep.subr.mxu0 0.0
    %3251 = vmatpush1.xpose.msra.mxu0 0.0
    %3252 = vmatprep.subr.mxu0 0.0
    %3253 = vmatpush1.xpose.msra.mxu0 0.0
    %3254 = vmatprep.subr.mxu0 0.0
    %3255 = vmatpush1.xpose.msra.mxu0 0.0
    %3256 = vmatprep.subr.mxu0 0.0
    %3257 = vmatpush1.xpose.msra.mxu0 0.0
    %3258 = vmatprep.subr.mxu0 0.0
    %3259 = vmatpush1.xpose.msra.mxu0 0.0
    %3260 = vmatprep.subr.mxu0 0.0
    %3261 = vmatpush1.xpose.msra.mxu0 0.0
    %3262 = vmatprep.subr.mxu0 0.0
    %3263 = vmatpush1.xpose.msra.mxu0 0.0
    %3264 = vmatprep.subr.mxu0 0.0
    %3265 = vmatpush1.xpose.msra.mxu0 0.0
    %3266 = vmatprep.subr.mxu0 0.0
    %3267 = vmatpush1.xpose.msra.mxu0 0.0
    %3268 = vmatprep.subr.mxu0 0.0
    %3269 = vmatpush1.xpose.msra.mxu0 0.0
    %3270 = vmatprep.subr.mxu0 0.0
    %3271 = vmatpush1.xpose.msra.mxu0 0.0
    %3272 = vmatprep.subr.mxu0 0.0
    %3273 = vmatpush1.xpose.msra.mxu0 0.0
    %3274 = vmatprep.subr.mxu0 0.0
    %3275 = vmatpush1.xpose.msra.mxu0 0.0
    %3276 = vmatprep.subr.mxu0 0.0
    %3277 = vmatpush1.xpose.msra.mxu0 0.0
    %3278 = vmatprep.subr.mxu0 0.0
    %3279 = vmatpush1.xpose.msra.mxu0 0.0
    %3280 = vmatprep.subr.mxu0 0.0
    %3281 = vmatpush1.xpose.msra.mxu0 0.0
    %3282 = vmatprep.subr.mxu0 0.0
    %3283 = vmatpush1.xpose.msra.mxu0 0.0
    %3284 = vmatprep.subr.mxu0 0.0
    %3285 = vmatpush1.xpose.msra.mxu0 0.0
    %3286 = vmatprep.subr.mxu0 0.0
    %3287 = vmatpush1.xpose.msra.mxu0 0.0
    %3288 = vmatprep.subr.mxu0 0.0
    %3289 = vmatpush1.xpose.msra.mxu0 0.0
    %3290 = vmatprep.subr.mxu0 0.0
    %3291 = vmatpush1.xpose.msra.mxu0 0.0
    %3292 = vmatprep.subr.mxu0 0.0
    %3293 = vmatpush1.xpose.msra.mxu0 0.0
    %3294 = vmatprep.subr.mxu0 0.0
    %3295 = vmatpush1.xpose.msra.mxu0 0.0
    %3296 = vmatprep.subr.mxu0 0.0
    %3297 = vmatpush1.xpose.msra.mxu0 0.0
    %3298 = vmatprep.subr.mxu0 0.0
    %3299 = vmatpush1.xpose.msra.mxu0 0.0
    %3300 = vmatprep.subr.mxu0 0.0
    %3301 = vmatpush1.xpose.msra.mxu0 0.0
    %3302 = vmatprep.mubr.f32.mxu0 0.0
    %3303 = vmatmul.mubr.f32.gmra.mrb[0].mxu0 %v3234
    %v3304 = vpop.f32.mrb[0].mxu0
    %v3305 = vadd.f32 0.0, %v3304
    %v3306 = vpop.f32.mrb[0].mxu0
    %3307 = vdwg.mxu0
    %v3308 = vmul.f32 %v3305, 0.17677669
    %vm3309 = vcmask 64512
    %v3310 = vsel %vm3309, %v3308, -inf
    %3311 = vmax.xlane.f32.xlu0 %v3310
    %v3312 = vpop.xlane.xlu0 %3311
    %v3313 = vsub.f32 %v3308, %v3312
    %v3314 = vmul.f32 %v3313, 1.442695
    %v3315 = vpow.pop %v3314
    %v3316 = vsel %vm3309, %v3315, 0.0
    %3317 = vadd.xlane.f32.xlu0 %v3316
    %v3318 = vpop.xlane.xlu0 %3317
    %v3319 = vrcp.pop %v3318
    %v3320 = vmul.f32 %v3315, %v3319
    %3321 = vrot.lane.b32.xlu0 %v3228, 64
    %v3322 = vpop.permute.xlu0 %3321
    %v3325 = vsel %vm3309, %v3320, 0
    %3327 = vmatprep.subr.mxu0 0.0
    %3328 = vmatpush1.msra.mxu0 %v3322
    %3329 = vmatprep.subr.mxu0 0.0
    %3330 = vmatpush1.msra.mxu0 0.0
    %3331 = vmatprep.subr.mxu0 0.0
    %3332 = vmatpush1.msra.mxu0 0.0
    %3333 = vmatprep.subr.mxu0 0.0
    %3334 = vmatpush1.msra.mxu0 0.0
    %3335 = vmatprep.subr.mxu0 0.0
    %3336 = vmatpush1.msra.mxu0 0.0
    %3337 = vmatprep.subr.mxu0 0.0
    %3338 = vmatpush1.msra.mxu0 0.0
    %3339 = vmatprep.subr.mxu0 0.0
    %3340 = vmatpush1.msra.mxu0 0.0
    %3341 = vmatprep.subr.mxu0 0.0
    %3342 = vmatpush1.msra.mxu0 0.0
    %3343 = vmatprep.subr.mxu0 0.0
    %3344 = vmatpush1.msra.mxu0 0.0
    %3345 = vmatprep.subr.mxu0 0.0
    %3346 = vmatpush1.msra.mxu0 0.0
    %3347 = vmatprep.subr.mxu0 0.0
    %3348 = vmatpush1.msra.mxu0 0.0
    %3349 = vmatprep.subr.mxu0 0.0
    %3350 = vmatpush1.msra.mxu0 0.0
    %3351 = vmatprep.subr.mxu0 0.0
    %3352 = vmatpush1.msra.mxu0 0.0
    %3353 = vmatprep.subr.mxu0 0.0
    %3354 = vmatpush1.msra.mxu0 0.0
    %3355 = vmatprep.subr.mxu0 0.0
    %3356 = vmatpush1.msra.mxu0 0.0
    %3357 = vmatprep.subr.mxu0 0.0
    %3358 = vmatpush1.msra.mxu0 0.0
    %3359 = vmatprep.subr.mxu0 0.0
    %3360 = vmatpush1.msra.mxu0 0.0
    %3361 = vmatprep.subr.mxu0 0.0
    %3362 = vmatpush1.msra.mxu0 0.0
    %3363 = vmatprep.subr.mxu0 0.0
    %3364 = vmatpush1.msra.mxu0 0.0
    %3365 = vmatprep.subr.mxu0 0.0
    %3366 = vmatpush1.msra.mxu0 0.0
    %3367 = vmatprep.subr.mxu0 0.0
    %3368 = vmatpush1.msra.mxu0 0.0
    %3369 = vmatprep.subr.mxu0 0.0
    %3370 = vmatpush1.msra.mxu0 0.0
    %3371 = vmatprep.subr.mxu0 0.0
    %3372 = vmatpush1.msra.mxu0 0.0
    %3373 = vmatprep.subr.mxu0 0.0
    %3374 = vmatpush1.msra.mxu0 0.0
    %3375 = vmatprep.subr.mxu0 0.0
    %3376 = vmatpush1.msra.mxu0 0.0
    %3377 = vmatprep.subr.mxu0 0.0
    %3378 = vmatpush1.msra.mxu0 0.0
    %3379 = vmatprep.subr.mxu0 0.0
    %3380 = vmatpush1.msra.mxu0 0.0
    %3381 = vmatprep.subr.mxu0 0.0
    %3382 = vmatpush1.msra.mxu0 0.0
    %3383 = vmatprep.subr.mxu0 0.0
    %3384 = vmatpush1.msra.mxu0 0.0
    %3385 = vmatprep.subr.mxu0 0.0
    %3386 = vmatpush1.msra.mxu0 0.0
    %3387 = vmatprep.subr.mxu0 0.0
    %3388 = vmatpush1.msra.mxu0 0.0
    %3389 = vmatprep.subr.mxu0 0.0
    %3390 = vmatpush1.msra.mxu0 0.0
    %3391 = vmatprep.mubr.f32.mxu0 0.0
    %3392 = vmatmul.mubr.f32.gmra.mrb[0].mxu0 %v3325
    %v3393 = vpop.f32.mrb[0].mxu0
    %v3394 = vadd.f32 0.0, %v3393
    %v3395 = vpop.f32.mrb[0].mxu0
    %3396 = vdwg.mxu0
    %v3397 = vsel %vm119, %v3394, -inf
    %v3398 = vrot.slane %v3397, 4
    %v3399 = vmax.f32 %v3397, %v3398
    %v3400 = vrot.slane %v3399, 2
    %v3401 = vmax.f32 %v3399, %v3400
    %v3402 = vrot.slane %v3401, 1
    %v3403 = vmax.f32 %v3401, %v3402
    %v3404 = vld [vmem:[%s5] sm:$0xff]
    %v3405 = vld [vmem:[%s5 + $0x8] sm:$0xff]
    %v3406 = vld [vmem:[%s5 + $0x10] sm:$0xff]
    %v3407 = vld [vmem:[%s5 + $0x18] sm:$0xff]
    %v3409 = vsel %vm119, %v3403, 0
    %3411 = vmatprep.subr.mxu0 0.0
    %3412 = vmatpush1.msra.mxu0 %v3404
    %3413 = vmatprep.subr.mxu0 0.0
    %3414 = vmatpush1.msra.mxu0 %v3405
    %3415 = vmatprep.subr.mxu0 0.0
    %3416 = vmatpush1.msra.mxu0 %v3406
    %3417 = vmatprep.subr.mxu0 0.0
    %3418 = vmatpush1.msra.mxu0 %v3407
    %3419 = vmatprep.subr.mxu0 0.0
    %3420 = vmatpush1.msra.mxu0 0.0
    %3421 = vmatprep.subr.mxu0 0.0
    %3422 = vmatpush1.msra.mxu0 0.0
    %3423 = vmatprep.subr.mxu0 0.0
    %3424 = vmatpush1.msra.mxu0 0.0
    %3425 = vmatprep.subr.mxu0 0.0
    %3426 = vmatpush1.msra.mxu0 0.0
    %3427 = vmatprep.subr.mxu0 0.0
    %3428 = vmatpush1.msra.mxu0 0.0
    %3429 = vmatprep.subr.mxu0 0.0
    %3430 = vmatpush1.msra.mxu0 0.0
    %3431 = vmatprep.subr.mxu0 0.0
    %3432 = vmatpush1.msra.mxu0 0.0
    %3433 = vmatprep.subr.mxu0 0.0
    %3434 = vmatpush1.msra.mxu0 0.0
    %3435 = vmatprep.subr.mxu0 0.0
    %3436 = vmatpush1.msra.mxu0 0.0
    %3437 = vmatprep.subr.mxu0 0.0
    %3438 = vmatpush1.msra.mxu0 0.0
    %3439 = vmatprep.subr.mxu0 0.0
    %3440 = vmatpush1.msra.mxu0 0.0
    %3441 = vmatprep.subr.mxu0 0.0
    %3442 = vmatpush1.msra.mxu0 0.0
    %3443 = vmatprep.subr.mxu0 0.0
    %3444 = vmatpush1.msra.mxu0 0.0
    %3445 = vmatprep.subr.mxu0 0.0
    %3446 = vmatpush1.msra.mxu0 0.0
    %3447 = vmatprep.subr.mxu0 0.0
    %3448 = vmatpush1.msra.mxu0 0.0
    %3449 = vmatprep.subr.mxu0 0.0
    %3450 = vmatpush1.msra.mxu0 0.0
    %3451 = vmatprep.subr.mxu0 0.0
    %3452 = vmatpush1.msra.mxu0 0.0
    %3453 = vmatprep.subr.mxu0 0.0
    %3454 = vmatpush1.msra.mxu0 0.0
    %3455 = vmatprep.subr.mxu0 0.0
    %3456 = vmatpush1.msra.mxu0 0.0
    %3457 = vmatprep.subr.mxu0 0.0
    %3458 = vmatpush1.msra.mxu0 0.0
    %3459 = vmatprep.subr.mxu0 0.0
    %3460 = vmatpush1.msra.mxu0 0.0
    %3461 = vmatprep.subr.mxu0 0.0
    %3462 = vmatpush1.msra.mxu0 0.0
    %3463 = vmatprep.subr.mxu0 0.0
    %3464 = vmatpush1.msra.mxu0 0.0
    %3465 = vmatprep.subr.mxu0 0.0
    %3466 = vmatpush1.msra.mxu0 0.0
    %3467 = vmatprep.subr.mxu0 0.0
    %3468 = vmatpush1.msra.mxu0 0.0
    %3469 = vmatprep.subr.mxu0 0.0
    %3470 = vmatpush1.msra.mxu0 0.0
    %3471 = vmatprep.subr.mxu0 0.0
    %3472 = vmatpush1.msra.mxu0 0.0
    %3473 = vmatprep.subr.mxu0 0.0
    %3474 = vmatpush1.msra.mxu0 0.0
    %3475 = vmatprep.mubr.f32.mxu0 0.0
    %3476 = vmatmul.mubr.f32.gmra.mrb[0].mxu0 %v3409
    %v3477 = vpop.f32.mrb[0].mxu0
    %v3478 = vadd.f32 0.0, %v3477
    %v3479 = vpop.f32.mrb[0].mxu0
    %3480 = vdwg.mxu0
    %v3625 = vunpack.c.l.b16 %v3002
    %v3626 = vunpack.c.l.b16 %v3003
    %v3627 = vunpack.c.l.b16 %v3004
    %v3628 = vunpack.c.l.b16 %v3005
    %v3629 = vunpack.c.l.b16 %v3006
    %v3630 = vunpack.c.l.b16 %v3007
    %v3631 = vunpack.c.l.b16 %v3008
    %v3632 = vunpack.c.l.b16 %v3009
    %v3633 = vunpack.c.l.b16 %v3010
    %v3634 = vunpack.c.l.b16 %v3011
    %v3635 = vunpack.c.l.b16 %v3012
    %v3636 = vunpack.c.l.b16 %v3013
    %v3637 = vunpack.c.l.b16 %v3014
    %v3638 = vunpack.c.l.b16 %v3015
    %v3639 = vunpack.c.l.b16 %v3016
    %v3640 = vunpack.c.l.b16 %v3017
    %v3641 = vunpack.c.l.b16 %v3018
    %v3642 = vunpack.c.l.b16 %v3019
    %v3643 = vunpack.c.l.b16 %v3020
    %v3644 = vunpack.c.l.b16 %v3021
    %v3645 = vunpack.c.l.b16 %v3022
    %v3646 = vunpack.c.l.b16 %v3023
    %v3647 = vunpack.c.l.b16 %v3024
    %v3648 = vunpack.c.l.b16 %v3025
    %v3649 = vunpack.c.l.b16 %v3026
    %v3650 = vunpack.c.l.b16 %v3027
    %v3651 = vunpack.c.l.b16 %v3028
    %v3652 = vunpack.c.l.b16 %v3029
    %v3653 = vunpack.c.l.b16 %v3030
    %v3654 = vunpack.c.l.b16 %v3031
    %v3655 = vunpack.c.l.b16 %v3032
    %v3656 = vunpack.c.l.b16 %v3033
    %v3657 = vunpack.c.l.b16 %v3034
    %v3658 = vunpack.c.l.b16 %v3035
    %v3659 = vunpack.c.l.b16 %v3036
    %v3660 = vunpack.c.l.b16 %v3037
    %v3661 = vunpack.c.l.b16 %v3038
    %v3662 = vunpack.c.l.b16 %v3039
    %v3663 = vunpack.c.l.b16 %v3040
    %v3664 = vunpack.c.l.b16 %v3041
    %v3665 = vunpack.c.l.b16 %v3042
    %v3666 = vunpack.c.l.b16 %v3043
    %v3667 = vunpack.c.l.b16 %v3044
    %v3668 = vunpack.c.l.b16 %v3045
    %v3669 = vunpack.c.l.b16 %v3046
    %v3670 = vunpack.c.l.b16 %v3047
    %v3671 = vunpack.c.l.b16 %v3048
    %v3672 = vunpack.c.l.b16 %v3049
    %v3673 = vunpack.c.l.b16 %v3050
    %v3674 = vunpack.c.l.b16 %v3051
    %v3675 = vunpack.c.l.b16 %v3052
    %v3676 = vunpack.c.l.b16 %v3053
    %v3677 = vunpack.c.l.b16 %v3054
    %v3678 = vunpack.c.l.b16 %v3055
    %v3679 = vunpack.c.l.b16 %v3056
    %v3680 = vunpack.c.l.b16 %v3057
    %v3681 = vunpack.c.l.b16 %v3058
    %v3682 = vunpack.c.l.b16 %v3059
    %v3683 = vunpack.c.l.b16 %v3060
    %v3684 = vunpack.c.l.b16 %v3061
    %v3685 = vunpack.c.l.b16 %v3062
    %v3686 = vunpack.c.l.b16 %v3063
    %v3687 = vunpack.c.l.b16 %v3064
    %v3688 = vunpack.c.l.b16 %v3065
    %v3689 = vunpack.c.l.b16 %v3066
    %v3690 = vunpack.c.l.b16 %v3067
    %v3691 = vunpack.c.l.b16 %v3068
    %v3692 = vunpack.c.l.b16 %v3069
    %v3693 = vunpack.c.l.b16 %v3070
    %v3694 = vunpack.c.l.b16 %v3071
    %v3695 = vunpack.c.l.b16 %v3072
    %v3696 = vunpack.c.l.b16 %v3073
    %v3697 = vunpack.c.l.b16 %v3074
    %v3698 = vunpack.c.l.b16 %v3075
    %v3699 = vunpack.c.l.b16 %v3076
    %v3700 = vunpack.c.l.b16 %v3077
    %v3701 = vunpack.c.l.b16 %v3078
    %v3702 = vunpack.c.l.b16 %v3079
    %v3703 = vunpack.c.l.b16 %v3080
    %v3704 = vunpack.c.l.b16 %v3081
    %v3705 = vunpack.c.l.b16 %v3082
    %v3706 = vunpack.c.l.b16 %v3083
    %v3707 = vunpack.c.l.b16 %v3084
    %v3708 = vunpack.c.l.b16 %v3085
    %v3709 = vunpack.c.l.b16 %v3086
    %v3710 = vunpack.c.l.b16 %v3087
    %v3711 = vunpack.c.l.b16 %v3088
    %v3712 = vunpack.c.l.b16 %v3089
    %v3713 = vunpack.c.l.b16 %v3090
    %v3714 = vunpack.c.l.b16 %v3091
    %v3715 = vunpack.c.l.b16 %v3092
    %v3716 = vunpack.c.l.b16 %v3093
    %v3717 = vunpack.c.l.b16 %v3094
    %v3718 = vunpack.c.l.b16 %v3095
    %v3719 = vunpack.c.l.b16 %v3096
    %v3720 = vunpack.c.l.b16 %v3097
    %v3721 = vunpack.c.l.b16 %v3098
    %v3722 = vunpack.c.l.b16 %v3099
    %v3723 = vunpack.c.l.b16 %v3100
    %v3724 = vunpack.c.l.b16 %v3101
    %v3725 = vunpack.c.l.b16 %v3102
    %v3726 = vunpack.c.l.b16 %v3103
    %v3727 = vunpack.c.l.b16 %v3104
    %v3728 = vunpack.c.l.b16 %v3105
    %v3729 = vunpack.c.l.b16 %v3106
    %v3730 = vunpack.c.l.b16 %v3107
    %v3731 = vunpack.c.l.b16 %v3108
    %v3732 = vunpack.c.l.b16 %v3109
    %v3733 = vunpack.c.l.b16 %v3110
    %v3734 = vunpack.c.l.b16 %v3111
    %v3735 = vunpack.c.l.b16 %v3112
    %v3736 = vunpack.c.l.b16 %v3113
    %v3737 = vunpack.c.l.b16 %v3114
    %v3738 = vunpack.c.l.b16 %v3115
    %v3739 = vunpack.c.l.b16 %v3116
    %v3740 = vunpack.c.l.b16 %v3117
    %v3741 = vunpack.c.l.b16 %v3118
    %v3742 = vunpack.c.l.b16 %v3119
    %v3743 = vunpack.c.l.b16 %v3120
    %v3744 = vunpack.c.l.b16 %v3121
    %v3745 = vunpack.c.l.b16 %v3122
    %v3746 = vunpack.c.l.b16 %v3123
    %v3747 = vunpack.c.l.b16 %v3124
    %v3748 = vunpack.c.l.b16 %v3125
    %v3749 = vunpack.c.l.b16 %v3126
    %v3750 = vunpack.c.l.b16 %v3127
    %v3751 = vunpack.c.l.b16 %v3128
    %v3752 = vunpack.c.l.b16 %v3129
    %v3753 = vunpack.c.l.b16 %v3130
    %v3754 = vunpack.c.l.b16 %v3131
    %v3755 = vunpack.c.l.b16 %v3132
    %v3756 = vunpack.c.l.b16 %v3133
    %v3757 = vunpack.c.l.b16 %v3134
    %v3758 = vunpack.c.l.b16 %v3135
    %v3759 = vunpack.c.l.b16 %v3136
    %v3760 = vunpack.c.l.b16 %v3137
    %v3761 = vunpack.c.l.b16 %v3138
    %v3762 = vunpack.c.l.b16 %v3139
    %v3763 = vunpack.c.l.b16 %v3140
    %v3764 = vunpack.c.l.b16 %v3141
    %v3765 = vunpack.c.l.b16 %v3142
    %v3766 = vunpack.c.l.b16 %v3143
    %v3767 = vunpack.c.l.b16 %v3144
    %v3768 = vunpack.c.l.b16 %v3145
    %v3769 = vpack.c.b16 %v3626, %v3625
    %v3770 = vpack.c.b16 %v3628, %v3627
    %v3771 = vpack.c.b16 %v3630, %v3629
    %v3772 = vpack.c.b16 %v3632, %v3631
    %v3773 = vpack.c.b16 %v3634, %v3633
    %v3774 = vpack.c.b16 %v3636, %v3635
    %v3775 = vpack.c.b16 %v3638, %v3637
    %v3776 = vpack.c.b16 %v3640, %v3639
    %v3777 = vpack.c.b16 %v3642, %v3641
    %v3778 = vpack.c.b16 %v3644, %v3643
    %v3779 = vpack.c.b16 %v3646, %v3645
    %v3780 = vpack.c.b16 %v3648, %v3647
    %v3781 = vpack.c.b16 %v3650, %v3649
    %v3782 = vpack.c.b16 %v3652, %v3651
    %v3783 = vpack.c.b16 %v3654, %v3653
    %v3784 = vpack.c.b16 %v3656, %v3655
    %v3785 = vpack.c.b16 %v3658, %v3657
    %v3786 = vpack.c.b16 %v3660, %v3659
    %v3787 = vpack.c.b16 %v3662, %v3661
    %v3788 = vpack.c.b16 %v3664, %v3663
    %v3789 = vpack.c.b16 %v3666, %v3665
    %v3790 = vpack.c.b16 %v3668, %v3667
    %v3791 = vpack.c.b16 %v3670, %v3669
    %v3792 = vpack.c.b16 %v3672, %v3671
    %v3793 = vpack.c.b16 %v3674, %v3673
    %v3794 = vpack.c.b16 %v3676, %v3675
    %v3795 = vpack.c.b16 %v3678, %v3677
    %v3796 = vpack.c.b16 %v3680, %v3679
    %v3797 = vpack.c.b16 %v3682, %v3681
    %v3798 = vpack.c.b16 %v3684, %v3683
    %v3799 = vpack.c.b16 %v3686, %v3685
    %v3800 = vpack.c.b16 %v3688, %v3687
    %v3801 = vpack.c.b16 %v3690, %v3689
    %v3802 = vpack.c.b16 %v3692, %v3691
    %v3803 = vpack.c.b16 %v3694, %v3693
    %v3804 = vpack.c.b16 %v3696, %v3695
    %v3805 = vpack.c.b16 %v3698, %v3697
    %v3806 = vpack.c.b16 %v3700, %v3699
    %v3807 = vpack.c.b16 %v3702, %v3701
    %v3808 = vpack.c.b16 %v3704, %v3703
    %v3809 = vpack.c.b16 %v3706, %v3705
    %v3810 = vpack.c.b16 %v3708, %v3707
    %v3811 = vpack.c.b16 %v3710, %v3709
    %v3812 = vpack.c.b16 %v3712, %v3711
    %v3813 = vpack.c.b16 %v3714, %v3713
    %v3814 = vpack.c.b16 %v3716, %v3715
    %v3815 = vpack.c.b16 %v3718, %v3717
    %v3816 = vpack.c.b16 %v3720, %v3719
    %v3817 = vpack.c.b16 %v3722, %v3721
    %v3818 = vpack.c.b16 %v3724, %v3723
    %v3819 = vpack.c.b16 %v3726, %v3725
    %v3820 = vpack.c.b16 %v3728, %v3727
    %v3821 = vpack.c.b16 %v3730, %v3729
    %v3822 = vpack.c.b16 %v3732, %v3731
    %v3823 = vpack.c.b16 %v3734, %v3733
    %v3824 = vpack.c.b16 %v3736, %v3735
    %v3825 = vpack.c.b16 %v3738, %v3737
    %v3826 = vpack.c.b16 %v3740, %v3739
    %v3827 = vpack.c.b16 %v3742, %v3741
    %v3828 = vpack.c.b16 %v3744, %v3743
    %v3829 = vpack.c.b16 %v3746, %v3745
    %v3830 = vpack.c.b16 %v3748, %v3747
    %v3831 = vpack.c.b16 %v3750, %v3749
    %v3832 = vpack.c.b16 %v3752, %v3751
    %v3833 = vpack.c.b16 %v3754, %v3753
    %v3834 = vpack.c.b16 %v3756, %v3755
    %v3835 = vpack.c.b16 %v3758, %v3757
    %v3836 = vpack.c.b16 %v3760, %v3759
    %v3837 = vpack.c.b16 %v3762, %v3761
    %v3838 = vpack.c.b16 %v3764, %v3763
    %v3839 = vpack.c.b16 %v3766, %v3765
    %v3840 = vpack.c.b16 %v3768, %v3767
    %3913 = vmatprep.subr.bf16.mxu0 0
    %3914 = vmatpush1.bf16.msra.mxu0 %v3769
    %3915 = vmatprep.subr.bf16.mxu0 0
    %3916 = vmatpush1.bf16.msra.mxu0 %v3770
    %3917 = vmatprep.subr.bf16.mxu0 0
    %3918 = vmatpush1.bf16.msra.mxu0 %v3771
    %3919 = vmatprep.subr.bf16.mxu0 0
    %3920 = vmatpush1.bf16.msra.mxu0 %v3772
    %3921 = vmatprep.subr.bf16.mxu0 0
    %3922 = vmatpush1.bf16.msra.mxu0 %v3773
    %3923 = vmatprep.subr.bf16.mxu0 0
    %3924 = vmatpush1.bf16.msra.mxu0 %v3774
    %3925 = vmatprep.subr.bf16.mxu0 0
    %3926 = vmatpush1.bf16.msra.mxu0 %v3775
    %3927 = vmatprep.subr.bf16.mxu0 0
    %3928 = vmatpush1.bf16.msra.mxu0 %v3776
    %3929 = vmatprep.subr.bf16.mxu0 0
    %3930 = vmatpush1.bf16.msra.mxu0 %v3777
    %3931 = vmatprep.subr.bf16.mxu0 0
    %3932 = vmatpush1.bf16.msra.mxu0 %v3778
    %3933 = vmatprep.subr.bf16.mxu0 0
    %3934 = vmatpush1.bf16.msra.mxu0 %v3779
    %3935 = vmatprep.subr.bf16.mxu0 0
    %3936 = vmatpush1.bf16.msra.mxu0 %v3780
    %3937 = vmatprep.subr.bf16.mxu0 0
    %3938 = vmatpush1.bf16.msra.mxu0 %v3781
    %3939 = vmatprep.subr.bf16.mxu0 0
    %3940 = vmatpush1.bf16.msra.mxu0 %v3782
    %3941 = vmatprep.subr.bf16.mxu0 0
    %3942 = vmatpush1.bf16.msra.mxu0 %v3783
    %3943 = vmatprep.subr.bf16.mxu0 0
    %3944 = vmatpush1.bf16.msra.mxu0 %v3784
    %3945 = vmatprep.mubr.bf16.mxu0 %v2994
    %3946 = vmatmul.mubr.bf16.gmra.mrb[0].mxu0 %v2993
    %v3947 = vpop.f32.mrb[0].mxu0
    %v3948 = vadd.f32 %v3478, %v3947
    %v3949 = vpop.f32.mrb[0].mxu0
    %v3950 = vpop.f32.mrb[0].mxu0
    %v3951 = vpop.f32.mrb[0].mxu0
    %3952 = vdwg.mxu0
    %3953 = vmatprep.subr.bf16.mxu0 0
    %3954 = vmatpush1.bf16.msra.mxu0 %v3785
    %3955 = vmatprep.subr.bf16.mxu0 0
    %3956 = vmatpush1.bf16.msra.mxu0 %v3786
    %3957 = vmatprep.subr.bf16.mxu0 0
    %3958 = vmatpush1.bf16.msra.mxu0 %v3787
    %3959 = vmatprep.subr.bf16.mxu0 0
    %3960 = vmatpush1.bf16.msra.mxu0 %v3788
    %3961 = vmatprep.subr.bf16.mxu0 0
    %3962 = vmatpush1.bf16.msra.mxu0 %v3789
    %3963 = vmatprep.subr.bf16.mxu0 0
    %3964 = vmatpush1.bf16.msra.mxu0 %v3790
    %3965 = vmatprep.subr.bf16.mxu0 0
    %3966 = vmatpush1.bf16.msra.mxu0 %v3791
    %3967 = vmatprep.subr.bf16.mxu0 0
    %3968 = vmatpush1.bf16.msra.mxu0 %v3792
    %3969 = vmatprep.subr.bf16.mxu0 0
    %3970 = vmatpush1.bf16.msra.mxu0 %v3793
    %3971 = vmatprep.subr.bf16.mxu0 0
    %3972 = vmatpush1.bf16.msra.mxu0 %v3794
    %3973 = vmatprep.subr.bf16.mxu0 0
    %3974 = vmatpush1.bf16.msra.mxu0 %v3795
    %3975 = vmatprep.subr.bf16.mxu0 0
    %3976 = vmatpush1.bf16.msra.mxu0 %v3796
    %3977 = vmatprep.subr.bf16.mxu0 0
    %3978 = vmatpush1.bf16.msra.mxu0 %v3797
    %3979 = vmatprep.subr.bf16.mxu0 0
    %3980 = vmatpush1.bf16.msra.mxu0 %v3798
    %3981 = vmatprep.subr.bf16.mxu0 0
    %3982 = vmatpush1.bf16.msra.mxu0 %v3799
    %3983 = vmatprep.subr.bf16.mxu0 0
    %3984 = vmatpush1.bf16.msra.mxu0 %v3800
    %3985 = vmatprep.mubr.bf16.mxu0 %v2996
    %3986 = vmatmul.mubr.bf16.gmra.mrb[0].mxu0 %v2995
    %v3987 = vpop.f32.mrb[0].mxu0
    %v3988 = vadd.f32 %v3948, %v3987
    %v3989 = vpop.f32.mrb[0].mxu0
    %v3990 = vpop.f32.mrb[0].mxu0
    %v3991 = vpop.f32.mrb[0].mxu0
    %3992 = vdwg.mxu0
    %3993 = vmatprep.subr.bf16.mxu0 0
    %3994 = vmatpush1.bf16.msra.mxu0 %v3801
    %3995 = vmatprep.subr.bf16.mxu0 0
    %3996 = vmatpush1.bf16.msra.mxu0 %v3802
    %3997 = vmatprep.subr.bf16.mxu0 0
    %3998 = vmatpush1.bf16.msra.mxu0 %v3803
    %3999 = vmatprep.subr.bf16.mxu0 0
    %4000 = vmatpush1.bf16.msra.mxu0 %v3804
    %4001 = vmatprep.subr.bf16.mxu0 0
    %4002 = vmatpush1.bf16.msra.mxu0 %v3805
    %4003 = vmatprep.subr.bf16.mxu0 0
    %4004 = vmatpush1.bf16.msra.mxu0 %v3806
    %4005 = vmatprep.subr.bf16.mxu0 0
    %4006 = vmatpush1.bf16.msra.mxu0 %v3807
    %4007 = vmatprep.subr.bf16.mxu0 0
    %4008 = vmatpush1.bf16.msra.mxu0 %v3808
    %4009 = vmatprep.subr.bf16.mxu0 0
    %4010 = vmatpush1.bf16.msra.mxu0 %v3809
    %4011 = vmatprep.subr.bf16.mxu0 0
    %4012 = vmatpush1.bf16.msra.mxu0 %v3810
    %4013 = vmatprep.subr.bf16.mxu0 0
    %4014 = vmatpush1.bf16.msra.mxu0 %v3811
    %4015 = vmatprep.subr.bf16.mxu0 0
    %4016 = vmatpush1.bf16.msra.mxu0 %v3812
    %4017 = vmatprep.subr.bf16.mxu0 0
    %4018 = vmatpush1.bf16.msra.mxu0 %v3813
    %4019 = vmatprep.subr.bf16.mxu0 0
    %4020 = vmatpush1.bf16.msra.mxu0 %v3814
    %4021 = vmatprep.subr.bf16.mxu0 0
    %4022 = vmatpush1.bf16.msra.mxu0 %v3815
    %4023 = vmatprep.subr.bf16.mxu0 0
    %4024 = vmatpush1.bf16.msra.mxu0 %v3816
    %4025 = vmatprep.mubr.bf16.mxu0 %v2998
    %4026 = vmatmul.mubr.bf16.gmra.mrb[0].mxu0 %v2997
    %v4027 = vpop.f32.mrb[0].mxu0
    %v4028 = vadd.f32 %v3988, %v4027
    %v4029 = vpop.f32.mrb[0].mxu0
    %v4030 = vpop.f32.mrb[0].mxu0
    %v4031 = vpop.f32.mrb[0].mxu0
    %4032 = vdwg.mxu0
    %4033 = vmatprep.subr.bf16.mxu0 0
    %4034 = vmatpush1.bf16.msra.mxu0 %v3817
    %4035 = vmatprep.subr.bf16.mxu0 0
    %4036 = vmatpush1.bf16.msra.mxu0 %v3818
    %4037 = vmatprep.subr.bf16.mxu0 0
    %4038 = vmatpush1.bf16.msra.mxu0 %v3819
    %4039 = vmatprep.subr.bf16.mxu0 0
    %4040 = vmatpush1.bf16.msra.mxu0 %v3820
    %4041 = vmatprep.subr.bf16.mxu0 0
    %4042 = vmatpush1.bf16.msra.mxu0 %v3821
    %4043 = vmatprep.subr.bf16.mxu0 0
    %4044 = vmatpush1.bf16.msra.mxu0 %v3822
    %4045 = vmatprep.subr.bf16.mxu0 0
    %4046 = vmatpush1.bf16.msra.mxu0 %v3823
    %4047 = vmatprep.subr.bf16.mxu0 0
    %4048 = vmatpush1.bf16.msra.mxu0 %v3824
    %4049 = vmatprep.subr.bf16.mxu0 0
    %4050 = vmatpush1.bf16.msra.mxu0 %v3825
    %4051 = vmatprep.subr.bf16.mxu0 0
    %4052 = vmatpush1.bf16.msra.mxu0 %v3826
    %4053 = vmatprep.subr.bf16.mxu0 0
    %4054 = vmatpush1.bf16.msra.mxu0 %v3827
    %4055 = vmatprep.subr.bf16.mxu0 0
    %4056 = vmatpush1.bf16.msra.mxu0 %v3828
    %4057 = vmatprep.subr.bf16.mxu0 0
    %4058 = vmatpush1.bf16.msra.mxu0 %v3829
    %4059 = vmatprep.subr.bf16.mxu0 0
    %4060 = vmatpush1.bf16.msra.mxu0 %v3830
    %4061 = vmatprep.subr.bf16.mxu0 0
    %4062 = vmatpush1.bf16.msra.mxu0 %v3831
    %4063 = vmatprep.subr.bf16.mxu0 0
    %4064 = vmatpush1.bf16.msra.mxu0 %v3832
    %4065 = vmatprep.mubr.bf16.mxu0 %v3000
    %4066 = vmatmul.mubr.bf16.gmra.mrb[0].mxu0 %v2999
    %v4067 = vpop.f32.mrb[0].mxu0
    %v4068 = vadd.f32 %v4028, %v4067
    %v4069 = vpop.f32.mrb[0].mxu0
    %v4070 = vpop.f32.mrb[0].mxu0
    %v4071 = vpop.f32.mrb[0].mxu0
    %4072 = vdwg.mxu0
    %4073 = vmatprep.subr.bf16.mxu0 0
    %4074 = vmatpush1.bf16.msra.mxu0 %v3833
    %4075 = vmatprep.subr.bf16.mxu0 0
    %4076 = vmatpush1.bf16.msra.mxu0 %v3834
    %4077 = vmatprep.subr.bf16.mxu0 0
    %4078 = vmatpush1.bf16.msra.mxu0 %v3835
    %4079 = vmatprep.subr.bf16.mxu0 0
    %4080 = vmatpush1.bf16.msra.mxu0 %v3836
    %4081 = vmatprep.subr.bf16.mxu0 0
    %4082 = vmatpush1.bf16.msra.mxu0 %v3837
    %4083 = vmatprep.subr.bf16.mxu0 0
    %4084 = vmatpush1.bf16.msra.mxu0 %v3838
    %4085 = vmatprep.subr.bf16.mxu0 0
    %4086 = vmatpush1.bf16.msra.mxu0 %v3839
    %4087 = vmatprep.subr.bf16.mxu0 0
    %4088 = vmatpush1.bf16.msra.mxu0 %v3840
    %4089 = vmatprep.subr.bf16.mxu0 0
    %4090 = vmatpush1.bf16.msra.mxu0 0
    %4091 = vmatprep.subr.bf16.mxu0 0
    %4092 = vmatpush1.bf16.msra.mxu0 0
    %4093 = vmatprep.subr.bf16.mxu0 0
    %4094 = vmatpush1.bf16.msra.mxu0 0
    %4095 = vmatprep.subr.bf16.mxu0 0
    %4096 = vmatpush1.bf16.msra.mxu0 0
    %4097 = vmatprep.subr.bf16.mxu0 0
    %4098 = vmatpush1.bf16.msra.mxu0 0
    %4099 = vmatprep.subr.bf16.mxu0 0
    %4100 = vmatpush1.bf16.msra.mxu0 0
    %4101 = vmatprep.subr.bf16.mxu0 0
    %4102 = vmatpush1.bf16.msra.mxu0 0
    %4103 = vmatprep.subr.bf16.mxu0 0
    %4104 = vmatpush1.bf16.msra.mxu0 0
    %4105 = vmatprep.mubr.bf16.mxu0 0
    %4106 = vmatmul.mubr.bf16.gmra.mrb[0].mxu0 %v3001
    %v4107 = vpop.f32.mrb[0].mxu0
    %v4108 = vadd.f32 %v4068, %v4107
    %v4109 = vpop.f32.mrb[0].mxu0
    %v4110 = vpop.f32.mrb[0].mxu0
    %v4111 = vpop.f32.mrb[0].mxu0
    %4112 = vdwg.mxu0
    %v4113 = vld [vmem:[%s6] sm:$0x1]
    %v4114 = vadd.f32 %v4108, %v4113
    %4115 = vst.msk [vmem:[#allocation4] sm:$0x1] %vm2155, %v4114
    // Predicated region
    $region30: #{entities_forward.1} parent=1 // pred_check
      _
    $region31: #{entities_forward.1} parent=1 // pred_check_branch
      %4117 = sbr.rel (0) target = $region33
    $region32: #{entities_forward.1} parent=1 // pred_region
      %s4119 = ssub.s32 16, 16
      %4120 = vsyncadd [#allocation5], %s4119
      %s4122 = sshll.u32 [#allocation4], 4
      %s4123 = int_to_ptr.vmem [resolvable:$true] %s4122
      %4125 = dma.vmem_to_hbm [thread:$0]  %s4123, 16, %s7, [#allocation5]
    $region33: #{entities_forward.1} parent=1 // pred_fallthru
      _
    // Predicated region
    $region34: #{entities_forward.1} parent=1 // pred_check
      _
    $region35: #{entities_forward.1} parent=1 // pred_check_branch
      %4127 = sbr.rel (0) target = $region37
    $region36: #{entities_forward.1} parent=1 // pred_region
      %4128 = dma.done [#allocation5], 16
    $region37: #{entities_forward.1} parent=1 // pred_fallthru
      _
    %4129 = vsyncpa [#allocation5], 1

</llo_original>
